<compile_context>
chip_gen: v7x
topology: tpu7x:2x2x1
jax: 0.10.0
libtpu: 0.0.40
codegen_flags: <defaults>
</compile_context>

<pallas_src>
import math

import jax
import jax.numpy as jnp
from jax.experimental import pallas as pl
from jax.experimental.pallas import tpu as pltpu

# ----------------------- synthetic BERT config (small) -----------------------
VOCAB = 64
PAD_ID = 0
HIDDEN = 32
N_HEADS = 4
HEAD_DIM = HIDDEN // N_HEADS
N_LAYERS = 2
INTERMEDIATE = 64
MAX_POS = 16
PROJ_DIM = 16
LN_EPS = 1e-12


# --------------------------------- kernel ------------------------------------
def _bert_fused_kernel(
    emb_ref, mask_ref,
    emb_g_ref, emb_b_ref,
    wqkv_ref, bqkv_ref, wo_ref, bo_ref,
    ln1_g_ref, ln1_b_ref,
    w1_ref, b1_ref, w2_ref, b2_ref,
    ln2_g_ref, ln2_b_ref,
    proj_ref,
    o_ref,
):
    # Blocks (one batch element per grid step):
    #   emb  (1, S, H)     mask (1, 1, S)       out (1, 1, PROJ_DIM)
    #   stacked per-layer weights are whole-array resident in VMEM.
    S = emb_ref.shape[1]
    H = emb_ref.shape[2]

    def layernorm(x, g, b):
        mu = jnp.mean(x, axis=-1, keepdims=True)
        var = jnp.mean(jnp.square(x - mu), axis=-1, keepdims=True)
        return (x - mu) * jax.lax.rsqrt(var + LN_EPS) * g + b

    def gelu(y):
        # TODO(synk): BERT uses exact erf-GELU; tanh approximation kept for Mosaic-safe lowering.
        c = 0.7978845608028654  # sqrt(2/pi)
        return 0.5 * y * (1.0 + jnp.tanh(c * (y + 0.044715 * y * y * y)))

    # embedding LayerNorm (no zero-residual buffer needed)
    x = layernorm(emb_ref[0].astype(jnp.float32), emb_g_ref[...], emb_b_ref[...])  # (S, H)

    # key-padding additive mask built in-kernel from the (1, S) boolean mask
    add_mask = (1.0 - mask_ref[0].astype(jnp.float32)) * -10000.0  # (1, S) -> bcast over queries

    scale = 1.0 / math.sqrt(HEAD_DIM)

    for l in range(N_LAYERS):  # unrolled; N_LAYERS is small
        # ---- fused QKV projection: one (S, H) @ (H, 3H) MXU pass ----
        qkv = jnp.dot(x, wqkv_ref[l], preferred_element_type=jnp.float32) + bqkv_ref[l]
        q = qkv[:, 0 * H:1 * H]
        k = qkv[:, 1 * H:2 * H]
        v = qkv[:, 2 * H:3 * H]

        # ---- attention; heads are static lane slices, per-head context is folded
        #      directly into the output projection (keeps activations (S, H) dense) ----
        wo_l = wo_ref[l]  # (H, H)
        attn_out = jnp.zeros((S, H), jnp.float32)
        for h in range(N_HEADS):
            lo, hi = h * HEAD_DIM, (h + 1) * HEAD_DIM
            qh, kh, vh = q[:, lo:hi], k[:, lo:hi], v[:, lo:hi]
            s = jnp.einsum("qd,kd->qk", qh, kh, preferred_element_type=jnp.float32) * scale
            s = s + add_mask
            s = s - jnp.max(s, axis=-1, keepdims=True)
            p = jnp.exp(s)
            p = p * pl.reciprocal(jnp.sum(p, axis=-1, keepdims=True), approx=True)
            ctx_h = jnp.dot(p, vh, preferred_element_type=jnp.float32)            # (S, Dh)
            attn_out = attn_out + jnp.dot(ctx_h, wo_l[lo:hi, :],
                                          preferred_element_type=jnp.float32)     # (S, H)
        attn_out = attn_out + bo_ref[l]

        # ---- residual + LayerNorm ----
        x = layernorm(attn_out + x, ln1_g_ref[l], ln1_b_ref[l])

        # ---- FFN (fused w1+GELU, w2, residual + LayerNorm) ----
        ff = gelu(jnp.dot(x, w1_ref[l], preferred_element_type=jnp.float32) + b1_ref[l])
        ff = jnp.dot(ff, w2_ref[l], preferred_element_type=jnp.float32) + b2_ref[l]
        x = layernorm(ff + x, ln2_g_ref[l], ln2_b_ref[l])

    # ---- CLS token projection: x[:, 0, :] @ text_projection ----
    cls = x[0:1, :]  # (1, H)
    o_ref[0] = jnp.dot(cls, proj_ref[...], preferred_element_type=jnp.float32).astype(o_ref.dtype)


# ------------------------------- parameters ----------------------------------
def init_params(key):
    keys = iter(jax.random.split(key, 64))

    def nrm(shape, scale=0.02):
        return (scale * jax.random.normal(next(keys), shape)).astype(jnp.float32)

    params = {
        "word_emb": nrm((VOCAB, HIDDEN)),
        "pos_emb": nrm((MAX_POS, HIDDEN)),
        "type_emb": nrm((2, HIDDEN)),
        "emb_ln_g": jnp.ones((HIDDEN,), jnp.float32),
        "emb_ln_b": jnp.zeros((HIDDEN,), jnp.float32),
        "text_projection": nrm((HIDDEN, PROJ_DIM)),
        "layers": [],
    }
    for _ in range(N_LAYERS):
        params["layers"].append(
            {
                "wq": nrm((HIDDEN, HIDDEN)), "bq": jnp.zeros((HIDDEN,), jnp.float32),
                "wk": nrm((HIDDEN, HIDDEN)), "bk": jnp.zeros((HIDDEN,), jnp.float32),
                "wv": nrm((HIDDEN, HIDDEN)), "bv": jnp.zeros((HIDDEN,), jnp.float32),
                "wo": nrm((HIDDEN, HIDDEN)), "bo": jnp.zeros((HIDDEN,), jnp.float32),
                "ln1_g": jnp.ones((HIDDEN,), jnp.float32), "ln1_b": jnp.zeros((HIDDEN,), jnp.float32),
                "w1": nrm((HIDDEN, INTERMEDIATE)), "b1": jnp.zeros((INTERMEDIATE,), jnp.float32),
                "w2": nrm((INTERMEDIATE, HIDDEN)), "b2": jnp.zeros((HIDDEN,), jnp.float32),
                "ln2_g": jnp.ones((HIDDEN,), jnp.float32), "ln2_b": jnp.zeros((HIDDEN,), jnp.float32),
            }
        )
    return params


def pack_params(params):
    """Stack per-layer weights with a leading layer axis, fuse Q/K/V, 2-D-ify biases."""
    L = params["layers"]
    return {
        "word_emb": params["word_emb"],
        "pos_emb": params["pos_emb"],
        "type_emb": params["type_emb"],
        "emb_ln_g": params["emb_ln_g"].reshape(1, HIDDEN),
        "emb_ln_b": params["emb_ln_b"].reshape(1, HIDDEN),
        "wqkv": jnp.stack([jnp.concatenate([l["wq"], l["wk"], l["wv"]], axis=1) for l in L]),
        "bqkv": jnp.stack([jnp.concatenate([l["bq"], l["bk"], l["bv"]]).reshape(1, -1) for l in L]),
        "wo": jnp.stack([l["wo"] for l in L]),
        "bo": jnp.stack([l["bo"].reshape(1, -1) for l in L]),
        "ln1_g": jnp.stack([l["ln1_g"].reshape(1, -1) for l in L]),
        "ln1_b": jnp.stack([l["ln1_b"].reshape(1, -1) for l in L]),
        "w1": jnp.stack([l["w1"] for l in L]),
        "b1": jnp.stack([l["b1"].reshape(1, -1) for l in L]),
        "w2": jnp.stack([l["w2"] for l in L]),
        "b2": jnp.stack([l["b2"].reshape(1, -1) for l in L]),
        "ln2_g": jnp.stack([l["ln2_g"].reshape(1, -1) for l in L]),
        "ln2_b": jnp.stack([l["ln2_b"].reshape(1, -1) for l in L]),
        "text_projection": params["text_projection"],
    }


# --------------------------------- forward -----------------------------------
def _const_spec(arr):
    """Whole-array VMEM block, invariant across the batch grid."""
    nd = arr.ndim
    shape = arr.shape

    def index_map(b):
        return (0,) * nd

    return pl.BlockSpec(shape, index_map)


def bert_forward(packed, text):
    B, S = text.shape
    dtype = jnp.float32

    # attn_mask = text.ne(pad_index); additive mask is built *inside* the kernel
    mask = (text != PAD_ID).astype(dtype).reshape(B, 1, S)

    # embedding gather + position/type add stays in plain-JAX glue
    emb = (
        jnp.take(packed["word_emb"], text, axis=0)
        + packed["pos_emb"][None, :S, :]
        + packed["type_emb"][0][None, None, :]
    ).astype(dtype)

    weight_arrs = [
        packed["emb_ln_g"], packed["emb_ln_b"],
        packed["wqkv"], packed["bqkv"], packed["wo"], packed["bo"],
        packed["ln1_g"], packed["ln1_b"],
        packed["w1"], packed["b1"], packed["w2"], packed["b2"],
        packed["ln2_g"], packed["ln2_b"],
        packed["text_projection"],
    ]

    # TODO(synk): for real CN-CLIP sizes (H=768, S>=512) the weight/activation specs
    # should become tiled BlockSpecs sized against per-generation VMEM (64 MiB on v7x).
    out = pl.pallas_call(
        _bert_fused_kernel,
        out_shape=jax.ShapeDtypeStruct((B, 1, PROJ_DIM), dtype),
        grid=(B,),
        in_specs=[
            pl.BlockSpec((1, S, HIDDEN), lambda b: (b, 0, 0)),   # embeddings
            pl.BlockSpec((1, 1, S), lambda b: (b, 0, 0)),        # key-padding mask
        ] + [_const_spec(a) for a in weight_arrs],
        out_specs=pl.BlockSpec((1, 1, PROJ_DIM), lambda b: (b, 0, 0)),
        compiler_params=pltpu.CompilerParams(dimension_semantics=("parallel",)),
    )(emb, mask, *weight_arrs)

    return out.reshape(B, PROJ_DIM)  # x[:, 0, :] @ text_projection


# ----------------------------------- main -------------------------------------
if __name__ == "__main__":
    key = jax.random.PRNGKey(0)
    pkey, tkey = jax.random.split(key)
    params = init_params(pkey)
    packed = pack_params(params)

    B, S = 2, 8
    text = jax.random.randint(tkey, (B, S), 1, VOCAB, dtype=jnp.int32)
    text = text.at[1, 5:].set(PAD_ID)  # second sequence has trailing [PAD]

    out = jax.jit(lambda t: bert_forward(packed, t))(text)
    jax.block_until_ready(out)
    assert out.shape == (B, PROJ_DIM) and out.dtype == jnp.float32
    print("KERNEL_OK")
</pallas_src>

<mosaic_0001>
module attributes {stable_mosaic.version = 11 : i64} {
  func.func @_bert_fused_kernel(%arg0: i32, %arg1: memref<1x8x32xf32, #tpu.memory_space<vmem>>, %arg2: memref<1x1x8xf32, #tpu.memory_space<vmem>>, %arg3: memref<1x32xf32, #tpu.memory_space<vmem>>, %arg4: memref<1x32xf32, #tpu.memory_space<vmem>>, %arg5: memref<2x32x96xf32, #tpu.memory_space<vmem>>, %arg6: memref<2x1x96xf32, #tpu.memory_space<vmem>>, %arg7: memref<2x32x32xf32, #tpu.memory_space<vmem>>, %arg8: memref<2x1x32xf32, #tpu.memory_space<vmem>>, %arg9: memref<2x1x32xf32, #tpu.memory_space<vmem>>, %arg10: memref<2x1x32xf32, #tpu.memory_space<vmem>>, %arg11: memref<2x32x64xf32, #tpu.memory_space<vmem>>, %arg12: memref<2x1x64xf32, #tpu.memory_space<vmem>>, %arg13: memref<2x64x32xf32, #tpu.memory_space<vmem>>, %arg14: memref<2x1x32xf32, #tpu.memory_space<vmem>>, %arg15: memref<2x1x32xf32, #tpu.memory_space<vmem>>, %arg16: memref<2x1x32xf32, #tpu.memory_space<vmem>>, %arg17: memref<32x16xf32, #tpu.memory_space<vmem>>, %arg18: memref<1x1x16xf32, #tpu.memory_space<vmem>>) attributes {dimension_semantics = [#tpu.dimension_semantics<parallel>], iteration_bounds = array<i64: 2>, scalar_prefetch = 0 : i64, scratch_operands = 0 : i64, tpu.core_type = #tpu.core_type<tc>, window_params = [{transform_indices = @transform_0, window_bounds = array<i64: 1, 8, 32>}, {transform_indices = @transform_1, window_bounds = array<i64: 1, 1, 8>}, {pipeline_mode = #tpu.pipeline_mode<synchronous>, transform_indices = @transform_2, window_bounds = array<i64: 1, 32>}, {pipeline_mode = #tpu.pipeline_mode<synchronous>, transform_indices = @transform_3, window_bounds = array<i64: 1, 32>}, {pipeline_mode = #tpu.pipeline_mode<synchronous>, transform_indices = @transform_4, window_bounds = array<i64: 2, 32, 96>}, {pipeline_mode = #tpu.pipeline_mode<synchronous>, transform_indices = @transform_5, window_bounds = array<i64: 2, 1, 96>}, {pipeline_mode = #tpu.pipeline_mode<synchronous>, transform_indices = @transform_6, window_bounds = array<i64: 2, 32, 32>}, {pipeline_mode = #tpu.pipeline_mode<synchronous>, transform_indices = @transform_7, window_bounds = array<i64: 2, 1, 32>}, {pipeline_mode = #tpu.pipeline_mode<synchronous>, transform_indices = @transform_8, window_bounds = array<i64: 2, 1, 32>}, {pipeline_mode = #tpu.pipeline_mode<synchronous>, transform_indices = @transform_9, window_bounds = array<i64: 2, 1, 32>}, {pipeline_mode = #tpu.pipeline_mode<synchronous>, transform_indices = @transform_10, window_bounds = array<i64: 2, 32, 64>}, {pipeline_mode = #tpu.pipeline_mode<synchronous>, transform_indices = @transform_11, window_bounds = array<i64: 2, 1, 64>}, {pipeline_mode = #tpu.pipeline_mode<synchronous>, transform_indices = @transform_12, window_bounds = array<i64: 2, 64, 32>}, {pipeline_mode = #tpu.pipeline_mode<synchronous>, transform_indices = @transform_13, window_bounds = array<i64: 2, 1, 32>}, {pipeline_mode = #tpu.pipeline_mode<synchronous>, transform_indices = @transform_14, window_bounds = array<i64: 2, 1, 32>}, {pipeline_mode = #tpu.pipeline_mode<synchronous>, transform_indices = @transform_15, window_bounds = array<i64: 2, 1, 32>}, {pipeline_mode = #tpu.pipeline_mode<synchronous>, transform_indices = @transform_16, window_bounds = array<i64: 32, 16>}, {transform_indices = @transform_17, window_bounds = array<i64: 1, 1, 16>}]} {
    %c0 = arith.constant 0 : index
    %c0_0 = arith.constant 0 : index
    %c0_1 = arith.constant 0 : index
    %0 = vector.load %arg1[%c0, %c0_0, %c0_1] : memref<1x8x32xf32, #tpu.memory_space<vmem>>, vector<1x8x32xf32>
    %1 = vector.shape_cast %0 : vector<1x8x32xf32> to vector<8x32xf32>
    %c0_2 = arith.constant 0 : index
    %c0_3 = arith.constant 0 : index
    %2 = vector.load %arg3[%c0_2, %c0_3] : memref<1x32xf32, #tpu.memory_space<vmem>>, vector<1x32xf32>
    %c0_4 = arith.constant 0 : index
    %c0_5 = arith.constant 0 : index
    %3 = vector.load %arg4[%c0_4, %c0_5] : memref<1x32xf32, #tpu.memory_space<vmem>>, vector<1x32xf32>
    %cst = arith.constant dense<0.000000e+00> : vector<8xf32>
    %4 = vector.multi_reduction <add>, %1, %cst [1] : vector<8x32xf32> to vector<8xf32>
    %5 = vector.shape_cast %4 : vector<8xf32> to vector<8x1xf32>
    %cst_6 = arith.constant 3.200000e+01 : f32
    %6 = vector.broadcast %cst_6 : f32 to vector<8x1xf32>
    %7 = arith.divf %5, %6 : vector<8x1xf32>
    %8 = vector.broadcast %7 : vector<8x1xf32> to vector<8x32xf32>
    %9 = arith.subf %1, %8 : vector<8x32xf32>
    %10 = arith.mulf %9, %9 : vector<8x32xf32>
    %cst_7 = arith.constant dense<0.000000e+00> : vector<8xf32>
    %11 = vector.multi_reduction <add>, %10, %cst_7 [1] : vector<8x32xf32> to vector<8xf32>
    %12 = vector.shape_cast %11 : vector<8xf32> to vector<8x1xf32>
    %cst_8 = arith.constant 3.200000e+01 : f32
    %13 = vector.broadcast %cst_8 : f32 to vector<8x1xf32>
    %14 = arith.divf %12, %13 : vector<8x1xf32>
    %15 = vector.broadcast %7 : vector<8x1xf32> to vector<8x32xf32>
    %16 = arith.subf %1, %15 : vector<8x32xf32>
    %cst_9 = arith.constant 9.99999996E-13 : f32
    %17 = vector.broadcast %cst_9 : f32 to vector<8x1xf32>
    %18 = arith.addf %14, %17 : vector<8x1xf32>
    %19 = math.rsqrt %18 : vector<8x1xf32>
    %20 = vector.broadcast %19 : vector<8x1xf32> to vector<8x32xf32>
    %21 = arith.mulf %16, %20 : vector<8x32xf32>
    %22 = vector.broadcast %2 : vector<1x32xf32> to vector<8x32xf32>
    %23 = arith.mulf %21, %22 : vector<8x32xf32>
    %24 = vector.broadcast %3 : vector<1x32xf32> to vector<8x32xf32>
    %25 = arith.addf %23, %24 : vector<8x32xf32>
    %c0_10 = arith.constant 0 : index
    %c0_11 = arith.constant 0 : index
    %c0_12 = arith.constant 0 : index
    %26 = vector.load %arg2[%c0_10, %c0_11, %c0_12] : memref<1x1x8xf32, #tpu.memory_space<vmem>>, vector<1x1x8xf32>
    %27 = vector.shape_cast %26 : vector<1x1x8xf32> to vector<1x8xf32>
    %cst_13 = arith.constant 1.000000e+00 : f32
    %28 = vector.broadcast %cst_13 : f32 to vector<1x8xf32>
    %29 = arith.subf %28, %27 : vector<1x8xf32>
    %cst_14 = arith.constant -1.000000e+04 : f32
    %30 = vector.broadcast %cst_14 : f32 to vector<1x8xf32>
    %31 = arith.mulf %29, %30 : vector<1x8xf32>
    %c0_15 = arith.constant 0 : index
    %c0_16 = arith.constant 0 : index
    %c0_17 = arith.constant 0 : index
    %32 = vector.load %arg5[%c0_15, %c0_16, %c0_17] : memref<2x32x96xf32, #tpu.memory_space<vmem>>, vector<1x32x96xf32>
    %33 = vector.shape_cast %32 : vector<1x32x96xf32> to vector<32x96xf32>
    %cst_18 = arith.constant dense<0.000000e+00> : vector<8x96xf32>
    %34 = tpu.matmul %25, %33, %cst_18 {dimension_numbers = #tpu.dot_dimension_numbers<[1], [0], [0], [1], [0, 0, 1, 1], [], []>} : vector<8x32xf32>, vector<32x96xf32>, vector<8x96xf32> -> vector<8x96xf32>
    %c0_19 = arith.constant 0 : index
    %c0_20 = arith.constant 0 : index
    %c0_21 = arith.constant 0 : index
    %35 = vector.load %arg6[%c0_19, %c0_20, %c0_21] : memref<2x1x96xf32, #tpu.memory_space<vmem>>, vector<1x1x96xf32>
    %36 = vector.shape_cast %35 : vector<1x1x96xf32> to vector<1x96xf32>
    %37 = vector.broadcast %36 : vector<1x96xf32> to vector<8x96xf32>
    %38 = arith.addf %34, %37 : vector<8x96xf32>
    %39 = vector.extract_strided_slice %38 {offsets = [0, 0], sizes = [8, 32], strides = [1, 1]} : vector<8x96xf32> to vector<8x32xf32>
    %40 = vector.extract_strided_slice %38 {offsets = [0, 32], sizes = [8, 32], strides = [1, 1]} : vector<8x96xf32> to vector<8x32xf32>
    %41 = vector.extract_strided_slice %38 {offsets = [0, 64], sizes = [8, 32], strides = [1, 1]} : vector<8x96xf32> to vector<8x32xf32>
    %c0_22 = arith.constant 0 : index
    %c0_23 = arith.constant 0 : index
    %c0_24 = arith.constant 0 : index
    %42 = vector.load %arg7[%c0_22, %c0_23, %c0_24] : memref<2x32x32xf32, #tpu.memory_space<vmem>>, vector<1x32x32xf32>
    %43 = vector.shape_cast %42 : vector<1x32x32xf32> to vector<32x32xf32>
    %cst_25 = arith.constant 0.000000e+00 : f32
    %44 = vector.broadcast %cst_25 : f32 to vector<8x32xf32>
    %45 = vector.extract_strided_slice %39 {offsets = [0, 0], sizes = [8, 8], strides = [1, 1]} : vector<8x32xf32> to vector<8x8xf32>
    %46 = vector.extract_strided_slice %40 {offsets = [0, 0], sizes = [8, 8], strides = [1, 1]} : vector<8x32xf32> to vector<8x8xf32>
    %47 = vector.extract_strided_slice %41 {offsets = [0, 0], sizes = [8, 8], strides = [1, 1]} : vector<8x32xf32> to vector<8x8xf32>
    "tpu.trace_start"() <{level = 10 : i32, message = "qd,kd->qk"}> : () -> ()
    %cst_26 = arith.constant dense<0.000000e+00> : vector<8x8xf32>
    %48 = tpu.matmul %45, %46, %cst_26 {dimension_numbers = #tpu.dot_dimension_numbers<[1], [1], [0], [0], [0, 0, 1, 0], [], []>} : vector<8x8xf32>, vector<8x8xf32>, vector<8x8xf32> -> vector<8x8xf32>
    "tpu.trace_stop"() : () -> ()
    %cst_27 = arith.constant 0.353553385 : f32
    %49 = vector.broadcast %cst_27 : f32 to vector<8x8xf32>
    %50 = arith.mulf %48, %49 : vector<8x8xf32>
    %51 = vector.broadcast %31 : vector<1x8xf32> to vector<8x8xf32>
    %52 = arith.addf %50, %51 : vector<8x8xf32>
    %cst_28 = arith.constant dense<0xFF800000> : vector<8xf32>
    %53 = vector.multi_reduction <maximumf>, %52, %cst_28 [1] : vector<8x8xf32> to vector<8xf32>
    %54 = vector.shape_cast %53 : vector<8xf32> to vector<8x1xf32>
    %55 = vector.broadcast %54 : vector<8x1xf32> to vector<8x8xf32>
    %56 = arith.subf %52, %55 : vector<8x8xf32>
    %57 = math.exp %56 : vector<8x8xf32>
    %cst_29 = arith.constant dense<0.000000e+00> : vector<8xf32>
    %58 = vector.multi_reduction <add>, %57, %cst_29 [1] : vector<8x8xf32> to vector<8xf32>
    %59 = vector.shape_cast %58 : vector<8xf32> to vector<8x1xf32>
    %60 = tpu.reciprocal %59 {approx = true} : vector<8x1xf32> -> vector<8x1xf32>
    %61 = vector.broadcast %60 : vector<8x1xf32> to vector<8x8xf32>
    %62 = arith.mulf %57, %61 : vector<8x8xf32>
    %cst_30 = arith.constant dense<0.000000e+00> : vector<8x8xf32>
    %63 = tpu.matmul %62, %47, %cst_30 {dimension_numbers = #tpu.dot_dimension_numbers<[1], [0], [0], [1], [0, 0, 1, 1], [], []>} : vector<8x8xf32>, vector<8x8xf32>, vector<8x8xf32> -> vector<8x8xf32>
    %64 = vector.extract_strided_slice %43 {offsets = [0, 0], sizes = [8, 32], strides = [1, 1]} : vector<32x32xf32> to vector<8x32xf32>
    %cst_31 = arith.constant dense<0.000000e+00> : vector<8x32xf32>
    %65 = tpu.matmul %63, %64, %cst_31 {dimension_numbers = #tpu.dot_dimension_numbers<[1], [0], [0], [1], [0, 0, 1, 1], [], []>} : vector<8x8xf32>, vector<8x32xf32>, vector<8x32xf32> -> vector<8x32xf32>
    %66 = arith.addf %44, %65 : vector<8x32xf32>
    %67 = vector.extract_strided_slice %39 {offsets = [0, 8], sizes = [8, 8], strides = [1, 1]} : vector<8x32xf32> to vector<8x8xf32>
    %68 = vector.extract_strided_slice %40 {offsets = [0, 8], sizes = [8, 8], strides = [1, 1]} : vector<8x32xf32> to vector<8x8xf32>
    %69 = vector.extract_strided_slice %41 {offsets = [0, 8], sizes = [8, 8], strides = [1, 1]} : vector<8x32xf32> to vector<8x8xf32>
    "tpu.trace_start"() <{level = 10 : i32, message = "qd,kd->qk"}> : () -> ()
    %cst_32 = arith.constant dense<0.000000e+00> : vector<8x8xf32>
    %70 = tpu.matmul %67, %68, %cst_32 {dimension_numbers = #tpu.dot_dimension_numbers<[1], [1], [0], [0], [0, 0, 1, 0], [], []>} : vector<8x8xf32>, vector<8x8xf32>, vector<8x8xf32> -> vector<8x8xf32>
    "tpu.trace_stop"() : () -> ()
    %cst_33 = arith.constant 0.353553385 : f32
    %71 = vector.broadcast %cst_33 : f32 to vector<8x8xf32>
    %72 = arith.mulf %70, %71 : vector<8x8xf32>
    %73 = vector.broadcast %31 : vector<1x8xf32> to vector<8x8xf32>
    %74 = arith.addf %72, %73 : vector<8x8xf32>
    %cst_34 = arith.constant dense<0xFF800000> : vector<8xf32>
    %75 = vector.multi_reduction <maximumf>, %74, %cst_34 [1] : vector<8x8xf32> to vector<8xf32>
    %76 = vector.shape_cast %75 : vector<8xf32> to vector<8x1xf32>
    %77 = vector.broadcast %76 : vector<8x1xf32> to vector<8x8xf32>
    %78 = arith.subf %74, %77 : vector<8x8xf32>
    %79 = math.exp %78 : vector<8x8xf32>
    %cst_35 = arith.constant dense<0.000000e+00> : vector<8xf32>
    %80 = vector.multi_reduction <add>, %79, %cst_35 [1] : vector<8x8xf32> to vector<8xf32>
    %81 = vector.shape_cast %80 : vector<8xf32> to vector<8x1xf32>
    %82 = tpu.reciprocal %81 {approx = true} : vector<8x1xf32> -> vector<8x1xf32>
    %83 = vector.broadcast %82 : vector<8x1xf32> to vector<8x8xf32>
    %84 = arith.mulf %79, %83 : vector<8x8xf32>
    %cst_36 = arith.constant dense<0.000000e+00> : vector<8x8xf32>
    %85 = tpu.matmul %84, %69, %cst_36 {dimension_numbers = #tpu.dot_dimension_numbers<[1], [0], [0], [1], [0, 0, 1, 1], [], []>} : vector<8x8xf32>, vector<8x8xf32>, vector<8x8xf32> -> vector<8x8xf32>
    %86 = vector.extract_strided_slice %43 {offsets = [8, 0], sizes = [8, 32], strides = [1, 1]} : vector<32x32xf32> to vector<8x32xf32>
    %cst_37 = arith.constant dense<0.000000e+00> : vector<8x32xf32>
    %87 = tpu.matmul %85, %86, %cst_37 {dimension_numbers = #tpu.dot_dimension_numbers<[1], [0], [0], [1], [0, 0, 1, 1], [], []>} : vector<8x8xf32>, vector<8x32xf32>, vector<8x32xf32> -> vector<8x32xf32>
    %88 = arith.addf %66, %87 : vector<8x32xf32>
    %89 = vector.extract_strided_slice %39 {offsets = [0, 16], sizes = [8, 8], strides = [1, 1]} : vector<8x32xf32> to vector<8x8xf32>
    %90 = vector.extract_strided_slice %40 {offsets = [0, 16], sizes = [8, 8], strides = [1, 1]} : vector<8x32xf32> to vector<8x8xf32>
    %91 = vector.extract_strided_slice %41 {offsets = [0, 16], sizes = [8, 8], strides = [1, 1]} : vector<8x32xf32> to vector<8x8xf32>
    "tpu.trace_start"() <{level = 10 : i32, message = "qd,kd->qk"}> : () -> ()
    %cst_38 = arith.constant dense<0.000000e+00> : vector<8x8xf32>
    %92 = tpu.matmul %89, %90, %cst_38 {dimension_numbers = #tpu.dot_dimension_numbers<[1], [1], [0], [0], [0, 0, 1, 0], [], []>} : vector<8x8xf32>, vector<8x8xf32>, vector<8x8xf32> -> vector<8x8xf32>
    "tpu.trace_stop"() : () -> ()
    %cst_39 = arith.constant 0.353553385 : f32
    %93 = vector.broadcast %cst_39 : f32 to vector<8x8xf32>
    %94 = arith.mulf %92, %93 : vector<8x8xf32>
    %95 = vector.broadcast %31 : vector<1x8xf32> to vector<8x8xf32>
    %96 = arith.addf %94, %95 : vector<8x8xf32>
    %cst_40 = arith.constant dense<0xFF800000> : vector<8xf32>
    %97 = vector.multi_reduction <maximumf>, %96, %cst_40 [1] : vector<8x8xf32> to vector<8xf32>
    %98 = vector.shape_cast %97 : vector<8xf32> to vector<8x1xf32>
    %99 = vector.broadcast %98 : vector<8x1xf32> to vector<8x8xf32>
    %100 = arith.subf %96, %99 : vector<8x8xf32>
    %101 = math.exp %100 : vector<8x8xf32>
    %cst_41 = arith.constant dense<0.000000e+00> : vector<8xf32>
    %102 = vector.multi_reduction <add>, %101, %cst_41 [1] : vector<8x8xf32> to vector<8xf32>
    %103 = vector.shape_cast %102 : vector<8xf32> to vector<8x1xf32>
    %104 = tpu.reciprocal %103 {approx = true} : vector<8x1xf32> -> vector<8x1xf32>
    %105 = vector.broadcast %104 : vector<8x1xf32> to vector<8x8xf32>
    %106 = arith.mulf %101, %105 : vector<8x8xf32>
    %cst_42 = arith.constant dense<0.000000e+00> : vector<8x8xf32>
    %107 = tpu.matmul %106, %91, %cst_42 {dimension_numbers = #tpu.dot_dimension_numbers<[1], [0], [0], [1], [0, 0, 1, 1], [], []>} : vector<8x8xf32>, vector<8x8xf32>, vector<8x8xf32> -> vector<8x8xf32>
    %108 = vector.extract_strided_slice %43 {offsets = [16, 0], sizes = [8, 32], strides = [1, 1]} : vector<32x32xf32> to vector<8x32xf32>
    %cst_43 = arith.constant dense<0.000000e+00> : vector<8x32xf32>
    %109 = tpu.matmul %107, %108, %cst_43 {dimension_numbers = #tpu.dot_dimension_numbers<[1], [0], [0], [1], [0, 0, 1, 1], [], []>} : vector<8x8xf32>, vector<8x32xf32>, vector<8x32xf32> -> vector<8x32xf32>
    %110 = arith.addf %88, %109 : vector<8x32xf32>
    %111 = vector.extract_strided_slice %39 {offsets = [0, 24], sizes = [8, 8], strides = [1, 1]} : vector<8x32xf32> to vector<8x8xf32>
    %112 = vector.extract_strided_slice %40 {offsets = [0, 24], sizes = [8, 8], strides = [1, 1]} : vector<8x32xf32> to vector<8x8xf32>
    %113 = vector.extract_strided_slice %41 {offsets = [0, 24], sizes = [8, 8], strides = [1, 1]} : vector<8x32xf32> to vector<8x8xf32>
    "tpu.trace_start"() <{level = 10 : i32, message = "qd,kd->qk"}> : () -> ()
    %cst_44 = arith.constant dense<0.000000e+00> : vector<8x8xf32>
    %114 = tpu.matmul %111, %112, %cst_44 {dimension_numbers = #tpu.dot_dimension_numbers<[1], [1], [0], [0], [0, 0, 1, 0], [], []>} : vector<8x8xf32>, vector<8x8xf32>, vector<8x8xf32> -> vector<8x8xf32>
    "tpu.trace_stop"() : () -> ()
    %cst_45 = arith.constant 0.353553385 : f32
    %115 = vector.broadcast %cst_45 : f32 to vector<8x8xf32>
    %116 = arith.mulf %114, %115 : vector<8x8xf32>
    %117 = vector.broadcast %31 : vector<1x8xf32> to vector<8x8xf32>
    %118 = arith.addf %116, %117 : vector<8x8xf32>
    %cst_46 = arith.constant dense<0xFF800000> : vector<8xf32>
    %119 = vector.multi_reduction <maximumf>, %118, %cst_46 [1] : vector<8x8xf32> to vector<8xf32>
    %120 = vector.shape_cast %119 : vector<8xf32> to vector<8x1xf32>
    %121 = vector.broadcast %120 : vector<8x1xf32> to vector<8x8xf32>
    %122 = arith.subf %118, %121 : vector<8x8xf32>
    %123 = math.exp %122 : vector<8x8xf32>
    %cst_47 = arith.constant dense<0.000000e+00> : vector<8xf32>
    %124 = vector.multi_reduction <add>, %123, %cst_47 [1] : vector<8x8xf32> to vector<8xf32>
    %125 = vector.shape_cast %124 : vector<8xf32> to vector<8x1xf32>
    %126 = tpu.reciprocal %125 {approx = true} : vector<8x1xf32> -> vector<8x1xf32>
    %127 = vector.broadcast %126 : vector<8x1xf32> to vector<8x8xf32>
    %128 = arith.mulf %123, %127 : vector<8x8xf32>
    %cst_48 = arith.constant dense<0.000000e+00> : vector<8x8xf32>
    %129 = tpu.matmul %128, %113, %cst_48 {dimension_numbers = #tpu.dot_dimension_numbers<[1], [0], [0], [1], [0, 0, 1, 1], [], []>} : vector<8x8xf32>, vector<8x8xf32>, vector<8x8xf32> -> vector<8x8xf32>
    %130 = vector.extract_strided_slice %43 {offsets = [24, 0], sizes = [8, 32], strides = [1, 1]} : vector<32x32xf32> to vector<8x32xf32>
    %cst_49 = arith.constant dense<0.000000e+00> : vector<8x32xf32>
    %131 = tpu.matmul %129, %130, %cst_49 {dimension_numbers = #tpu.dot_dimension_numbers<[1], [0], [0], [1], [0, 0, 1, 1], [], []>} : vector<8x8xf32>, vector<8x32xf32>, vector<8x32xf32> -> vector<8x32xf32>
    %132 = arith.addf %110, %131 : vector<8x32xf32>
    %c0_50 = arith.constant 0 : index
    %c0_51 = arith.constant 0 : index
    %c0_52 = arith.constant 0 : index
    %133 = vector.load %arg8[%c0_50, %c0_51, %c0_52] : memref<2x1x32xf32, #tpu.memory_space<vmem>>, vector<1x1x32xf32>
    %134 = vector.shape_cast %133 : vector<1x1x32xf32> to vector<1x32xf32>
    %135 = vector.broadcast %134 : vector<1x32xf32> to vector<8x32xf32>
    %136 = arith.addf %132, %135 : vector<8x32xf32>
    %137 = arith.addf %136, %25 : vector<8x32xf32>
    %c0_53 = arith.constant 0 : index
    %c0_54 = arith.constant 0 : index
    %c0_55 = arith.constant 0 : index
    %138 = vector.load %arg9[%c0_53, %c0_54, %c0_55] : memref<2x1x32xf32, #tpu.memory_space<vmem>>, vector<1x1x32xf32>
    %139 = vector.shape_cast %138 : vector<1x1x32xf32> to vector<1x32xf32>
    %c0_56 = arith.constant 0 : index
    %c0_57 = arith.constant 0 : index
    %c0_58 = arith.constant 0 : index
    %140 = vector.load %arg10[%c0_56, %c0_57, %c0_58] : memref<2x1x32xf32, #tpu.memory_space<vmem>>, vector<1x1x32xf32>
    %141 = vector.shape_cast %140 : vector<1x1x32xf32> to vector<1x32xf32>
    %cst_59 = arith.constant dense<0.000000e+00> : vector<8xf32>
    %142 = vector.multi_reduction <add>, %137, %cst_59 [1] : vector<8x32xf32> to vector<8xf32>
    %143 = vector.shape_cast %142 : vector<8xf32> to vector<8x1xf32>
    %cst_60 = arith.constant 3.200000e+01 : f32
    %144 = vector.broadcast %cst_60 : f32 to vector<8x1xf32>
    %145 = arith.divf %143, %144 : vector<8x1xf32>
    %146 = vector.broadcast %145 : vector<8x1xf32> to vector<8x32xf32>
    %147 = arith.subf %137, %146 : vector<8x32xf32>
    %148 = arith.mulf %147, %147 : vector<8x32xf32>
    %cst_61 = arith.constant dense<0.000000e+00> : vector<8xf32>
    %149 = vector.multi_reduction <add>, %148, %cst_61 [1] : vector<8x32xf32> to vector<8xf32>
    %150 = vector.shape_cast %149 : vector<8xf32> to vector<8x1xf32>
    %cst_62 = arith.constant 3.200000e+01 : f32
    %151 = vector.broadcast %cst_62 : f32 to vector<8x1xf32>
    %152 = arith.divf %150, %151 : vector<8x1xf32>
    %153 = vector.broadcast %145 : vector<8x1xf32> to vector<8x32xf32>
    %154 = arith.subf %137, %153 : vector<8x32xf32>
    %cst_63 = arith.constant 9.99999996E-13 : f32
    %155 = vector.broadcast %cst_63 : f32 to vector<8x1xf32>
    %156 = arith.addf %152, %155 : vector<8x1xf32>
    %157 = math.rsqrt %156 : vector<8x1xf32>
    %158 = vector.broadcast %157 : vector<8x1xf32> to vector<8x32xf32>
    %159 = arith.mulf %154, %158 : vector<8x32xf32>
    %160 = vector.broadcast %139 : vector<1x32xf32> to vector<8x32xf32>
    %161 = arith.mulf %159, %160 : vector<8x32xf32>
    %162 = vector.broadcast %141 : vector<1x32xf32> to vector<8x32xf32>
    %163 = arith.addf %161, %162 : vector<8x32xf32>
    %c0_64 = arith.constant 0 : index
    %c0_65 = arith.constant 0 : index
    %c0_66 = arith.constant 0 : index
    %164 = vector.load %arg11[%c0_64, %c0_65, %c0_66] : memref<2x32x64xf32, #tpu.memory_space<vmem>>, vector<1x32x64xf32>
    %165 = vector.shape_cast %164 : vector<1x32x64xf32> to vector<32x64xf32>
    %cst_67 = arith.constant dense<0.000000e+00> : vector<8x64xf32>
    %166 = tpu.matmul %163, %165, %cst_67 {dimension_numbers = #tpu.dot_dimension_numbers<[1], [0], [0], [1], [0, 0, 1, 1], [], []>} : vector<8x32xf32>, vector<32x64xf32>, vector<8x64xf32> -> vector<8x64xf32>
    %c0_68 = arith.constant 0 : index
    %c0_69 = arith.constant 0 : index
    %c0_70 = arith.constant 0 : index
    %167 = vector.load %arg12[%c0_68, %c0_69, %c0_70] : memref<2x1x64xf32, #tpu.memory_space<vmem>>, vector<1x1x64xf32>
    %168 = vector.shape_cast %167 : vector<1x1x64xf32> to vector<1x64xf32>
    %169 = vector.broadcast %168 : vector<1x64xf32> to vector<8x64xf32>
    %170 = arith.addf %166, %169 : vector<8x64xf32>
    %cst_71 = arith.constant 5.000000e-01 : f32
    %171 = vector.broadcast %cst_71 : f32 to vector<8x64xf32>
    %172 = arith.mulf %171, %170 : vector<8x64xf32>
    %cst_72 = arith.constant 4.471500e-02 : f32
    %173 = vector.broadcast %cst_72 : f32 to vector<8x64xf32>
    %174 = arith.mulf %173, %170 : vector<8x64xf32>
    %175 = arith.mulf %174, %170 : vector<8x64xf32>
    %176 = arith.mulf %175, %170 : vector<8x64xf32>
    %177 = arith.addf %170, %176 : vector<8x64xf32>
    %cst_73 = arith.constant 0.797884583 : f32
    %178 = vector.broadcast %cst_73 : f32 to vector<8x64xf32>
    %179 = arith.mulf %178, %177 : vector<8x64xf32>
    %180 = math.tanh %179 : vector<8x64xf32>
    %cst_74 = arith.constant 1.000000e+00 : f32
    %181 = vector.broadcast %cst_74 : f32 to vector<8x64xf32>
    %182 = arith.addf %181, %180 : vector<8x64xf32>
    %183 = arith.mulf %172, %182 : vector<8x64xf32>
    %c0_75 = arith.constant 0 : index
    %c0_76 = arith.constant 0 : index
    %c0_77 = arith.constant 0 : index
    %184 = vector.load %arg13[%c0_75, %c0_76, %c0_77] : memref<2x64x32xf32, #tpu.memory_space<vmem>>, vector<1x64x32xf32>
    %185 = vector.shape_cast %184 : vector<1x64x32xf32> to vector<64x32xf32>
    %cst_78 = arith.constant dense<0.000000e+00> : vector<8x32xf32>
    %186 = tpu.matmul %183, %185, %cst_78 {dimension_numbers = #tpu.dot_dimension_numbers<[1], [0], [0], [1], [0, 0, 1, 1], [], []>} : vector<8x64xf32>, vector<64x32xf32>, vector<8x32xf32> -> vector<8x32xf32>
    %c0_79 = arith.constant 0 : index
    %c0_80 = arith.constant 0 : index
    %c0_81 = arith.constant 0 : index
    %187 = vector.load %arg14[%c0_79, %c0_80, %c0_81] : memref<2x1x32xf32, #tpu.memory_space<vmem>>, vector<1x1x32xf32>
    %188 = vector.shape_cast %187 : vector<1x1x32xf32> to vector<1x32xf32>
    %189 = vector.broadcast %188 : vector<1x32xf32> to vector<8x32xf32>
    %190 = arith.addf %186, %189 : vector<8x32xf32>
    %191 = arith.addf %190, %163 : vector<8x32xf32>
    %c0_82 = arith.constant 0 : index
    %c0_83 = arith.constant 0 : index
    %c0_84 = arith.constant 0 : index
    %192 = vector.load %arg15[%c0_82, %c0_83, %c0_84] : memref<2x1x32xf32, #tpu.memory_space<vmem>>, vector<1x1x32xf32>
    %193 = vector.shape_cast %192 : vector<1x1x32xf32> to vector<1x32xf32>
    %c0_85 = arith.constant 0 : index
    %c0_86 = arith.constant 0 : index
    %c0_87 = arith.constant 0 : index
    %194 = vector.load %arg16[%c0_85, %c0_86, %c0_87] : memref<2x1x32xf32, #tpu.memory_space<vmem>>, vector<1x1x32xf32>
    %195 = vector.shape_cast %194 : vector<1x1x32xf32> to vector<1x32xf32>
    %cst_88 = arith.constant dense<0.000000e+00> : vector<8xf32>
    %196 = vector.multi_reduction <add>, %191, %cst_88 [1] : vector<8x32xf32> to vector<8xf32>
    %197 = vector.shape_cast %196 : vector<8xf32> to vector<8x1xf32>
    %cst_89 = arith.constant 3.200000e+01 : f32
    %198 = vector.broadcast %cst_89 : f32 to vector<8x1xf32>
    %199 = arith.divf %197, %198 : vector<8x1xf32>
    %200 = vector.broadcast %199 : vector<8x1xf32> to vector<8x32xf32>
    %201 = arith.subf %191, %200 : vector<8x32xf32>
    %202 = arith.mulf %201, %201 : vector<8x32xf32>
    %cst_90 = arith.constant dense<0.000000e+00> : vector<8xf32>
    %203 = vector.multi_reduction <add>, %202, %cst_90 [1] : vector<8x32xf32> to vector<8xf32>
    %204 = vector.shape_cast %203 : vector<8xf32> to vector<8x1xf32>
    %cst_91 = arith.constant 3.200000e+01 : f32
    %205 = vector.broadcast %cst_91 : f32 to vector<8x1xf32>
    %206 = arith.divf %204, %205 : vector<8x1xf32>
    %207 = vector.broadcast %199 : vector<8x1xf32> to vector<8x32xf32>
    %208 = arith.subf %191, %207 : vector<8x32xf32>
    %cst_92 = arith.constant 9.99999996E-13 : f32
    %209 = vector.broadcast %cst_92 : f32 to vector<8x1xf32>
    %210 = arith.addf %206, %209 : vector<8x1xf32>
    %211 = math.rsqrt %210 : vector<8x1xf32>
    %212 = vector.broadcast %211 : vector<8x1xf32> to vector<8x32xf32>
    %213 = arith.mulf %208, %212 : vector<8x32xf32>
    %214 = vector.broadcast %193 : vector<1x32xf32> to vector<8x32xf32>
    %215 = arith.mulf %213, %214 : vector<8x32xf32>
    %216 = vector.broadcast %195 : vector<1x32xf32> to vector<8x32xf32>
    %217 = arith.addf %215, %216 : vector<8x32xf32>
    %c1 = arith.constant 1 : index
    %c0_93 = arith.constant 0 : index
    %c0_94 = arith.constant 0 : index
    %218 = vector.load %arg5[%c1, %c0_93, %c0_94] : memref<2x32x96xf32, #tpu.memory_space<vmem>>, vector<1x32x96xf32>
    %219 = vector.shape_cast %218 : vector<1x32x96xf32> to vector<32x96xf32>
    %cst_95 = arith.constant dense<0.000000e+00> : vector<8x96xf32>
    %220 = tpu.matmul %217, %219, %cst_95 {dimension_numbers = #tpu.dot_dimension_numbers<[1], [0], [0], [1], [0, 0, 1, 1], [], []>} : vector<8x32xf32>, vector<32x96xf32>, vector<8x96xf32> -> vector<8x96xf32>
    %c1_96 = arith.constant 1 : index
    %c0_97 = arith.constant 0 : index
    %c0_98 = arith.constant 0 : index
    %221 = vector.load %arg6[%c1_96, %c0_97, %c0_98] : memref<2x1x96xf32, #tpu.memory_space<vmem>>, vector<1x1x96xf32>
    %222 = vector.shape_cast %221 : vector<1x1x96xf32> to vector<1x96xf32>
    %223 = vector.broadcast %222 : vector<1x96xf32> to vector<8x96xf32>
    %224 = arith.addf %220, %223 : vector<8x96xf32>
    %225 = vector.extract_strided_slice %224 {offsets = [0, 0], sizes = [8, 32], strides = [1, 1]} : vector<8x96xf32> to vector<8x32xf32>
    %226 = vector.extract_strided_slice %224 {offsets = [0, 32], sizes = [8, 32], strides = [1, 1]} : vector<8x96xf32> to vector<8x32xf32>
    %227 = vector.extract_strided_slice %224 {offsets = [0, 64], sizes = [8, 32], strides = [1, 1]} : vector<8x96xf32> to vector<8x32xf32>
    %c1_99 = arith.constant 1 : index
    %c0_100 = arith.constant 0 : index
    %c0_101 = arith.constant 0 : index
    %228 = vector.load %arg7[%c1_99, %c0_100, %c0_101] : memref<2x32x32xf32, #tpu.memory_space<vmem>>, vector<1x32x32xf32>
    %229 = vector.shape_cast %228 : vector<1x32x32xf32> to vector<32x32xf32>
    %cst_102 = arith.constant 0.000000e+00 : f32
    %230 = vector.broadcast %cst_102 : f32 to vector<8x32xf32>
    %231 = vector.extract_strided_slice %225 {offsets = [0, 0], sizes = [8, 8], strides = [1, 1]} : vector<8x32xf32> to vector<8x8xf32>
    %232 = vector.extract_strided_slice %226 {offsets = [0, 0], sizes = [8, 8], strides = [1, 1]} : vector<8x32xf32> to vector<8x8xf32>
    %233 = vector.extract_strided_slice %227 {offsets = [0, 0], sizes = [8, 8], strides = [1, 1]} : vector<8x32xf32> to vector<8x8xf32>
    "tpu.trace_start"() <{level = 10 : i32, message = "qd,kd->qk"}> : () -> ()
    %cst_103 = arith.constant dense<0.000000e+00> : vector<8x8xf32>
    %234 = tpu.matmul %231, %232, %cst_103 {dimension_numbers = #tpu.dot_dimension_numbers<[1], [1], [0], [0], [0, 0, 1, 0], [], []>} : vector<8x8xf32>, vector<8x8xf32>, vector<8x8xf32> -> vector<8x8xf32>
    "tpu.trace_stop"() : () -> ()
    %cst_104 = arith.constant 0.353553385 : f32
    %235 = vector.broadcast %cst_104 : f32 to vector<8x8xf32>
    %236 = arith.mulf %234, %235 : vector<8x8xf32>
    %237 = vector.broadcast %31 : vector<1x8xf32> to vector<8x8xf32>
    %238 = arith.addf %236, %237 : vector<8x8xf32>
    %cst_105 = arith.constant dense<0xFF800000> : vector<8xf32>
    %239 = vector.multi_reduction <maximumf>, %238, %cst_105 [1] : vector<8x8xf32> to vector<8xf32>
    %240 = vector.shape_cast %239 : vector<8xf32> to vector<8x1xf32>
    %241 = vector.broadcast %240 : vector<8x1xf32> to vector<8x8xf32>
    %242 = arith.subf %238, %241 : vector<8x8xf32>
    %243 = math.exp %242 : vector<8x8xf32>
    %cst_106 = arith.constant dense<0.000000e+00> : vector<8xf32>
    %244 = vector.multi_reduction <add>, %243, %cst_106 [1] : vector<8x8xf32> to vector<8xf32>
    %245 = vector.shape_cast %244 : vector<8xf32> to vector<8x1xf32>
    %246 = tpu.reciprocal %245 {approx = true} : vector<8x1xf32> -> vector<8x1xf32>
    %247 = vector.broadcast %246 : vector<8x1xf32> to vector<8x8xf32>
    %248 = arith.mulf %243, %247 : vector<8x8xf32>
    %cst_107 = arith.constant dense<0.000000e+00> : vector<8x8xf32>
    %249 = tpu.matmul %248, %233, %cst_107 {dimension_numbers = #tpu.dot_dimension_numbers<[1], [0], [0], [1], [0, 0, 1, 1], [], []>} : vector<8x8xf32>, vector<8x8xf32>, vector<8x8xf32> -> vector<8x8xf32>
    %250 = vector.extract_strided_slice %229 {offsets = [0, 0], sizes = [8, 32], strides = [1, 1]} : vector<32x32xf32> to vector<8x32xf32>
    %cst_108 = arith.constant dense<0.000000e+00> : vector<8x32xf32>
    %251 = tpu.matmul %249, %250, %cst_108 {dimension_numbers = #tpu.dot_dimension_numbers<[1], [0], [0], [1], [0, 0, 1, 1], [], []>} : vector<8x8xf32>, vector<8x32xf32>, vector<8x32xf32> -> vector<8x32xf32>
    %252 = arith.addf %230, %251 : vector<8x32xf32>
    %253 = vector.extract_strided_slice %225 {offsets = [0, 8], sizes = [8, 8], strides = [1, 1]} : vector<8x32xf32> to vector<8x8xf32>
    %254 = vector.extract_strided_slice %226 {offsets = [0, 8], sizes = [8, 8], strides = [1, 1]} : vector<8x32xf32> to vector<8x8xf32>
    %255 = vector.extract_strided_slice %227 {offsets = [0, 8], sizes = [8, 8], strides = [1, 1]} : vector<8x32xf32> to vector<8x8xf32>
    "tpu.trace_start"() <{level = 10 : i32, message = "qd,kd->qk"}> : () -> ()
    %cst_109 = arith.constant dense<0.000000e+00> : vector<8x8xf32>
    %256 = tpu.matmul %253, %254, %cst_109 {dimension_numbers = #tpu.dot_dimension_numbers<[1], [1], [0], [0], [0, 0, 1, 0], [], []>} : vector<8x8xf32>, vector<8x8xf32>, vector<8x8xf32> -> vector<8x8xf32>
    "tpu.trace_stop"() : () -> ()
    %cst_110 = arith.constant 0.353553385 : f32
    %257 = vector.broadcast %cst_110 : f32 to vector<8x8xf32>
    %258 = arith.mulf %256, %257 : vector<8x8xf32>
    %259 = vector.broadcast %31 : vector<1x8xf32> to vector<8x8xf32>
    %260 = arith.addf %258, %259 : vector<8x8xf32>
    %cst_111 = arith.constant dense<0xFF800000> : vector<8xf32>
    %261 = vector.multi_reduction <maximumf>, %260, %cst_111 [1] : vector<8x8xf32> to vector<8xf32>
    %262 = vector.shape_cast %261 : vector<8xf32> to vector<8x1xf32>
    %263 = vector.broadcast %262 : vector<8x1xf32> to vector<8x8xf32>
    %264 = arith.subf %260, %263 : vector<8x8xf32>
    %265 = math.exp %264 : vector<8x8xf32>
    %cst_112 = arith.constant dense<0.000000e+00> : vector<8xf32>
    %266 = vector.multi_reduction <add>, %265, %cst_112 [1] : vector<8x8xf32> to vector<8xf32>
    %267 = vector.shape_cast %266 : vector<8xf32> to vector<8x1xf32>
    %268 = tpu.reciprocal %267 {approx = true} : vector<8x1xf32> -> vector<8x1xf32>
    %269 = vector.broadcast %268 : vector<8x1xf32> to vector<8x8xf32>
    %270 = arith.mulf %265, %269 : vector<8x8xf32>
    %cst_113 = arith.constant dense<0.000000e+00> : vector<8x8xf32>
    %271 = tpu.matmul %270, %255, %cst_113 {dimension_numbers = #tpu.dot_dimension_numbers<[1], [0], [0], [1], [0, 0, 1, 1], [], []>} : vector<8x8xf32>, vector<8x8xf32>, vector<8x8xf32> -> vector<8x8xf32>
    %272 = vector.extract_strided_slice %229 {offsets = [8, 0], sizes = [8, 32], strides = [1, 1]} : vector<32x32xf32> to vector<8x32xf32>
    %cst_114 = arith.constant dense<0.000000e+00> : vector<8x32xf32>
    %273 = tpu.matmul %271, %272, %cst_114 {dimension_numbers = #tpu.dot_dimension_numbers<[1], [0], [0], [1], [0, 0, 1, 1], [], []>} : vector<8x8xf32>, vector<8x32xf32>, vector<8x32xf32> -> vector<8x32xf32>
    %274 = arith.addf %252, %273 : vector<8x32xf32>
    %275 = vector.extract_strided_slice %225 {offsets = [0, 16], sizes = [8, 8], strides = [1, 1]} : vector<8x32xf32> to vector<8x8xf32>
    %276 = vector.extract_strided_slice %226 {offsets = [0, 16], sizes = [8, 8], strides = [1, 1]} : vector<8x32xf32> to vector<8x8xf32>
    %277 = vector.extract_strided_slice %227 {offsets = [0, 16], sizes = [8, 8], strides = [1, 1]} : vector<8x32xf32> to vector<8x8xf32>
    "tpu.trace_start"() <{level = 10 : i32, message = "qd,kd->qk"}> : () -> ()
    %cst_115 = arith.constant dense<0.000000e+00> : vector<8x8xf32>
    %278 = tpu.matmul %275, %276, %cst_115 {dimension_numbers = #tpu.dot_dimension_numbers<[1], [1], [0], [0], [0, 0, 1, 0], [], []>} : vector<8x8xf32>, vector<8x8xf32>, vector<8x8xf32> -> vector<8x8xf32>
    "tpu.trace_stop"() : () -> ()
    %cst_116 = arith.constant 0.353553385 : f32
    %279 = vector.broadcast %cst_116 : f32 to vector<8x8xf32>
    %280 = arith.mulf %278, %279 : vector<8x8xf32>
    %281 = vector.broadcast %31 : vector<1x8xf32> to vector<8x8xf32>
    %282 = arith.addf %280, %281 : vector<8x8xf32>
    %cst_117 = arith.constant dense<0xFF800000> : vector<8xf32>
    %283 = vector.multi_reduction <maximumf>, %282, %cst_117 [1] : vector<8x8xf32> to vector<8xf32>
    %284 = vector.shape_cast %283 : vector<8xf32> to vector<8x1xf32>
    %285 = vector.broadcast %284 : vector<8x1xf32> to vector<8x8xf32>
    %286 = arith.subf %282, %285 : vector<8x8xf32>
    %287 = math.exp %286 : vector<8x8xf32>
    %cst_118 = arith.constant dense<0.000000e+00> : vector<8xf32>
    %288 = vector.multi_reduction <add>, %287, %cst_118 [1] : vector<8x8xf32> to vector<8xf32>
    %289 = vector.shape_cast %288 : vector<8xf32> to vector<8x1xf32>
    %290 = tpu.reciprocal %289 {approx = true} : vector<8x1xf32> -> vector<8x1xf32>
    %291 = vector.broadcast %290 : vector<8x1xf32> to vector<8x8xf32>
    %292 = arith.mulf %287, %291 : vector<8x8xf32>
    %cst_119 = arith.constant dense<0.000000e+00> : vector<8x8xf32>
    %293 = tpu.matmul %292, %277, %cst_119 {dimension_numbers = #tpu.dot_dimension_numbers<[1], [0], [0], [1], [0, 0, 1, 1], [], []>} : vector<8x8xf32>, vector<8x8xf32>, vector<8x8xf32> -> vector<8x8xf32>
    %294 = vector.extract_strided_slice %229 {offsets = [16, 0], sizes = [8, 32], strides = [1, 1]} : vector<32x32xf32> to vector<8x32xf32>
    %cst_120 = arith.constant dense<0.000000e+00> : vector<8x32xf32>
    %295 = tpu.matmul %293, %294, %cst_120 {dimension_numbers = #tpu.dot_dimension_numbers<[1], [0], [0], [1], [0, 0, 1, 1], [], []>} : vector<8x8xf32>, vector<8x32xf32>, vector<8x32xf32> -> vector<8x32xf32>
    %296 = arith.addf %274, %295 : vector<8x32xf32>
    %297 = vector.extract_strided_slice %225 {offsets = [0, 24], sizes = [8, 8], strides = [1, 1]} : vector<8x32xf32> to vector<8x8xf32>
    %298 = vector.extract_strided_slice %226 {offsets = [0, 24], sizes = [8, 8], strides = [1, 1]} : vector<8x32xf32> to vector<8x8xf32>
    %299 = vector.extract_strided_slice %227 {offsets = [0, 24], sizes = [8, 8], strides = [1, 1]} : vector<8x32xf32> to vector<8x8xf32>
    "tpu.trace_start"() <{level = 10 : i32, message = "qd,kd->qk"}> : () -> ()
    %cst_121 = arith.constant dense<0.000000e+00> : vector<8x8xf32>
    %300 = tpu.matmul %297, %298, %cst_121 {dimension_numbers = #tpu.dot_dimension_numbers<[1], [1], [0], [0], [0, 0, 1, 0], [], []>} : vector<8x8xf32>, vector<8x8xf32>, vector<8x8xf32> -> vector<8x8xf32>
    "tpu.trace_stop"() : () -> ()
    %cst_122 = arith.constant 0.353553385 : f32
    %301 = vector.broadcast %cst_122 : f32 to vector<8x8xf32>
    %302 = arith.mulf %300, %301 : vector<8x8xf32>
    %303 = vector.broadcast %31 : vector<1x8xf32> to vector<8x8xf32>
    %304 = arith.addf %302, %303 : vector<8x8xf32>
    %cst_123 = arith.constant dense<0xFF800000> : vector<8xf32>
    %305 = vector.multi_reduction <maximumf>, %304, %cst_123 [1] : vector<8x8xf32> to vector<8xf32>
    %306 = vector.shape_cast %305 : vector<8xf32> to vector<8x1xf32>
    %307 = vector.broadcast %306 : vector<8x1xf32> to vector<8x8xf32>
    %308 = arith.subf %304, %307 : vector<8x8xf32>
    %309 = math.exp %308 : vector<8x8xf32>
    %cst_124 = arith.constant dense<0.000000e+00> : vector<8xf32>
    %310 = vector.multi_reduction <add>, %309, %cst_124 [1] : vector<8x8xf32> to vector<8xf32>
    %311 = vector.shape_cast %310 : vector<8xf32> to vector<8x1xf32>
    %312 = tpu.reciprocal %311 {approx = true} : vector<8x1xf32> -> vector<8x1xf32>
    %313 = vector.broadcast %312 : vector<8x1xf32> to vector<8x8xf32>
    %314 = arith.mulf %309, %313 : vector<8x8xf32>
    %cst_125 = arith.constant dense<0.000000e+00> : vector<8x8xf32>
    %315 = tpu.matmul %314, %299, %cst_125 {dimension_numbers = #tpu.dot_dimension_numbers<[1], [0], [0], [1], [0, 0, 1, 1], [], []>} : vector<8x8xf32>, vector<8x8xf32>, vector<8x8xf32> -> vector<8x8xf32>
    %316 = vector.extract_strided_slice %229 {offsets = [24, 0], sizes = [8, 32], strides = [1, 1]} : vector<32x32xf32> to vector<8x32xf32>
    %cst_126 = arith.constant dense<0.000000e+00> : vector<8x32xf32>
    %317 = tpu.matmul %315, %316, %cst_126 {dimension_numbers = #tpu.dot_dimension_numbers<[1], [0], [0], [1], [0, 0, 1, 1], [], []>} : vector<8x8xf32>, vector<8x32xf32>, vector<8x32xf32> -> vector<8x32xf32>
    %318 = arith.addf %296, %317 : vector<8x32xf32>
    %c1_127 = arith.constant 1 : index
    %c0_128 = arith.constant 0 : index
    %c0_129 = arith.constant 0 : index
    %319 = vector.load %arg8[%c1_127, %c0_128, %c0_129] : memref<2x1x32xf32, #tpu.memory_space<vmem>>, vector<1x1x32xf32>
    %320 = vector.shape_cast %319 : vector<1x1x32xf32> to vector<1x32xf32>
    %321 = vector.broadcast %320 : vector<1x32xf32> to vector<8x32xf32>
    %322 = arith.addf %318, %321 : vector<8x32xf32>
    %323 = arith.addf %322, %217 : vector<8x32xf32>
    %c1_130 = arith.constant 1 : index
    %c0_131 = arith.constant 0 : index
    %c0_132 = arith.constant 0 : index
    %324 = vector.load %arg9[%c1_130, %c0_131, %c0_132] : memref<2x1x32xf32, #tpu.memory_space<vmem>>, vector<1x1x32xf32>
    %325 = vector.shape_cast %324 : vector<1x1x32xf32> to vector<1x32xf32>
    %c1_133 = arith.constant 1 : index
    %c0_134 = arith.constant 0 : index
    %c0_135 = arith.constant 0 : index
    %326 = vector.load %arg10[%c1_133, %c0_134, %c0_135] : memref<2x1x32xf32, #tpu.memory_space<vmem>>, vector<1x1x32xf32>
    %327 = vector.shape_cast %326 : vector<1x1x32xf32> to vector<1x32xf32>
    %cst_136 = arith.constant dense<0.000000e+00> : vector<8xf32>
    %328 = vector.multi_reduction <add>, %323, %cst_136 [1] : vector<8x32xf32> to vector<8xf32>
    %329 = vector.shape_cast %328 : vector<8xf32> to vector<8x1xf32>
    %cst_137 = arith.constant 3.200000e+01 : f32
    %330 = vector.broadcast %cst_137 : f32 to vector<8x1xf32>
    %331 = arith.divf %329, %330 : vector<8x1xf32>
    %332 = vector.broadcast %331 : vector<8x1xf32> to vector<8x32xf32>
    %333 = arith.subf %323, %332 : vector<8x32xf32>
    %334 = arith.mulf %333, %333 : vector<8x32xf32>
    %cst_138 = arith.constant dense<0.000000e+00> : vector<8xf32>
    %335 = vector.multi_reduction <add>, %334, %cst_138 [1] : vector<8x32xf32> to vector<8xf32>
    %336 = vector.shape_cast %335 : vector<8xf32> to vector<8x1xf32>
    %cst_139 = arith.constant 3.200000e+01 : f32
    %337 = vector.broadcast %cst_139 : f32 to vector<8x1xf32>
    %338 = arith.divf %336, %337 : vector<8x1xf32>
    %339 = vector.broadcast %331 : vector<8x1xf32> to vector<8x32xf32>
    %340 = arith.subf %323, %339 : vector<8x32xf32>
    %cst_140 = arith.constant 9.99999996E-13 : f32
    %341 = vector.broadcast %cst_140 : f32 to vector<8x1xf32>
    %342 = arith.addf %338, %341 : vector<8x1xf32>
    %343 = math.rsqrt %342 : vector<8x1xf32>
    %344 = vector.broadcast %343 : vector<8x1xf32> to vector<8x32xf32>
    %345 = arith.mulf %340, %344 : vector<8x32xf32>
    %346 = vector.broadcast %325 : vector<1x32xf32> to vector<8x32xf32>
    %347 = arith.mulf %345, %346 : vector<8x32xf32>
    %348 = vector.broadcast %327 : vector<1x32xf32> to vector<8x32xf32>
    %349 = arith.addf %347, %348 : vector<8x32xf32>
    %c1_141 = arith.constant 1 : index
    %c0_142 = arith.constant 0 : index
    %c0_143 = arith.constant 0 : index
    %350 = vector.load %arg11[%c1_141, %c0_142, %c0_143] : memref<2x32x64xf32, #tpu.memory_space<vmem>>, vector<1x32x64xf32>
    %351 = vector.shape_cast %350 : vector<1x32x64xf32> to vector<32x64xf32>
    %cst_144 = arith.constant dense<0.000000e+00> : vector<8x64xf32>
    %352 = tpu.matmul %349, %351, %cst_144 {dimension_numbers = #tpu.dot_dimension_numbers<[1], [0], [0], [1], [0, 0, 1, 1], [], []>} : vector<8x32xf32>, vector<32x64xf32>, vector<8x64xf32> -> vector<8x64xf32>
    %c1_145 = arith.constant 1 : index
    %c0_146 = arith.constant 0 : index
    %c0_147 = arith.constant 0 : index
    %353 = vector.load %arg12[%c1_145, %c0_146, %c0_147] : memref<2x1x64xf32, #tpu.memory_space<vmem>>, vector<1x1x64xf32>
    %354 = vector.shape_cast %353 : vector<1x1x64xf32> to vector<1x64xf32>
    %355 = vector.broadcast %354 : vector<1x64xf32> to vector<8x64xf32>
    %356 = arith.addf %352, %355 : vector<8x64xf32>
    %cst_148 = arith.constant 5.000000e-01 : f32
    %357 = vector.broadcast %cst_148 : f32 to vector<8x64xf32>
    %358 = arith.mulf %357, %356 : vector<8x64xf32>
    %cst_149 = arith.constant 4.471500e-02 : f32
    %359 = vector.broadcast %cst_149 : f32 to vector<8x64xf32>
    %360 = arith.mulf %359, %356 : vector<8x64xf32>
    %361 = arith.mulf %360, %356 : vector<8x64xf32>
    %362 = arith.mulf %361, %356 : vector<8x64xf32>
    %363 = arith.addf %356, %362 : vector<8x64xf32>
    %cst_150 = arith.constant 0.797884583 : f32
    %364 = vector.broadcast %cst_150 : f32 to vector<8x64xf32>
    %365 = arith.mulf %364, %363 : vector<8x64xf32>
    %366 = math.tanh %365 : vector<8x64xf32>
    %cst_151 = arith.constant 1.000000e+00 : f32
    %367 = vector.broadcast %cst_151 : f32 to vector<8x64xf32>
    %368 = arith.addf %367, %366 : vector<8x64xf32>
    %369 = arith.mulf %358, %368 : vector<8x64xf32>
    %c1_152 = arith.constant 1 : index
    %c0_153 = arith.constant 0 : index
    %c0_154 = arith.constant 0 : index
    %370 = vector.load %arg13[%c1_152, %c0_153, %c0_154] : memref<2x64x32xf32, #tpu.memory_space<vmem>>, vector<1x64x32xf32>
    %371 = vector.shape_cast %370 : vector<1x64x32xf32> to vector<64x32xf32>
    %cst_155 = arith.constant dense<0.000000e+00> : vector<8x32xf32>
    %372 = tpu.matmul %369, %371, %cst_155 {dimension_numbers = #tpu.dot_dimension_numbers<[1], [0], [0], [1], [0, 0, 1, 1], [], []>} : vector<8x64xf32>, vector<64x32xf32>, vector<8x32xf32> -> vector<8x32xf32>
    %c1_156 = arith.constant 1 : index
    %c0_157 = arith.constant 0 : index
    %c0_158 = arith.constant 0 : index
    %373 = vector.load %arg14[%c1_156, %c0_157, %c0_158] : memref<2x1x32xf32, #tpu.memory_space<vmem>>, vector<1x1x32xf32>
    %374 = vector.shape_cast %373 : vector<1x1x32xf32> to vector<1x32xf32>
    %375 = vector.broadcast %374 : vector<1x32xf32> to vector<8x32xf32>
    %376 = arith.addf %372, %375 : vector<8x32xf32>
    %377 = arith.addf %376, %349 : vector<8x32xf32>
    %c1_159 = arith.constant 1 : index
    %c0_160 = arith.constant 0 : index
    %c0_161 = arith.constant 0 : index
    %378 = vector.load %arg15[%c1_159, %c0_160, %c0_161] : memref<2x1x32xf32, #tpu.memory_space<vmem>>, vector<1x1x32xf32>
    %379 = vector.shape_cast %378 : vector<1x1x32xf32> to vector<1x32xf32>
    %c1_162 = arith.constant 1 : index
    %c0_163 = arith.constant 0 : index
    %c0_164 = arith.constant 0 : index
    %380 = vector.load %arg16[%c1_162, %c0_163, %c0_164] : memref<2x1x32xf32, #tpu.memory_space<vmem>>, vector<1x1x32xf32>
    %381 = vector.shape_cast %380 : vector<1x1x32xf32> to vector<1x32xf32>
    %cst_165 = arith.constant dense<0.000000e+00> : vector<8xf32>
    %382 = vector.multi_reduction <add>, %377, %cst_165 [1] : vector<8x32xf32> to vector<8xf32>
    %383 = vector.shape_cast %382 : vector<8xf32> to vector<8x1xf32>
    %cst_166 = arith.constant 3.200000e+01 : f32
    %384 = vector.broadcast %cst_166 : f32 to vector<8x1xf32>
    %385 = arith.divf %383, %384 : vector<8x1xf32>
    %386 = vector.broadcast %385 : vector<8x1xf32> to vector<8x32xf32>
    %387 = arith.subf %377, %386 : vector<8x32xf32>
    %388 = arith.mulf %387, %387 : vector<8x32xf32>
    %cst_167 = arith.constant dense<0.000000e+00> : vector<8xf32>
    %389 = vector.multi_reduction <add>, %388, %cst_167 [1] : vector<8x32xf32> to vector<8xf32>
    %390 = vector.shape_cast %389 : vector<8xf32> to vector<8x1xf32>
    %cst_168 = arith.constant 3.200000e+01 : f32
    %391 = vector.broadcast %cst_168 : f32 to vector<8x1xf32>
    %392 = arith.divf %390, %391 : vector<8x1xf32>
    %393 = vector.broadcast %385 : vector<8x1xf32> to vector<8x32xf32>
    %394 = arith.subf %377, %393 : vector<8x32xf32>
    %cst_169 = arith.constant 9.99999996E-13 : f32
    %395 = vector.broadcast %cst_169 : f32 to vector<8x1xf32>
    %396 = arith.addf %392, %395 : vector<8x1xf32>
    %397 = math.rsqrt %396 : vector<8x1xf32>
    %398 = vector.broadcast %397 : vector<8x1xf32> to vector<8x32xf32>
    %399 = arith.mulf %394, %398 : vector<8x32xf32>
    %400 = vector.broadcast %379 : vector<1x32xf32> to vector<8x32xf32>
    %401 = arith.mulf %399, %400 : vector<8x32xf32>
    %402 = vector.broadcast %381 : vector<1x32xf32> to vector<8x32xf32>
    %403 = arith.addf %401, %402 : vector<8x32xf32>
    %404 = vector.extract_strided_slice %403 {offsets = [0, 0], sizes = [1, 32], strides = [1, 1]} : vector<8x32xf32> to vector<1x32xf32>
    %c0_170 = arith.constant 0 : index
    %c0_171 = arith.constant 0 : index
    %405 = vector.load %arg17[%c0_170, %c0_171] : memref<32x16xf32, #tpu.memory_space<vmem>>, vector<32x16xf32>
    %cst_172 = arith.constant dense<0.000000e+00> : vector<1x16xf32>
    %406 = tpu.matmul %404, %405, %cst_172 {dimension_numbers = #tpu.dot_dimension_numbers<[1], [0], [0], [1], [0, 0, 1, 1], [], []>} : vector<1x32xf32>, vector<32x16xf32>, vector<1x16xf32> -> vector<1x16xf32>
    %c0_173 = arith.constant 0 : index
    %c0_174 = arith.constant 0 : index
    %c0_175 = arith.constant 0 : index
    %407 = vector.load %arg18[%c0_173, %c0_174, %c0_175] : memref<1x1x16xf32, #tpu.memory_space<vmem>>, vector<1x1x16xf32>
    %408 = vector.shape_cast %407 : vector<1x1x16xf32> to vector<1x16xf32>
    %409 = vector.shape_cast %406 : vector<1x16xf32> to vector<1x1x16xf32>
    tpu.vector_store %arg18[%c0_173, %c0_174, %c0_175], %409 {strides = array<i32>} : memref<1x1x16xf32, #tpu.memory_space<vmem>>, vector<1x1x16xf32>,
    return
  }
  func.func @transform_0(%arg0: i32) -> (i32, i32, i32) {
    %c0_i32 = arith.constant 0 : i32
    %c0_i32_0 = arith.constant 0 : i32
    %c0_i32_1 = arith.constant 0 : i32
    return %arg0, %c0_i32, %c0_i32_0 : i32, i32, i32
  }
  func.func @transform_1(%arg0: i32) -> (i32, i32, i32) {
    %c0_i32 = arith.constant 0 : i32
    %c0_i32_0 = arith.constant 0 : i32
    %c0_i32_1 = arith.constant 0 : i32
    return %arg0, %c0_i32, %c0_i32_0 : i32, i32, i32
  }
  func.func @transform_2(%arg0: i32) -> (i32, i32) {
    %c0_i32 = arith.constant 0 : i32
    %c0_i32_0 = arith.constant 0 : i32
    %c0_i32_1 = arith.constant 0 : i32
    return %c0_i32, %c0_i32_0 : i32, i32
  }
  func.func @transform_3(%arg0: i32) -> (i32, i32) {
    %c0_i32 = arith.constant 0 : i32
    %c0_i32_0 = arith.constant 0 : i32
    %c0_i32_1 = arith.constant 0 : i32
    return %c0_i32, %c0_i32_0 : i32, i32
  }
  func.func @transform_4(%arg0: i32) -> (i32, i32, i32) {
    %c0_i32 = arith.constant 0 : i32
    %c0_i32_0 = arith.constant 0 : i32
    %c0_i32_1 = arith.constant 0 : i32
    %c0_i32_2 = arith.constant 0 : i32
    return %c0_i32, %c0_i32_0, %c0_i32_1 : i32, i32, i32
  }
  func.func @transform_5(%arg0: i32) -> (i32, i32, i32) {
    %c0_i32 = arith.constant 0 : i32
    %c0_i32_0 = arith.constant 0 : i32
    %c0_i32_1 = arith.constant 0 : i32
    %c0_i32_2 = arith.constant 0 : i32
    return %c0_i32, %c0_i32_0, %c0_i32_1 : i32, i32, i32
  }
  func.func @transform_6(%arg0: i32) -> (i32, i32, i32) {
    %c0_i32 = arith.constant 0 : i32
    %c0_i32_0 = arith.constant 0 : i32
    %c0_i32_1 = arith.constant 0 : i32
    %c0_i32_2 = arith.constant 0 : i32
    return %c0_i32, %c0_i32_0, %c0_i32_1 : i32, i32, i32
  }
  func.func @transform_7(%arg0: i32) -> (i32, i32, i32) {
    %c0_i32 = arith.constant 0 : i32
    %c0_i32_0 = arith.constant 0 : i32
    %c0_i32_1 = arith.constant 0 : i32
    %c0_i32_2 = arith.constant 0 : i32
    return %c0_i32, %c0_i32_0, %c0_i32_1 : i32, i32, i32
  }
  func.func @transform_8(%arg0: i32) -> (i32, i32, i32) {
    %c0_i32 = arith.constant 0 : i32
    %c0_i32_0 = arith.constant 0 : i32
    %c0_i32_1 = arith.constant 0 : i32
    %c0_i32_2 = arith.constant 0 : i32
    return %c0_i32, %c0_i32_0, %c0_i32_1 : i32, i32, i32
  }
  func.func @transform_9(%arg0: i32) -> (i32, i32, i32) {
    %c0_i32 = arith.constant 0 : i32
    %c0_i32_0 = arith.constant 0 : i32
    %c0_i32_1 = arith.constant 0 : i32
    %c0_i32_2 = arith.constant 0 : i32
    return %c0_i32, %c0_i32_0, %c0_i32_1 : i32, i32, i32
  }
  func.func @transform_10(%arg0: i32) -> (i32, i32, i32) {
    %c0_i32 = arith.constant 0 : i32
    %c0_i32_0 = arith.constant 0 : i32
    %c0_i32_1 = arith.constant 0 : i32
    %c0_i32_2 = arith.constant 0 : i32
    return %c0_i32, %c0_i32_0, %c0_i32_1 : i32, i32, i32
  }
  func.func @transform_11(%arg0: i32) -> (i32, i32, i32) {
    %c0_i32 = arith.constant 0 : i32
    %c0_i32_0 = arith.constant 0 : i32
    %c0_i32_1 = arith.constant 0 : i32
    %c0_i32_2 = arith.constant 0 : i32
    return %c0_i32, %c0_i32_0, %c0_i32_1 : i32, i32, i32
  }
  func.func @transform_12(%arg0: i32) -> (i32, i32, i32) {
    %c0_i32 = arith.constant 0 : i32
    %c0_i32_0 = arith.constant 0 : i32
    %c0_i32_1 = arith.constant 0 : i32
    %c0_i32_2 = arith.constant 0 : i32
    return %c0_i32, %c0_i32_0, %c0_i32_1 : i32, i32, i32
  }
  func.func @transform_13(%arg0: i32) -> (i32, i32, i32) {
    %c0_i32 = arith.constant 0 : i32
    %c0_i32_0 = arith.constant 0 : i32
    %c0_i32_1 = arith.constant 0 : i32
    %c0_i32_2 = arith.constant 0 : i32
    return %c0_i32, %c0_i32_0, %c0_i32_1 : i32, i32, i32
  }
  func.func @transform_14(%arg0: i32) -> (i32, i32, i32) {
    %c0_i32 = arith.constant 0 : i32
    %c0_i32_0 = arith.constant 0 : i32
    %c0_i32_1 = arith.constant 0 : i32
    %c0_i32_2 = arith.constant 0 : i32
    return %c0_i32, %c0_i32_0, %c0_i32_1 : i32, i32, i32
  }
  func.func @transform_15(%arg0: i32) -> (i32, i32, i32) {
    %c0_i32 = arith.constant 0 : i32
    %c0_i32_0 = arith.constant 0 : i32
    %c0_i32_1 = arith.constant 0 : i32
    %c0_i32_2 = arith.constant 0 : i32
    return %c0_i32, %c0_i32_0, %c0_i32_1 : i32, i32, i32
  }
  func.func @transform_16(%arg0: i32) -> (i32, i32) {
    %c0_i32 = arith.constant 0 : i32
    %c0_i32_0 = arith.constant 0 : i32
    %c0_i32_1 = arith.constant 0 : i32
    return %c0_i32, %c0_i32_0 : i32, i32
  }
  func.func @transform_17(%arg0: i32) -> (i32, i32, i32) {
    %c0_i32 = arith.constant 0 : i32
    %c0_i32_0 = arith.constant 0 : i32
    %c0_i32_1 = arith.constant 0 : i32
    return %arg0, %c0_i32, %c0_i32_0 : i32, i32, i32
  }
}

</mosaic_0001>

<llo_original>
// kernel: _lambda_.1
$region0: #{_lambda_.1}
  #allocation0 [shape = 'u32[]', space=smem, size = 0x4, offset = 0x4, fixed_abs, tag = 'smem constant byte address 0x4 - core index']
  #allocation1 [shape = 'u32[144,128]{1,0:T(1,128)}', space=vmem, size = 0x12000, scoped, tag = 'internal scratch']
  %s0 = inlined_call_operand.vmem [shape: f32[2,8,32], index: 0, kind: input, shape index: {}]
  %s1 = inlined_call_operand.vmem [shape: f32[2,1,8], index: 1, kind: input, shape index: {}]
  %s2 = inlined_call_operand.vmem [shape: f32[1,32], index: 2, kind: input, shape index: {}]
  %s3 = inlined_call_operand.vmem [shape: f32[1,32], index: 3, kind: input, shape index: {}]
  %s4 = inlined_call_operand.vmem [shape: f32[2,32,96], index: 4, kind: input, shape index: {}]
  %s5 = inlined_call_operand.vmem [shape: f32[2,1,96], index: 5, kind: input, shape index: {}]
  %s6 = inlined_call_operand.vmem [shape: f32[2,32,32], index: 6, kind: input, shape index: {}]
  %s7 = inlined_call_operand.vmem [shape: f32[2,1,32], index: 7, kind: input, shape index: {}, may-alias: {7,9,13,15}]
  %s8 = inlined_call_operand.vmem [shape: f32[2,1,32], index: 8, kind: input, shape index: {}, may-alias: {8,14}]
  %s9 = inlined_call_operand.vmem [shape: f32[2,1,32], index: 9, kind: input, shape index: {}, may-alias: {7,9,13,15}]
  %s10 = inlined_call_operand.hbm [shape: f32[2,32,64], index: 10, kind: input, shape index: {}]
  %s11 = inlined_call_operand.vmem [shape: f32[2,1,64], index: 11, kind: input, shape index: {}]
  %s12 = inlined_call_operand.vmem [shape: f32[2,64,32], index: 12, kind: input, shape index: {}]
  %s13 = inlined_call_operand.vmem [shape: f32[2,1,32], index: 13, kind: input, shape index: {}, may-alias: {7,9,13,15}]
  %s14 = inlined_call_operand.vmem [shape: f32[2,1,32], index: 14, kind: input, shape index: {}, may-alias: {8,14}]
  %s15 = inlined_call_operand.vmem [shape: f32[2,1,32], index: 15, kind: input, shape index: {}, may-alias: {7,9,13,15}]
  %s16 = inlined_call_operand.hbm [shape: f32[32,16], index: 16, kind: input, shape index: {}]
  %s17 = inlined_call_operand.hbm [shape: f32[2,1,16], index: 17, kind: output, shape index: {}]
  %s18 = sld [smem:[#allocation0]]
  $region109: #{_lambda_.1} parent=0
    _
  %s20 = ssub.s32 1, %s18
  %s21 = scalar_select 0, %s20, %s18
  $region1: #{_lambda_.1} parent=0
    #allocation2 [shape = 'u8[32768]{0}', space=vmem, size = 0x8000, scoped, tag = 'input window, operand 10, single buffered']
    #allocation3 [shape = 's32[2]{0}', space=sflag, size = 0x8, scoped, tag = 'scoped memory for _lambda_.1']
    #allocation4 [shape = 's32[2]{0}', space=sflag, size = 0x8, scoped, tag = 'scoped memory for _lambda_.1']
    #allocation5 [shape = 'u8[16384]{0}', space=vmem, size = 0x4000, scoped, tag = 'input window, operand 16, single buffered']
    #allocation6 [shape = 's32[1]{0}', space=sflag, size = 0x4, scoped, tag = 'scoped memory for _lambda_.1']
    #allocation7 [shape = 'u8[1024]{0}', space=vmem, size = 0x400, scoped, tag = 'output window, operand 0']
    %22 = vsyncpa [#allocation3], 0
    %23 = vsyncpa [#allocation6], 0
    %24 = vsyncpa [#allocation4], 0
    %s25 = scalar_lea.sflag [#allocation4], 1
    %26 = vsyncpa %s25, 0
    loop: start=0, step=1, limit=4
    $region2: #{_lambda_.1} parent=1 // loop_pre_header
      _
    $region3: #{_lambda_.1} parent=1 // loop_header
      %s28 = sphi 0, %s32
      %p29 = scmp.ge.s32.totalorder %s28, 4
      %s38 = sphi 0, %s40
      %s41 = sphi 0, %s38
      %s42 = sphi 0, %s41
      %s58 = sphi 0, %s42
      %s64 = sphi 0, %s66
      %s67 = sphi 0, %s64
      %s68 = sphi 0, %s67
      %s84 = sphi 0, %s68
      %s88 = sphi 0, %s88
      %s90 = sphi 0, %s88
      %s91 = sphi 0, %s90
      %s105 = sphi 0, %s91
      %s109 = sphi 0, %s109
      %s111 = sphi 0, %s109
      %s112 = sphi 0, %s111
      %s126 = sphi 0, %s112
      %s130 = sphi 0, %s130
      %s132 = sphi 0, %s130
      %s133 = sphi 0, %s132
      %s147 = sphi 0, %s133
      %s151 = sphi 0, %s151
      %s153 = sphi 0, %s151
      %s154 = sphi 0, %s153
      %s168 = sphi 0, %s154
      %s172 = sphi 0, %s172
      %s174 = sphi 0, %s172
      %s175 = sphi 0, %s174
      %s189 = sphi 0, %s175
      %s193 = sphi 0, %s193
      %s195 = sphi 0, %s193
      %s196 = sphi 0, %s195
      %s210 = sphi 0, %s196
      %s214 = sphi 0, %s214
      %s216 = sphi 0, %s214
      %s217 = sphi 0, %s216
      %s231 = sphi 0, %s217
      %s235 = sphi 0, %s235
      %s237 = sphi 0, %s235
      %s238 = sphi 0, %s237
      %s252 = sphi 0, %s238
      %s256 = sphi 0, %s256
      %s258 = sphi 0, %s256
      %s259 = sphi 0, %s258
      %s273 = sphi 0, %s259
      %s277 = sphi 0, %s277
      %s279 = sphi 0, %s277
      %s280 = sphi 0, %s279
      %s294 = sphi 0, %s280
      %s298 = sphi 0, %s298
      %s300 = sphi 0, %s298
      %s301 = sphi 0, %s300
      %s315 = sphi 0, %s301
      %s319 = sphi 0, %s319
      %s321 = sphi 0, %s319
      %s322 = sphi 0, %s321
      %s336 = sphi 0, %s322
      %s340 = sphi 0, %s340
      %s342 = sphi 0, %s340
      %s343 = sphi 0, %s342
      %s357 = sphi 0, %s343
      %s361 = sphi 0, %s361
      %s363 = sphi 0, %s361
      %s364 = sphi 0, %s363
      %s378 = sphi 0, %s364
      %s382 = sphi 0, %s382
      %s384 = sphi 0, %s382
      %s385 = sphi 0, %s384
      %s399 = sphi 0, %s385
      %s405 = sphi 0, %s407
      %s408 = sphi 0, %s405
      %s409 = sphi 0, %s408
      %s425 = sphi 0, %s409
    $region4: #{_lambda_.1} parent=1 // loop_header_branch
      %31 = sbr.rel (%p29) target = $region8
    $region5: #{_lambda_.1} parent=1 // loop_body
      %s33 = ssub.s32 %s28, 1
      %s34 = ssub.s32 %s28, 2
      %s35 = sadd.s32 %s28, 1
      %s36 = ssub.s32 %s28, %s35
      %p37 = scmp.eq.s32.totalorder %s36, 0
      %s39 = sadd.s32 %s38, 1
      %s40 = scalar_select %p37, %s38, %s39
      %p43 = pneg %p37
      %p44 = scmp.eq.s32.totalorder %s28, 1
      %p45 = por %p43, %p44
      %p46 = scmp.ne.s32.totalorder %s38, %s41
      %p47 = scmp.eq.s32.totalorder %s28, 0
      %p48 = por %p46, %p47
      %p49 = scmp.ne.s32.totalorder %s38, %s41
      %p50 = scmp.eq.s32.totalorder %s33, 1
      %p51 = por %p49, %p50
      %p52 = scmp.ne.s32.totalorder %s41, %s42
      %p53 = scmp.eq.s32.totalorder %s33, 0
      %p54 = por %p52, %p53
      %p55 = scmp.ne.s32.totalorder %s41, %s42
      %p56 = scmp.eq.s32.totalorder %s34, 1
      %p57 = por %p55, %p56
      %p59 = scmp.ne.s32.totalorder %s42, %s58
      %p60 = scmp.eq.s32.totalorder %s34, 0
      %p61 = por %p59, %p60
      %s62 = ssub.s32 %s28, %s35
      %p63 = scmp.eq.s32.totalorder %s62, 0
      %s65 = sadd.s32 %s64, 1
      %s66 = scalar_select %p63, %s64, %s65
      %p69 = pneg %p63
      %p70 = scmp.eq.s32.totalorder %s28, 1
      %p71 = por %p69, %p70
      %p72 = scmp.ne.s32.totalorder %s64, %s67
      %p73 = scmp.eq.s32.totalorder %s28, 0
      %p74 = por %p72, %p73
      %p75 = scmp.ne.s32.totalorder %s64, %s67
      %p76 = scmp.eq.s32.totalorder %s33, 1
      %p77 = por %p75, %p76
      %p78 = scmp.ne.s32.totalorder %s67, %s68
      %p79 = scmp.eq.s32.totalorder %s33, 0
      %p80 = por %p78, %p79
      %p81 = scmp.ne.s32.totalorder %s67, %s68
      %p82 = scmp.eq.s32.totalorder %s34, 1
      %p83 = por %p81, %p82
      %p85 = scmp.ne.s32.totalorder %s68, %s84
      %p86 = scmp.eq.s32.totalorder %s34, 0
      %p87 = por %p85, %p86
      %s89 = sadd.s32 %s88, 1
      %p92 = scmp.eq.s32.totalorder %s28, 1
      %p93 = scmp.ne.s32.totalorder %s88, %s90
      %p94 = scmp.eq.s32.totalorder %s28, 0
      %p95 = por %p93, %p94
      %p96 = scmp.ne.s32.totalorder %s88, %s90
      %p97 = scmp.eq.s32.totalorder %s33, 1
      %p98 = por %p96, %p97
      %p99 = scmp.ne.s32.totalorder %s90, %s91
      %p100 = scmp.eq.s32.totalorder %s33, 0
      %p101 = por %p99, %p100
      %p102 = scmp.ne.s32.totalorder %s90, %s91
      %p103 = scmp.eq.s32.totalorder %s34, 1
      %p104 = por %p102, %p103
      %p106 = scmp.ne.s32.totalorder %s91, %s105
      %p107 = scmp.eq.s32.totalorder %s34, 0
      %p108 = por %p106, %p107
      %s110 = sadd.s32 %s109, 1
      %p113 = scmp.eq.s32.totalorder %s28, 1
      %p114 = scmp.ne.s32.totalorder %s109, %s111
      %p115 = scmp.eq.s32.totalorder %s28, 0
      %p116 = por %p114, %p115
      %p117 = scmp.ne.s32.totalorder %s109, %s111
      %p118 = scmp.eq.s32.totalorder %s33, 1
      %p119 = por %p117, %p118
      %p120 = scmp.ne.s32.totalorder %s111, %s112
      %p121 = scmp.eq.s32.totalorder %s33, 0
      %p122 = por %p120, %p121
      %p123 = scmp.ne.s32.totalorder %s111, %s112
      %p124 = scmp.eq.s32.totalorder %s34, 1
      %p125 = por %p123, %p124
      %p127 = scmp.ne.s32.totalorder %s112, %s126
      %p128 = scmp.eq.s32.totalorder %s34, 0
      %p129 = por %p127, %p128
      %s131 = sadd.s32 %s130, 1
      %p134 = scmp.eq.s32.totalorder %s28, 1
      %p135 = scmp.ne.s32.totalorder %s130, %s132
      %p136 = scmp.eq.s32.totalorder %s28, 0
      %p137 = por %p135, %p136
      %p138 = scmp.ne.s32.totalorder %s130, %s132
      %p139 = scmp.eq.s32.totalorder %s33, 1
      %p140 = por %p138, %p139
      %p141 = scmp.ne.s32.totalorder %s132, %s133
      %p142 = scmp.eq.s32.totalorder %s33, 0
      %p143 = por %p141, %p142
      %p144 = scmp.ne.s32.totalorder %s132, %s133
      %p145 = scmp.eq.s32.totalorder %s34, 1
      %p146 = por %p144, %p145
      %p148 = scmp.ne.s32.totalorder %s133, %s147
      %p149 = scmp.eq.s32.totalorder %s34, 0
      %p150 = por %p148, %p149
      %s152 = sadd.s32 %s151, 1
      %p155 = scmp.eq.s32.totalorder %s28, 1
      %p156 = scmp.ne.s32.totalorder %s151, %s153
      %p157 = scmp.eq.s32.totalorder %s28, 0
      %p158 = por %p156, %p157
      %p159 = scmp.ne.s32.totalorder %s151, %s153
      %p160 = scmp.eq.s32.totalorder %s33, 1
      %p161 = por %p159, %p160
      %p162 = scmp.ne.s32.totalorder %s153, %s154
      %p163 = scmp.eq.s32.totalorder %s33, 0
      %p164 = por %p162, %p163
      %p165 = scmp.ne.s32.totalorder %s153, %s154
      %p166 = scmp.eq.s32.totalorder %s34, 1
      %p167 = por %p165, %p166
      %p169 = scmp.ne.s32.totalorder %s154, %s168
      %p170 = scmp.eq.s32.totalorder %s34, 0
      %p171 = por %p169, %p170
      %s173 = sadd.s32 %s172, 1
      %p176 = scmp.eq.s32.totalorder %s28, 1
      %p177 = scmp.ne.s32.totalorder %s172, %s174
      %p178 = scmp.eq.s32.totalorder %s28, 0
      %p179 = por %p177, %p178
      %p180 = scmp.ne.s32.totalorder %s172, %s174
      %p181 = scmp.eq.s32.totalorder %s33, 1
      %p182 = por %p180, %p181
      %p183 = scmp.ne.s32.totalorder %s174, %s175
      %p184 = scmp.eq.s32.totalorder %s33, 0
      %p185 = por %p183, %p184
      %p186 = scmp.ne.s32.totalorder %s174, %s175
      %p187 = scmp.eq.s32.totalorder %s34, 1
      %p188 = por %p186, %p187
      %p190 = scmp.ne.s32.totalorder %s175, %s189
      %p191 = scmp.eq.s32.totalorder %s34, 0
      %p192 = por %p190, %p191
      %s194 = sadd.s32 %s193, 1
      %p197 = scmp.eq.s32.totalorder %s28, 1
      %p198 = scmp.ne.s32.totalorder %s193, %s195
      %p199 = scmp.eq.s32.totalorder %s28, 0
      %p200 = por %p198, %p199
      %p201 = scmp.ne.s32.totalorder %s193, %s195
      %p202 = scmp.eq.s32.totalorder %s33, 1
      %p203 = por %p201, %p202
      %p204 = scmp.ne.s32.totalorder %s195, %s196
      %p205 = scmp.eq.s32.totalorder %s33, 0
      %p206 = por %p204, %p205
      %p207 = scmp.ne.s32.totalorder %s195, %s196
      %p208 = scmp.eq.s32.totalorder %s34, 1
      %p209 = por %p207, %p208
      %p211 = scmp.ne.s32.totalorder %s196, %s210
      %p212 = scmp.eq.s32.totalorder %s34, 0
      %p213 = por %p211, %p212
      %s215 = sadd.s32 %s214, 1
      %p218 = scmp.eq.s32.totalorder %s28, 1
      %p219 = scmp.ne.s32.totalorder %s214, %s216
      %p220 = scmp.eq.s32.totalorder %s28, 0
      %p221 = por %p219, %p220
      %p222 = scmp.ne.s32.totalorder %s214, %s216
      %p223 = scmp.eq.s32.totalorder %s33, 1
      %p224 = por %p222, %p223
      %p225 = scmp.ne.s32.totalorder %s216, %s217
      %p226 = scmp.eq.s32.totalorder %s33, 0
      %p227 = por %p225, %p226
      %p228 = scmp.ne.s32.totalorder %s216, %s217
      %p229 = scmp.eq.s32.totalorder %s34, 1
      %p230 = por %p228, %p229
      %p232 = scmp.ne.s32.totalorder %s217, %s231
      %p233 = scmp.eq.s32.totalorder %s34, 0
      %p234 = por %p232, %p233
      %s236 = sadd.s32 %s235, 1
      %p239 = scmp.eq.s32.totalorder %s28, 1
      %p240 = scmp.ne.s32.totalorder %s235, %s237
      %p241 = scmp.eq.s32.totalorder %s28, 0
      %p242 = por %p240, %p241
      %p243 = scmp.ne.s32.totalorder %s235, %s237
      %p244 = scmp.eq.s32.totalorder %s33, 1
      %p245 = por %p243, %p244
      %p246 = scmp.ne.s32.totalorder %s237, %s238
      %p247 = scmp.eq.s32.totalorder %s33, 0
      %p248 = por %p246, %p247
      %p249 = scmp.ne.s32.totalorder %s237, %s238
      %p250 = scmp.eq.s32.totalorder %s34, 1
      %p251 = por %p249, %p250
      %p253 = scmp.ne.s32.totalorder %s238, %s252
      %p254 = scmp.eq.s32.totalorder %s34, 0
      %p255 = por %p253, %p254
      %s257 = sadd.s32 %s256, 1
      %p260 = scmp.eq.s32.totalorder %s28, 1
      %p261 = scmp.ne.s32.totalorder %s256, %s258
      %p262 = scmp.eq.s32.totalorder %s28, 0
      %p263 = por %p261, %p262
      %p264 = scmp.ne.s32.totalorder %s256, %s258
      %p265 = scmp.eq.s32.totalorder %s33, 1
      %p266 = por %p264, %p265
      %p267 = scmp.ne.s32.totalorder %s258, %s259
      %p268 = scmp.eq.s32.totalorder %s33, 0
      %p269 = por %p267, %p268
      %p270 = scmp.ne.s32.totalorder %s258, %s259
      %p271 = scmp.eq.s32.totalorder %s34, 1
      %p272 = por %p270, %p271
      %p274 = scmp.ne.s32.totalorder %s259, %s273
      %p275 = scmp.eq.s32.totalorder %s34, 0
      %p276 = por %p274, %p275
      %s278 = sadd.s32 %s277, 1
      %p281 = scmp.eq.s32.totalorder %s28, 1
      %p282 = scmp.ne.s32.totalorder %s277, %s279
      %p283 = scmp.eq.s32.totalorder %s28, 0
      %p284 = por %p282, %p283
      %p285 = scmp.ne.s32.totalorder %s277, %s279
      %p286 = scmp.eq.s32.totalorder %s33, 1
      %p287 = por %p285, %p286
      %p288 = scmp.ne.s32.totalorder %s279, %s280
      %p289 = scmp.eq.s32.totalorder %s33, 0
      %p290 = por %p288, %p289
      %p291 = scmp.ne.s32.totalorder %s279, %s280
      %p292 = scmp.eq.s32.totalorder %s34, 1
      %p293 = por %p291, %p292
      %p295 = scmp.ne.s32.totalorder %s280, %s294
      %p296 = scmp.eq.s32.totalorder %s34, 0
      %p297 = por %p295, %p296
      %s299 = sadd.s32 %s298, 1
      %p302 = scmp.eq.s32.totalorder %s28, 1
      %p303 = scmp.ne.s32.totalorder %s298, %s300
      %p304 = scmp.eq.s32.totalorder %s28, 0
      %p305 = por %p303, %p304
      %p306 = scmp.ne.s32.totalorder %s298, %s300
      %p307 = scmp.eq.s32.totalorder %s33, 1
      %p308 = por %p306, %p307
      %p309 = scmp.ne.s32.totalorder %s300, %s301
      %p310 = scmp.eq.s32.totalorder %s33, 0
      %p311 = por %p309, %p310
      %p312 = scmp.ne.s32.totalorder %s300, %s301
      %p313 = scmp.eq.s32.totalorder %s34, 1
      %p314 = por %p312, %p313
      %p316 = scmp.ne.s32.totalorder %s301, %s315
      %p317 = scmp.eq.s32.totalorder %s34, 0
      %p318 = por %p316, %p317
      %s320 = sadd.s32 %s319, 1
      %p323 = scmp.eq.s32.totalorder %s28, 1
      %p324 = scmp.ne.s32.totalorder %s319, %s321
      %p325 = scmp.eq.s32.totalorder %s28, 0
      %p326 = por %p324, %p325
      %p327 = scmp.ne.s32.totalorder %s319, %s321
      %p328 = scmp.eq.s32.totalorder %s33, 1
      %p329 = por %p327, %p328
      %p330 = scmp.ne.s32.totalorder %s321, %s322
      %p331 = scmp.eq.s32.totalorder %s33, 0
      %p332 = por %p330, %p331
      %p333 = scmp.ne.s32.totalorder %s321, %s322
      %p334 = scmp.eq.s32.totalorder %s34, 1
      %p335 = por %p333, %p334
      %p337 = scmp.ne.s32.totalorder %s322, %s336
      %p338 = scmp.eq.s32.totalorder %s34, 0
      %p339 = por %p337, %p338
      %s341 = sadd.s32 %s340, 1
      %p344 = scmp.eq.s32.totalorder %s28, 1
      %p345 = scmp.ne.s32.totalorder %s340, %s342
      %p346 = scmp.eq.s32.totalorder %s28, 0
      %p347 = por %p345, %p346
      %p348 = scmp.ne.s32.totalorder %s340, %s342
      %p349 = scmp.eq.s32.totalorder %s33, 1
      %p350 = por %p348, %p349
      %p351 = scmp.ne.s32.totalorder %s342, %s343
      %p352 = scmp.eq.s32.totalorder %s33, 0
      %p353 = por %p351, %p352
      %p354 = scmp.ne.s32.totalorder %s342, %s343
      %p355 = scmp.eq.s32.totalorder %s34, 1
      %p356 = por %p354, %p355
      %p358 = scmp.ne.s32.totalorder %s343, %s357
      %p359 = scmp.eq.s32.totalorder %s34, 0
      %p360 = por %p358, %p359
      %s362 = sadd.s32 %s361, 1
      %p365 = scmp.eq.s32.totalorder %s28, 1
      %p366 = scmp.ne.s32.totalorder %s361, %s363
      %p367 = scmp.eq.s32.totalorder %s28, 0
      %p368 = por %p366, %p367
      %p369 = scmp.ne.s32.totalorder %s361, %s363
      %p370 = scmp.eq.s32.totalorder %s33, 1
      %p371 = por %p369, %p370
      %p372 = scmp.ne.s32.totalorder %s363, %s364
      %p373 = scmp.eq.s32.totalorder %s33, 0
      %p374 = por %p372, %p373
      %p375 = scmp.ne.s32.totalorder %s363, %s364
      %p376 = scmp.eq.s32.totalorder %s34, 1
      %p377 = por %p375, %p376
      %p379 = scmp.ne.s32.totalorder %s364, %s378
      %p380 = scmp.eq.s32.totalorder %s34, 0
      %p381 = por %p379, %p380
      %s383 = sadd.s32 %s382, 1
      %p386 = scmp.eq.s32.totalorder %s28, 1
      %p387 = scmp.ne.s32.totalorder %s382, %s384
      %p388 = scmp.eq.s32.totalorder %s28, 0
      %p389 = por %p387, %p388
      %p390 = scmp.ne.s32.totalorder %s382, %s384
      %p391 = scmp.eq.s32.totalorder %s33, 1
      %p392 = por %p390, %p391
      %p393 = scmp.ne.s32.totalorder %s384, %s385
      %p394 = scmp.eq.s32.totalorder %s33, 0
      %p395 = por %p393, %p394
      %p396 = scmp.ne.s32.totalorder %s384, %s385
      %p397 = scmp.eq.s32.totalorder %s34, 1
      %p398 = por %p396, %p397
      %p400 = scmp.ne.s32.totalorder %s385, %s399
      %p401 = scmp.eq.s32.totalorder %s34, 0
      %p402 = por %p400, %p401
      %s403 = ssub.s32 %s28, %s35
      %p404 = scmp.eq.s32.totalorder %s403, 0
      %s406 = sadd.s32 %s405, 1
      %s407 = scalar_select %p404, %s405, %s406
      %p410 = pneg %p404
      %p411 = scmp.eq.s32.totalorder %s28, 1
      %p412 = por %p410, %p411
      %p413 = scmp.ne.s32.totalorder %s405, %s408
      %p414 = scmp.eq.s32.totalorder %s28, 0
      %p415 = por %p413, %p414
      %p416 = scmp.ne.s32.totalorder %s405, %s408
      %p417 = scmp.eq.s32.totalorder %s33, 1
      %p418 = por %p416, %p417
      %p419 = scmp.ne.s32.totalorder %s408, %s409
      %p420 = scmp.eq.s32.totalorder %s33, 0
      %p421 = por %p419, %p420
      %p422 = scmp.ne.s32.totalorder %s408, %s409
      %p423 = scmp.eq.s32.totalorder %s34, 1
      %p424 = por %p422, %p423
      %p426 = scmp.ne.s32.totalorder %s409, %s425
      %p427 = scmp.eq.s32.totalorder %s34, 0
      %p428 = por %p426, %p427
      %p429 = scmp.le.s32.totalorder 1, %s28
      %p430 = scmp.lt.s32.totalorder %s28, 3
      %p431 = pnand %p429, %p430
      %p432 = pneg %p431
      // Predicated region
      $region9: #{_lambda_.1} parent=5 // pred_check
        _
      $region10: #{_lambda_.1} parent=5 // pred_check_branch
        %434 = sbr.rel (%p431) target = $region12
      $region11: #{_lambda_.1} parent=5 // pred_region
        %s435 = ssub.s32 %s28, 1
        // Predicated region
        $region13: #{_lambda_.1} parent=11 // pred_check
          %p436 = pneg %p101
        $region14: #{_lambda_.1} parent=11 // pred_check_branch
          %438 = sbr.rel (%p436) target = $region16
        $region15: #{_lambda_.1} parent=11 // pred_region
          _
        $region16: #{_lambda_.1} parent=11 // pred_fallthru
          _
        // Predicated region
        $region17: #{_lambda_.1} parent=11 // pred_check
          %p439 = pneg %p122
        $region18: #{_lambda_.1} parent=11 // pred_check_branch
          %441 = sbr.rel (%p439) target = $region20
        $region19: #{_lambda_.1} parent=11 // pred_region
          _
        $region20: #{_lambda_.1} parent=11 // pred_fallthru
          _
        // Predicated region
        $region21: #{_lambda_.1} parent=11 // pred_check
          %p442 = pneg %p143
        $region22: #{_lambda_.1} parent=11 // pred_check_branch
          %444 = sbr.rel (%p442) target = $region24
        $region23: #{_lambda_.1} parent=11 // pred_region
          _
        $region24: #{_lambda_.1} parent=11 // pred_fallthru
          _
        // Predicated region
        $region25: #{_lambda_.1} parent=11 // pred_check
          %p445 = pneg %p164
        $region26: #{_lambda_.1} parent=11 // pred_check_branch
          %447 = sbr.rel (%p445) target = $region28
        $region27: #{_lambda_.1} parent=11 // pred_region
          _
        $region28: #{_lambda_.1} parent=11 // pred_fallthru
          _
        // Predicated region
        $region29: #{_lambda_.1} parent=11 // pred_check
          %p448 = pneg %p185
        $region30: #{_lambda_.1} parent=11 // pred_check_branch
          %450 = sbr.rel (%p448) target = $region32
        $region31: #{_lambda_.1} parent=11 // pred_region
          _
        $region32: #{_lambda_.1} parent=11 // pred_fallthru
          _
        // Predicated region
        $region33: #{_lambda_.1} parent=11 // pred_check
          %p451 = pneg %p206
        $region34: #{_lambda_.1} parent=11 // pred_check_branch
          %453 = sbr.rel (%p451) target = $region36
        $region35: #{_lambda_.1} parent=11 // pred_region
          _
        $region36: #{_lambda_.1} parent=11 // pred_fallthru
          _
        // Predicated region
        $region37: #{_lambda_.1} parent=11 // pred_check
          %p454 = pneg %p227
        $region38: #{_lambda_.1} parent=11 // pred_check_branch
          %456 = sbr.rel (%p454) target = $region40
        $region39: #{_lambda_.1} parent=11 // pred_region
          _
        $region40: #{_lambda_.1} parent=11 // pred_fallthru
          _
        // Predicated region
        $region41: #{_lambda_.1} parent=11 // pred_check
          %p457 = pneg %p248
        $region42: #{_lambda_.1} parent=11 // pred_check_branch
          %459 = sbr.rel (%p457) target = $region44
        $region43: #{_lambda_.1} parent=11 // pred_region
          _
        $region44: #{_lambda_.1} parent=11 // pred_fallthru
          _
        // Predicated region
        $region45: #{_lambda_.1} parent=11 // pred_check
          %p460 = pneg %p269
        $region46: #{_lambda_.1} parent=11 // pred_check_branch
          %462 = sbr.rel (%p460) target = $region48
        $region47: #{_lambda_.1} parent=11 // pred_region
          %s464 = ssub.s32 1024, 1024
          %465 = vsyncadd [#allocation3], %s464
          %s466 = sshll.u32 [#allocation2], 4
          %s467 = int_to_ptr.vmem [resolvable:$true] %s466
          %472 = dma.hbm_to_vmem [thread:$0]  %s10, 1024, %s467, [#allocation3], 128, 128, 8
        $region48: #{_lambda_.1} parent=11 // pred_fallthru
          _
        // Predicated region
        $region49: #{_lambda_.1} parent=11 // pred_check
          %p473 = pneg %p290
        $region50: #{_lambda_.1} parent=11 // pred_check_branch
          %475 = sbr.rel (%p473) target = $region52
        $region51: #{_lambda_.1} parent=11 // pred_region
          _
        $region52: #{_lambda_.1} parent=11 // pred_fallthru
          _
        // Predicated region
        $region53: #{_lambda_.1} parent=11 // pred_check
          %p476 = pneg %p311
        $region54: #{_lambda_.1} parent=11 // pred_check_branch
          %478 = sbr.rel (%p476) target = $region56
        $region55: #{_lambda_.1} parent=11 // pred_region
          _
        $region56: #{_lambda_.1} parent=11 // pred_fallthru
          _
        // Predicated region
        $region57: #{_lambda_.1} parent=11 // pred_check
          %p479 = pneg %p332
        $region58: #{_lambda_.1} parent=11 // pred_check_branch
          %481 = sbr.rel (%p479) target = $region60
        $region59: #{_lambda_.1} parent=11 // pred_region
          _
        $region60: #{_lambda_.1} parent=11 // pred_fallthru
          _
        // Predicated region
        $region61: #{_lambda_.1} parent=11 // pred_check
          %p482 = pneg %p353
        $region62: #{_lambda_.1} parent=11 // pred_check_branch
          %484 = sbr.rel (%p482) target = $region64
        $region63: #{_lambda_.1} parent=11 // pred_region
          _
        $region64: #{_lambda_.1} parent=11 // pred_fallthru
          _
        // Predicated region
        $region65: #{_lambda_.1} parent=11 // pred_check
          %p485 = pneg %p374
        $region66: #{_lambda_.1} parent=11 // pred_check_branch
          %487 = sbr.rel (%p485) target = $region68
        $region67: #{_lambda_.1} parent=11 // pred_region
          _
        $region68: #{_lambda_.1} parent=11 // pred_fallthru
          _
        // Predicated region
        $region69: #{_lambda_.1} parent=11 // pred_check
          %p488 = pneg %p395
        $region70: #{_lambda_.1} parent=11 // pred_check_branch
          %490 = sbr.rel (%p488) target = $region72
        $region71: #{_lambda_.1} parent=11 // pred_region
          %s492 = ssub.s32 512, 512
          %493 = vsyncadd [#allocation6], %s492
          %s494 = sshll.u32 [#allocation5], 4
          %s495 = int_to_ptr.vmem [resolvable:$true] %s494
          %500 = dma.hbm_to_vmem [thread:$0]  %s16, 512, %s495, [#allocation6], 128, 128, 8
        $region72: #{_lambda_.1} parent=11 // pred_fallthru
          _
      $region12: #{_lambda_.1} parent=5 // pred_fallthru
        _
      %p501 = scmp.lt.s32.totalorder %s28, 2
      // Predicated region
      $region73: #{_lambda_.1} parent=5 // pred_check
        %p502 = pneg %p501
      $region74: #{_lambda_.1} parent=5 // pred_check_branch
        %504 = sbr.rel (%p502) target = $region76
      $region75: #{_lambda_.1} parent=5 // pred_region
        // Predicated region
        $region77: #{_lambda_.1} parent=75 // pred_check
          %p505 = pneg %p48
        $region78: #{_lambda_.1} parent=75 // pred_check_branch
          %507 = sbr.rel (%p505) target = $region80
        $region79: #{_lambda_.1} parent=75 // pred_region
          %p508 = scmp.lt.s32.totalorder %s28, 1
          %s509 = scalar_select %p508, %s28, 1
          %s510 = smul.addr %s509, 8
          %s511 = scalar_lea.vmem %s0, %s510
        $region80: #{_lambda_.1} parent=75 // pred_fallthru
          _
        // Predicated region
        $region81: #{_lambda_.1} parent=75 // pred_check
          %p512 = pneg %p74
        $region82: #{_lambda_.1} parent=75 // pred_check_branch
          %514 = sbr.rel (%p512) target = $region84
        $region83: #{_lambda_.1} parent=75 // pred_region
          %p515 = scmp.lt.s32.totalorder %s28, 1
          %s516 = scalar_select %p515, %s28, 1
          %s517 = scalar_lea.vmem %s1, %s516
        $region84: #{_lambda_.1} parent=75 // pred_fallthru
          _
      $region76: #{_lambda_.1} parent=5 // pred_fallthru
        _
      %p518 = scmp.le.s32.totalorder 1, %s28
      %p519 = scmp.lt.s32.totalorder %s28, 3
      %p520 = pnand %p518, %p519
      %p521 = pneg %p520
      // Predicated region
      $region85: #{_lambda_.1} parent=5 // pred_check
        _
      $region86: #{_lambda_.1} parent=5 // pred_check_branch
        %523 = sbr.rel (%p520) target = $region88
      $region87: #{_lambda_.1} parent=5 // pred_region
        %s524 = ssub.s32 %s28, 1
        // Predicated region
        $region89: #{_lambda_.1} parent=87 // pred_check
          %p525 = pneg %p269
        $region90: #{_lambda_.1} parent=87 // pred_check_branch
          %527 = sbr.rel (%p525) target = $region92
        $region91: #{_lambda_.1} parent=87 // pred_region
          %528 = dma.done [#allocation3], 1024
        $region92: #{_lambda_.1} parent=87 // pred_fallthru
          _
        // Predicated region
        $region93: #{_lambda_.1} parent=87 // pred_check
          %p529 = pneg %p395
        $region94: #{_lambda_.1} parent=87 // pred_check_branch
          %531 = sbr.rel (%p529) target = $region96
        $region95: #{_lambda_.1} parent=87 // pred_region
          %532 = dma.done [#allocation6], 512
        $region96: #{_lambda_.1} parent=87 // pred_fallthru
          _
        %p533 = scmp.lt.s32.totalorder %s33, 1
        %s534 = scalar_select %p533, %s33, 1
        %s535 = smul.addr %s534, 8
        %s536 = scalar_lea.vmem %s0, %s535
        %p537 = pneg %p54
        %p538 = pneg %p51
        %p539 = scmp.lt.s32.totalorder %s33, 1
        %s540 = scalar_select %p539, %s33, 1
        %s541 = scalar_lea.vmem %s1, %s540
        %p542 = pneg %p80
        %p543 = pneg %p77
        %p544 = pneg %p101
        %p545 = pneg %p98
        %p546 = pneg %p122
        %p547 = pneg %p119
        %p548 = pneg %p143
        %p549 = pneg %p140
        %p550 = pneg %p164
        %p551 = pneg %p161
        %p552 = pneg %p185
        %p553 = pneg %p182
        %p554 = pneg %p206
        %p555 = pneg %p203
        %p556 = pneg %p227
        %p557 = pneg %p224
        %p558 = pneg %p248
        %p559 = pneg %p245
        %p560 = pneg %p269
        %p561 = pneg %p266
        %p562 = pneg %p290
        %p563 = pneg %p287
        %p564 = pneg %p311
        %p565 = pneg %p308
        %p566 = pneg %p332
        %p567 = pneg %p329
        %p568 = pneg %p353
        %p569 = pneg %p350
        %p570 = pneg %p374
        %p571 = pneg %p371
        %p572 = pneg %p395
        %p573 = pneg %p392
        %p574 = pneg %p421
        %p575 = pneg %p418
        %s576 = sand.u32 %s408, 1
        %s577 = scalar_lea.sflag [#allocation4], %s576
        %s578 = sand.u32 %s408, 1
        %s579 = scalar_lea.vmem [#allocation7], %s578
        %p580 = scmp.lt.s32.totalorder %s33, 1
        %s581 = scalar_select %p580, %s33, 1
        %s582 = smul.addr %s581, 8
        %s583 = scalar_lea.vmem %s0, %s582
        %p584 = scmp.lt.s32.totalorder %s33, 1
        %s585 = scalar_select %p584, %s33, 1
        %s586 = scalar_lea.vmem %s1, %s585
        %v587 = vld [vmem:[%s583] sm:$0xff]
        %v588 = vld [vmem:[%s2] sm:$0x1]
        %v589 = vld [vmem:[%s3] sm:$0x1]
        %vm590 = vcmask 261120
        %v591 = vsel %vm590, %v587, 0.0
        %592 = vadd.xlane.f32.xlu0 %v591
        %v593 = vpop.xlane.xlu0 %592
        %v594 = vrcp.pop 32.0
        %v595 = vmul.f32 %v593, %v594
        %v596 = vsub.f32 %v587, %v595
        %v597 = vmul.f32 %v596, %v596
        %v598 = vsel %vm590, %v597, 0.0
        %599 = vadd.xlane.f32.xlu0 %v598
        %v600 = vpop.xlane.xlu0 %599
        %v601 = vmul.f32 %v600, %v594
        %v602 = vadd.f32 %v601, 1e-12
        %v603 = vrsqrt.pop %v602
        %v604 = vmul.f32 %v596, %v603
        %v606 = vlaneseq
        %v607 = vshrl.u32 %v606, 7
        %v608 = vsub.s32 0, %v607
        %v609 = vrot.slane %v588, %v608
        %v611 = vmul.f32 %v604, %v609
        %v613 = vlaneseq
        %v614 = vshrl.u32 %v613, 7
        %v615 = vsub.s32 0, %v614
        %v616 = vrot.slane %v589, %v615
        %v618 = vadd.f32 %v611, %v616
        %v619 = vld [vmem:[%s586] sm:$0x1]
        %v620 = vsub.f32 1.0, %v619
        %v621 = vmul.f32 %v620, -10000.0
        %v622 = vld [vmem:[%s4] sm:$0xff]
        %v623 = vld [vmem:[%s4 + $0x8] sm:$0xff]
        %v624 = vld [vmem:[%s4 + $0x10] sm:$0xff]
        %v625 = vld [vmem:[%s4 + $0x18] sm:$0xff]
        %v626 = vld [vmem:[%s5] sm:$0x1]
        %v628 = vlaneseq
        %v629 = vshrl.u32 %v628, 7
        %v630 = vsub.s32 0, %v629
        %v631 = vrot.slane %v626, %v630
        %v634 = vsel %vm590, %v618, 0
        %636 = vmatprep.subr.mxu0 0.0
        %637 = vmatpush1.msra.mxu0 %v622
        %638 = vmatprep.subr.mxu0 0.0
        %639 = vmatpush1.msra.mxu0 %v623
        %640 = vmatprep.subr.mxu0 0.0
        %641 = vmatpush1.msra.mxu0 %v624
        %642 = vmatprep.subr.mxu0 0.0
        %643 = vmatpush1.msra.mxu0 %v625
        %644 = vmatprep.subr.mxu0 0.0
        %645 = vmatpush1.msra.mxu0 0.0
        %646 = vmatprep.subr.mxu0 0.0
        %647 = vmatpush1.msra.mxu0 0.0
        %648 = vmatprep.subr.mxu0 0.0
        %649 = vmatpush1.msra.mxu0 0.0
        %650 = vmatprep.subr.mxu0 0.0
        %651 = vmatpush1.msra.mxu0 0.0
        %652 = vmatprep.subr.mxu0 0.0
        %653 = vmatpush1.msra.mxu0 0.0
        %654 = vmatprep.subr.mxu0 0.0
        %655 = vmatpush1.msra.mxu0 0.0
        %656 = vmatprep.subr.mxu0 0.0
        %657 = vmatpush1.msra.mxu0 0.0
        %658 = vmatprep.subr.mxu0 0.0
        %659 = vmatpush1.msra.mxu0 0.0
        %660 = vmatprep.subr.mxu0 0.0
        %661 = vmatpush1.msra.mxu0 0.0
        %662 = vmatprep.subr.mxu0 0.0
        %663 = vmatpush1.msra.mxu0 0.0
        %664 = vmatprep.subr.mxu0 0.0
        %665 = vmatpush1.msra.mxu0 0.0
        %666 = vmatprep.subr.mxu0 0.0
        %667 = vmatpush1.msra.mxu0 0.0
        %668 = vmatprep.subr.mxu0 0.0
        %669 = vmatpush1.msra.mxu0 0.0
        %670 = vmatprep.subr.mxu0 0.0
        %671 = vmatpush1.msra.mxu0 0.0
        %672 = vmatprep.subr.mxu0 0.0
        %673 = vmatpush1.msra.mxu0 0.0
        %674 = vmatprep.subr.mxu0 0.0
        %675 = vmatpush1.msra.mxu0 0.0
        %676 = vmatprep.subr.mxu0 0.0
        %677 = vmatpush1.msra.mxu0 0.0
        %678 = vmatprep.subr.mxu0 0.0
        %679 = vmatpush1.msra.mxu0 0.0
        %680 = vmatprep.subr.mxu0 0.0
        %681 = vmatpush1.msra.mxu0 0.0
        %682 = vmatprep.subr.mxu0 0.0
        %683 = vmatpush1.msra.mxu0 0.0
        %684 = vmatprep.subr.mxu0 0.0
        %685 = vmatpush1.msra.mxu0 0.0
        %686 = vmatprep.subr.mxu0 0.0
        %687 = vmatpush1.msra.mxu0 0.0
        %688 = vmatprep.subr.mxu0 0.0
        %689 = vmatpush1.msra.mxu0 0.0
        %690 = vmatprep.subr.mxu0 0.0
        %691 = vmatpush1.msra.mxu0 0.0
        %692 = vmatprep.subr.mxu0 0.0
        %693 = vmatpush1.msra.mxu0 0.0
        %694 = vmatprep.subr.mxu0 0.0
        %695 = vmatpush1.msra.mxu0 0.0
        %696 = vmatprep.subr.mxu0 0.0
        %697 = vmatpush1.msra.mxu0 0.0
        %698 = vmatprep.subr.mxu0 0.0
        %699 = vmatpush1.msra.mxu0 0.0
        %700 = vmatprep.mubr.f32.mxu0 0.0
        %701 = vmatmul.mubr.f32.gmra.mrb[0].mxu0 %v634
        %v702 = vpop.f32.mrb[0].mxu0
        %v703 = vadd.f32 %v631, %v702
        %v704 = vpop.f32.mrb[0].mxu0
        %705 = vdwg.mxu0
        %v706 = vld [vmem:[%s6] sm:$0xff]
        %v707 = vld [vmem:[%s6 + $0x8] sm:$0xff]
        %v708 = vld [vmem:[%s6 + $0x10] sm:$0xff]
        %v709 = vld [vmem:[%s6 + $0x18] sm:$0xff]
        %711 = vrot.lane.b32.xlu0 %v703, 96
        %v712 = vpop.permute.xlu0 %711
        %vm713 = vcmask 64512
        %v714 = vsel %vm713, %v703, 0
        %v716 = vsel %vm713, %v712, 0
        %718 = vmatprep.subr.mxu0 0.0
        %719 = vmatpush1.xpose.msra.mxu0 %v716
        %720 = vmatprep.subr.mxu0 0.0
        %721 = vmatpush1.xpose.msra.mxu0 0.0
        %722 = vmatprep.subr.mxu0 0.0
        %723 = vmatpush1.xpose.msra.mxu0 0.0
        %724 = vmatprep.subr.mxu0 0.0
        %725 = vmatpush1.xpose.msra.mxu0 0.0
        %726 = vmatprep.subr.mxu0 0.0
        %727 = vmatpush1.xpose.msra.mxu0 0.0
        %728 = vmatprep.subr.mxu0 0.0
        %729 = vmatpush1.xpose.msra.mxu0 0.0
        %730 = vmatprep.subr.mxu0 0.0
        %731 = vmatpush1.xpose.msra.mxu0 0.0
        %732 = vmatprep.subr.mxu0 0.0
        %733 = vmatpush1.xpose.msra.mxu0 0.0
        %734 = vmatprep.subr.mxu0 0.0
        %735 = vmatpush1.xpose.msra.mxu0 0.0
        %736 = vmatprep.subr.mxu0 0.0
        %737 = vmatpush1.xpose.msra.mxu0 0.0
        %738 = vmatprep.subr.mxu0 0.0
        %739 = vmatpush1.xpose.msra.mxu0 0.0
        %740 = vmatprep.subr.mxu0 0.0
        %741 = vmatpush1.xpose.msra.mxu0 0.0
        %742 = vmatprep.subr.mxu0 0.0
        %743 = vmatpush1.xpose.msra.mxu0 0.0
        %744 = vmatprep.subr.mxu0 0.0
        %745 = vmatpush1.xpose.msra.mxu0 0.0
        %746 = vmatprep.subr.mxu0 0.0
        %747 = vmatpush1.xpose.msra.mxu0 0.0
        %748 = vmatprep.subr.mxu0 0.0
        %749 = vmatpush1.xpose.msra.mxu0 0.0
        %750 = vmatprep.subr.mxu0 0.0
        %751 = vmatpush1.xpose.msra.mxu0 0.0
        %752 = vmatprep.subr.mxu0 0.0
        %753 = vmatpush1.xpose.msra.mxu0 0.0
        %754 = vmatprep.subr.mxu0 0.0
        %755 = vmatpush1.xpose.msra.mxu0 0.0
        %756 = vmatprep.subr.mxu0 0.0
        %757 = vmatpush1.xpose.msra.mxu0 0.0
        %758 = vmatprep.subr.mxu0 0.0
        %759 = vmatpush1.xpose.msra.mxu0 0.0
        %760 = vmatprep.subr.mxu0 0.0
        %761 = vmatpush1.xpose.msra.mxu0 0.0
        %762 = vmatprep.subr.mxu0 0.0
        %763 = vmatpush1.xpose.msra.mxu0 0.0
        %764 = vmatprep.subr.mxu0 0.0
        %765 = vmatpush1.xpose.msra.mxu0 0.0
        %766 = vmatprep.subr.mxu0 0.0
        %767 = vmatpush1.xpose.msra.mxu0 0.0
        %768 = vmatprep.subr.mxu0 0.0
        %769 = vmatpush1.xpose.msra.mxu0 0.0
        %770 = vmatprep.subr.mxu0 0.0
        %771 = vmatpush1.xpose.msra.mxu0 0.0
        %772 = vmatprep.subr.mxu0 0.0
        %773 = vmatpush1.xpose.msra.mxu0 0.0
        %774 = vmatprep.subr.mxu0 0.0
        %775 = vmatpush1.xpose.msra.mxu0 0.0
        %776 = vmatprep.subr.mxu0 0.0
        %777 = vmatpush1.xpose.msra.mxu0 0.0
        %778 = vmatprep.subr.mxu0 0.0
        %779 = vmatpush1.xpose.msra.mxu0 0.0
        %780 = vmatprep.subr.mxu0 0.0
        %781 = vmatpush1.xpose.msra.mxu0 0.0
        %782 = vmatprep.mubr.f32.mxu0 0.0
        %783 = vmatmul.mubr.f32.gmra.mrb[0].mxu0 %v714
        %v784 = vpop.f32.mrb[0].mxu0
        %v785 = vadd.f32 0.0, %v784
        %v786 = vpop.f32.mrb[0].mxu0
        %787 = vdwg.mxu0
        %v788 = vmul.f32 %v785, 0.35355338
        %v790 = vlaneseq
        %v791 = vshrl.u32 %v790, 7
        %v792 = vsub.s32 0, %v791
        %v793 = vrot.slane %v621, %v792
        %v795 = vadd.f32 %v788, %v793
        %v796 = vsel %vm713, %v795, -inf
        %797 = vmax.xlane.f32.xlu0 %v796
        %v798 = vpop.xlane.xlu0 %797
        %v799 = vsub.f32 %v795, %v798
        %v800 = vmul.f32 %v799, 1.442695
        %v801 = vpow.pop %v800
        %v802 = vsel %vm713, %v801, 0.0
        %803 = vadd.xlane.f32.xlu0 %v802
        %v804 = vpop.xlane.xlu0 %803
        %v805 = vrcp.pop %v804
        %v806 = vmul.f32 %v801, %v805
        %807 = vrot.lane.b32.xlu0 %v703, 64
        %v808 = vpop.permute.xlu0 %807
        %v811 = vsel %vm713, %v806, 0
        %813 = vmatprep.subr.mxu0 0.0
        %814 = vmatpush1.msra.mxu0 %v808
        %815 = vmatprep.subr.mxu0 0.0
        %816 = vmatpush1.msra.mxu0 0.0
        %817 = vmatprep.subr.mxu0 0.0
        %818 = vmatpush1.msra.mxu0 0.0
        %819 = vmatprep.subr.mxu0 0.0
        %820 = vmatpush1.msra.mxu0 0.0
        %821 = vmatprep.subr.mxu0 0.0
        %822 = vmatpush1.msra.mxu0 0.0
        %823 = vmatprep.subr.mxu0 0.0
        %824 = vmatpush1.msra.mxu0 0.0
        %825 = vmatprep.subr.mxu0 0.0
        %826 = vmatpush1.msra.mxu0 0.0
        %827 = vmatprep.subr.mxu0 0.0
        %828 = vmatpush1.msra.mxu0 0.0
        %829 = vmatprep.subr.mxu0 0.0
        %830 = vmatpush1.msra.mxu0 0.0
        %831 = vmatprep.subr.mxu0 0.0
        %832 = vmatpush1.msra.mxu0 0.0
        %833 = vmatprep.subr.mxu0 0.0
        %834 = vmatpush1.msra.mxu0 0.0
        %835 = vmatprep.subr.mxu0 0.0
        %836 = vmatpush1.msra.mxu0 0.0
        %837 = vmatprep.subr.mxu0 0.0
        %838 = vmatpush1.msra.mxu0 0.0
        %839 = vmatprep.subr.mxu0 0.0
        %840 = vmatpush1.msra.mxu0 0.0
        %841 = vmatprep.subr.mxu0 0.0
        %842 = vmatpush1.msra.mxu0 0.0
        %843 = vmatprep.subr.mxu0 0.0
        %844 = vmatpush1.msra.mxu0 0.0
        %845 = vmatprep.subr.mxu0 0.0
        %846 = vmatpush1.msra.mxu0 0.0
        %847 = vmatprep.subr.mxu0 0.0
        %848 = vmatpush1.msra.mxu0 0.0
        %849 = vmatprep.subr.mxu0 0.0
        %850 = vmatpush1.msra.mxu0 0.0
        %851 = vmatprep.subr.mxu0 0.0
        %852 = vmatpush1.msra.mxu0 0.0
        %853 = vmatprep.subr.mxu0 0.0
        %854 = vmatpush1.msra.mxu0 0.0
        %855 = vmatprep.subr.mxu0 0.0
        %856 = vmatpush1.msra.mxu0 0.0
        %857 = vmatprep.subr.mxu0 0.0
        %858 = vmatpush1.msra.mxu0 0.0
        %859 = vmatprep.subr.mxu0 0.0
        %860 = vmatpush1.msra.mxu0 0.0
        %861 = vmatprep.subr.mxu0 0.0
        %862 = vmatpush1.msra.mxu0 0.0
        %863 = vmatprep.subr.mxu0 0.0
        %864 = vmatpush1.msra.mxu0 0.0
        %865 = vmatprep.subr.mxu0 0.0
        %866 = vmatpush1.msra.mxu0 0.0
        %867 = vmatprep.subr.mxu0 0.0
        %868 = vmatpush1.msra.mxu0 0.0
        %869 = vmatprep.subr.mxu0 0.0
        %870 = vmatpush1.msra.mxu0 0.0
        %871 = vmatprep.subr.mxu0 0.0
        %872 = vmatpush1.msra.mxu0 0.0
        %873 = vmatprep.subr.mxu0 0.0
        %874 = vmatpush1.msra.mxu0 0.0
        %875 = vmatprep.subr.mxu0 0.0
        %876 = vmatpush1.msra.mxu0 0.0
        %877 = vmatprep.mubr.f32.mxu0 0.0
        %878 = vmatmul.mubr.f32.gmra.mrb[0].mxu0 %v811
        %v879 = vpop.f32.mrb[0].mxu0
        %v880 = vadd.f32 0.0, %v879
        %v881 = vpop.f32.mrb[0].mxu0
        %882 = vdwg.mxu0
        %883 = vrot.lane.b32.xlu0 %v703, 120
        %v884 = vpop.permute.xlu0 %883
        %885 = vrot.lane.b32.xlu0 %v703, 88
        %v886 = vpop.permute.xlu0 %885
        %v887 = vsel %vm713, %v884, 0
        %v889 = vsel %vm713, %v886, 0
        %891 = vmatprep.subr.mxu0 0.0
        %892 = vmatpush1.xpose.msra.mxu0 %v889
        %893 = vmatprep.subr.mxu0 0.0
        %894 = vmatpush1.xpose.msra.mxu0 0.0
        %895 = vmatprep.subr.mxu0 0.0
        %896 = vmatpush1.xpose.msra.mxu0 0.0
        %897 = vmatprep.subr.mxu0 0.0
        %898 = vmatpush1.xpose.msra.mxu0 0.0
        %899 = vmatprep.subr.mxu0 0.0
        %900 = vmatpush1.xpose.msra.mxu0 0.0
        %901 = vmatprep.subr.mxu0 0.0
        %902 = vmatpush1.xpose.msra.mxu0 0.0
        %903 = vmatprep.subr.mxu0 0.0
        %904 = vmatpush1.xpose.msra.mxu0 0.0
        %905 = vmatprep.subr.mxu0 0.0
        %906 = vmatpush1.xpose.msra.mxu0 0.0
        %907 = vmatprep.subr.mxu0 0.0
        %908 = vmatpush1.xpose.msra.mxu0 0.0
        %909 = vmatprep.subr.mxu0 0.0
        %910 = vmatpush1.xpose.msra.mxu0 0.0
        %911 = vmatprep.subr.mxu0 0.0
        %912 = vmatpush1.xpose.msra.mxu0 0.0
        %913 = vmatprep.subr.mxu0 0.0
        %914 = vmatpush1.xpose.msra.mxu0 0.0
        %915 = vmatprep.subr.mxu0 0.0
        %916 = vmatpush1.xpose.msra.mxu0 0.0
        %917 = vmatprep.subr.mxu0 0.0
        %918 = vmatpush1.xpose.msra.mxu0 0.0
        %919 = vmatprep.subr.mxu0 0.0
        %920 = vmatpush1.xpose.msra.mxu0 0.0
        %921 = vmatprep.subr.mxu0 0.0
        %922 = vmatpush1.xpose.msra.mxu0 0.0
        %923 = vmatprep.subr.mxu0 0.0
        %924 = vmatpush1.xpose.msra.mxu0 0.0
        %925 = vmatprep.subr.mxu0 0.0
        %926 = vmatpush1.xpose.msra.mxu0 0.0
        %927 = vmatprep.subr.mxu0 0.0
        %928 = vmatpush1.xpose.msra.mxu0 0.0
        %929 = vmatprep.subr.mxu0 0.0
        %930 = vmatpush1.xpose.msra.mxu0 0.0
        %931 = vmatprep.subr.mxu0 0.0
        %932 = vmatpush1.xpose.msra.mxu0 0.0
        %933 = vmatprep.subr.mxu0 0.0
        %934 = vmatpush1.xpose.msra.mxu0 0.0
        %935 = vmatprep.subr.mxu0 0.0
        %936 = vmatpush1.xpose.msra.mxu0 0.0
        %937 = vmatprep.subr.mxu0 0.0
        %938 = vmatpush1.xpose.msra.mxu0 0.0
        %939 = vmatprep.subr.mxu0 0.0
        %940 = vmatpush1.xpose.msra.mxu0 0.0
        %941 = vmatprep.subr.mxu0 0.0
        %942 = vmatpush1.xpose.msra.mxu0 0.0
        %943 = vmatprep.subr.mxu0 0.0
        %944 = vmatpush1.xpose.msra.mxu0 0.0
        %945 = vmatprep.subr.mxu0 0.0
        %946 = vmatpush1.xpose.msra.mxu0 0.0
        %947 = vmatprep.subr.mxu0 0.0
        %948 = vmatpush1.xpose.msra.mxu0 0.0
        %949 = vmatprep.subr.mxu0 0.0
        %950 = vmatpush1.xpose.msra.mxu0 0.0
        %951 = vmatprep.subr.mxu0 0.0
        %952 = vmatpush1.xpose.msra.mxu0 0.0
        %953 = vmatprep.subr.mxu0 0.0
        %954 = vmatpush1.xpose.msra.mxu0 0.0
        %955 = vmatprep.mubr.f32.mxu0 0.0
        %956 = vmatmul.mubr.f32.gmra.mrb[0].mxu0 %v887
        %v957 = vpop.f32.mrb[0].mxu0
        %v958 = vadd.f32 0.0, %v957
        %v959 = vpop.f32.mrb[0].mxu0
        %960 = vdwg.mxu0
        %v961 = vmul.f32 %v958, 0.35355338
        %v962 = vadd.f32 %v961, %v793
        %v963 = vsel %vm713, %v962, -inf
        %964 = vmax.xlane.f32.xlu0 %v963
        %v965 = vpop.xlane.xlu0 %964
        %v966 = vsub.f32 %v962, %v965
        %v967 = vmul.f32 %v966, 1.442695
        %v968 = vpow.pop %v967
        %v969 = vsel %vm713, %v968, 0.0
        %970 = vadd.xlane.f32.xlu0 %v969
        %v971 = vpop.xlane.xlu0 %970
        %v972 = vrcp.pop %v971
        %v973 = vmul.f32 %v968, %v972
        %974 = vrot.lane.b32.xlu0 %v703, 56
        %v975 = vpop.permute.xlu0 %974
        %v978 = vsel %vm713, %v973, 0
        %980 = vmatprep.subr.mxu0 0.0
        %981 = vmatpush1.msra.mxu0 %v975
        %982 = vmatprep.subr.mxu0 0.0
        %983 = vmatpush1.msra.mxu0 0.0
        %984 = vmatprep.subr.mxu0 0.0
        %985 = vmatpush1.msra.mxu0 0.0
        %986 = vmatprep.subr.mxu0 0.0
        %987 = vmatpush1.msra.mxu0 0.0
        %988 = vmatprep.subr.mxu0 0.0
        %989 = vmatpush1.msra.mxu0 0.0
        %990 = vmatprep.subr.mxu0 0.0
        %991 = vmatpush1.msra.mxu0 0.0
        %992 = vmatprep.subr.mxu0 0.0
        %993 = vmatpush1.msra.mxu0 0.0
        %994 = vmatprep.subr.mxu0 0.0
        %995 = vmatpush1.msra.mxu0 0.0
        %996 = vmatprep.subr.mxu0 0.0
        %997 = vmatpush1.msra.mxu0 0.0
        %998 = vmatprep.subr.mxu0 0.0
        %999 = vmatpush1.msra.mxu0 0.0
        %1000 = vmatprep.subr.mxu0 0.0
        %1001 = vmatpush1.msra.mxu0 0.0
        %1002 = vmatprep.subr.mxu0 0.0
        %1003 = vmatpush1.msra.mxu0 0.0
        %1004 = vmatprep.subr.mxu0 0.0
        %1005 = vmatpush1.msra.mxu0 0.0
        %1006 = vmatprep.subr.mxu0 0.0
        %1007 = vmatpush1.msra.mxu0 0.0
        %1008 = vmatprep.subr.mxu0 0.0
        %1009 = vmatpush1.msra.mxu0 0.0
        %1010 = vmatprep.subr.mxu0 0.0
        %1011 = vmatpush1.msra.mxu0 0.0
        %1012 = vmatprep.subr.mxu0 0.0
        %1013 = vmatpush1.msra.mxu0 0.0
        %1014 = vmatprep.subr.mxu0 0.0
        %1015 = vmatpush1.msra.mxu0 0.0
        %1016 = vmatprep.subr.mxu0 0.0
        %1017 = vmatpush1.msra.mxu0 0.0
        %1018 = vmatprep.subr.mxu0 0.0
        %1019 = vmatpush1.msra.mxu0 0.0
        %1020 = vmatprep.subr.mxu0 0.0
        %1021 = vmatpush1.msra.mxu0 0.0
        %1022 = vmatprep.subr.mxu0 0.0
        %1023 = vmatpush1.msra.mxu0 0.0
        %1024 = vmatprep.subr.mxu0 0.0
        %1025 = vmatpush1.msra.mxu0 0.0
        %1026 = vmatprep.subr.mxu0 0.0
        %1027 = vmatpush1.msra.mxu0 0.0
        %1028 = vmatprep.subr.mxu0 0.0
        %1029 = vmatpush1.msra.mxu0 0.0
        %1030 = vmatprep.subr.mxu0 0.0
        %1031 = vmatpush1.msra.mxu0 0.0
        %1032 = vmatprep.subr.mxu0 0.0
        %1033 = vmatpush1.msra.mxu0 0.0
        %1034 = vmatprep.subr.mxu0 0.0
        %1035 = vmatpush1.msra.mxu0 0.0
        %1036 = vmatprep.subr.mxu0 0.0
        %1037 = vmatpush1.msra.mxu0 0.0
        %1038 = vmatprep.subr.mxu0 0.0
        %1039 = vmatpush1.msra.mxu0 0.0
        %1040 = vmatprep.subr.mxu0 0.0
        %1041 = vmatpush1.msra.mxu0 0.0
        %1042 = vmatprep.subr.mxu0 0.0
        %1043 = vmatpush1.msra.mxu0 0.0
        %1044 = vmatprep.mubr.f32.mxu0 0.0
        %1045 = vmatmul.mubr.f32.gmra.mrb[0].mxu0 %v978
        %v1046 = vpop.f32.mrb[0].mxu0
        %v1047 = vadd.f32 0.0, %v1046
        %v1048 = vpop.f32.mrb[0].mxu0
        %1049 = vdwg.mxu0
        %v1051 = vsel %vm713, %v1047, 0
        %1053 = vmatprep.subr.mxu0 0.0
        %1054 = vmatpush1.msra.mxu0 %v707
        %1055 = vmatprep.subr.mxu0 0.0
        %1056 = vmatpush1.msra.mxu0 0.0
        %1057 = vmatprep.subr.mxu0 0.0
        %1058 = vmatpush1.msra.mxu0 0.0
        %1059 = vmatprep.subr.mxu0 0.0
        %1060 = vmatpush1.msra.mxu0 0.0
        %1061 = vmatprep.subr.mxu0 0.0
        %1062 = vmatpush1.msra.mxu0 0.0
        %1063 = vmatprep.subr.mxu0 0.0
        %1064 = vmatpush1.msra.mxu0 0.0
        %1065 = vmatprep.subr.mxu0 0.0
        %1066 = vmatpush1.msra.mxu0 0.0
        %1067 = vmatprep.subr.mxu0 0.0
        %1068 = vmatpush1.msra.mxu0 0.0
        %1069 = vmatprep.subr.mxu0 0.0
        %1070 = vmatpush1.msra.mxu0 0.0
        %1071 = vmatprep.subr.mxu0 0.0
        %1072 = vmatpush1.msra.mxu0 0.0
        %1073 = vmatprep.subr.mxu0 0.0
        %1074 = vmatpush1.msra.mxu0 0.0
        %1075 = vmatprep.subr.mxu0 0.0
        %1076 = vmatpush1.msra.mxu0 0.0
        %1077 = vmatprep.subr.mxu0 0.0
        %1078 = vmatpush1.msra.mxu0 0.0
        %1079 = vmatprep.subr.mxu0 0.0
        %1080 = vmatpush1.msra.mxu0 0.0
        %1081 = vmatprep.subr.mxu0 0.0
        %1082 = vmatpush1.msra.mxu0 0.0
        %1083 = vmatprep.subr.mxu0 0.0
        %1084 = vmatpush1.msra.mxu0 0.0
        %1085 = vmatprep.subr.mxu0 0.0
        %1086 = vmatpush1.msra.mxu0 0.0
        %1087 = vmatprep.subr.mxu0 0.0
        %1088 = vmatpush1.msra.mxu0 0.0
        %1089 = vmatprep.subr.mxu0 0.0
        %1090 = vmatpush1.msra.mxu0 0.0
        %1091 = vmatprep.subr.mxu0 0.0
        %1092 = vmatpush1.msra.mxu0 0.0
        %1093 = vmatprep.subr.mxu0 0.0
        %1094 = vmatpush1.msra.mxu0 0.0
        %1095 = vmatprep.subr.mxu0 0.0
        %1096 = vmatpush1.msra.mxu0 0.0
        %1097 = vmatprep.subr.mxu0 0.0
        %1098 = vmatpush1.msra.mxu0 0.0
        %1099 = vmatprep.subr.mxu0 0.0
        %1100 = vmatpush1.msra.mxu0 0.0
        %1101 = vmatprep.subr.mxu0 0.0
        %1102 = vmatpush1.msra.mxu0 0.0
        %1103 = vmatprep.subr.mxu0 0.0
        %1104 = vmatpush1.msra.mxu0 0.0
        %1105 = vmatprep.subr.mxu0 0.0
        %1106 = vmatpush1.msra.mxu0 0.0
        %1107 = vmatprep.subr.mxu0 0.0
        %1108 = vmatpush1.msra.mxu0 0.0
        %1109 = vmatprep.subr.mxu0 0.0
        %1110 = vmatpush1.msra.mxu0 0.0
        %1111 = vmatprep.subr.mxu0 0.0
        %1112 = vmatpush1.msra.mxu0 0.0
        %1113 = vmatprep.subr.mxu0 0.0
        %1114 = vmatpush1.msra.mxu0 0.0
        %1115 = vmatprep.subr.mxu0 0.0
        %1116 = vmatpush1.msra.mxu0 0.0
        %1117 = vmatprep.mubr.f32.mxu0 0.0
        %1118 = vmatmul.mubr.f32.gmra.mrb[0].mxu0 %v1051
        %v1119 = vpop.f32.mrb[0].mxu0
        %v1120 = vadd.f32 0.0, %v1119
        %v1121 = vpop.f32.mrb[0].mxu0
        %1122 = vdwg.mxu0
        %v1124 = vsel %vm713, %v880, 0
        %1126 = vmatprep.subr.mxu0 0.0
        %1127 = vmatpush1.msra.mxu0 %v706
        %1128 = vmatprep.subr.mxu0 0.0
        %1129 = vmatpush1.msra.mxu0 0.0
        %1130 = vmatprep.subr.mxu0 0.0
        %1131 = vmatpush1.msra.mxu0 0.0
        %1132 = vmatprep.subr.mxu0 0.0
        %1133 = vmatpush1.msra.mxu0 0.0
        %1134 = vmatprep.subr.mxu0 0.0
        %1135 = vmatpush1.msra.mxu0 0.0
        %1136 = vmatprep.subr.mxu0 0.0
        %1137 = vmatpush1.msra.mxu0 0.0
        %1138 = vmatprep.subr.mxu0 0.0
        %1139 = vmatpush1.msra.mxu0 0.0
        %1140 = vmatprep.subr.mxu0 0.0
        %1141 = vmatpush1.msra.mxu0 0.0
        %1142 = vmatprep.subr.mxu0 0.0
        %1143 = vmatpush1.msra.mxu0 0.0
        %1144 = vmatprep.subr.mxu0 0.0
        %1145 = vmatpush1.msra.mxu0 0.0
        %1146 = vmatprep.subr.mxu0 0.0
        %1147 = vmatpush1.msra.mxu0 0.0
        %1148 = vmatprep.subr.mxu0 0.0
        %1149 = vmatpush1.msra.mxu0 0.0
        %1150 = vmatprep.subr.mxu0 0.0
        %1151 = vmatpush1.msra.mxu0 0.0
        %1152 = vmatprep.subr.mxu0 0.0
        %1153 = vmatpush1.msra.mxu0 0.0
        %1154 = vmatprep.subr.mxu0 0.0
        %1155 = vmatpush1.msra.mxu0 0.0
        %1156 = vmatprep.subr.mxu0 0.0
        %1157 = vmatpush1.msra.mxu0 0.0
        %1158 = vmatprep.subr.mxu0 0.0
        %1159 = vmatpush1.msra.mxu0 0.0
        %1160 = vmatprep.subr.mxu0 0.0
        %1161 = vmatpush1.msra.mxu0 0.0
        %1162 = vmatprep.subr.mxu0 0.0
        %1163 = vmatpush1.msra.mxu0 0.0
        %1164 = vmatprep.subr.mxu0 0.0
        %1165 = vmatpush1.msra.mxu0 0.0
        %1166 = vmatprep.subr.mxu0 0.0
        %1167 = vmatpush1.msra.mxu0 0.0
        %1168 = vmatprep.subr.mxu0 0.0
        %1169 = vmatpush1.msra.mxu0 0.0
        %1170 = vmatprep.subr.mxu0 0.0
        %1171 = vmatpush1.msra.mxu0 0.0
        %1172 = vmatprep.subr.mxu0 0.0
        %1173 = vmatpush1.msra.mxu0 0.0
        %1174 = vmatprep.subr.mxu0 0.0
        %1175 = vmatpush1.msra.mxu0 0.0
        %1176 = vmatprep.subr.mxu0 0.0
        %1177 = vmatpush1.msra.mxu0 0.0
        %1178 = vmatprep.subr.mxu0 0.0
        %1179 = vmatpush1.msra.mxu0 0.0
        %1180 = vmatprep.subr.mxu0 0.0
        %1181 = vmatpush1.msra.mxu0 0.0
        %1182 = vmatprep.subr.mxu0 0.0
        %1183 = vmatpush1.msra.mxu0 0.0
        %1184 = vmatprep.subr.mxu0 0.0
        %1185 = vmatpush1.msra.mxu0 0.0
        %1186 = vmatprep.subr.mxu0 0.0
        %1187 = vmatpush1.msra.mxu0 0.0
        %1188 = vmatprep.subr.mxu0 0.0
        %1189 = vmatpush1.msra.mxu0 0.0
        %1190 = vmatprep.mubr.f32.mxu0 0.0
        %1191 = vmatmul.mubr.f32.gmra.mrb[0].mxu0 %v1124
        %v1192 = vpop.f32.mrb[0].mxu0
        %v1193 = vadd.f32 %v1120, %v1192
        %v1194 = vpop.f32.mrb[0].mxu0
        %1195 = vdwg.mxu0
        %1196 = vrot.lane.b32.xlu0 %v703, 112
        %v1197 = vpop.permute.xlu0 %1196
        %1198 = vrot.lane.b32.xlu0 %v703, 80
        %v1199 = vpop.permute.xlu0 %1198
        %v1200 = vsel %vm713, %v1197, 0
        %v1202 = vsel %vm713, %v1199, 0
        %1204 = vmatprep.subr.mxu0 0.0
        %1205 = vmatpush1.xpose.msra.mxu0 %v1202
        %1206 = vmatprep.subr.mxu0 0.0
        %1207 = vmatpush1.xpose.msra.mxu0 0.0
        %1208 = vmatprep.subr.mxu0 0.0
        %1209 = vmatpush1.xpose.msra.mxu0 0.0
        %1210 = vmatprep.subr.mxu0 0.0
        %1211 = vmatpush1.xpose.msra.mxu0 0.0
        %1212 = vmatprep.subr.mxu0 0.0
        %1213 = vmatpush1.xpose.msra.mxu0 0.0
        %1214 = vmatprep.subr.mxu0 0.0
        %1215 = vmatpush1.xpose.msra.mxu0 0.0
        %1216 = vmatprep.subr.mxu0 0.0
        %1217 = vmatpush1.xpose.msra.mxu0 0.0
        %1218 = vmatprep.subr.mxu0 0.0
        %1219 = vmatpush1.xpose.msra.mxu0 0.0
        %1220 = vmatprep.subr.mxu0 0.0
        %1221 = vmatpush1.xpose.msra.mxu0 0.0
        %1222 = vmatprep.subr.mxu0 0.0
        %1223 = vmatpush1.xpose.msra.mxu0 0.0
        %1224 = vmatprep.subr.mxu0 0.0
        %1225 = vmatpush1.xpose.msra.mxu0 0.0
        %1226 = vmatprep.subr.mxu0 0.0
        %1227 = vmatpush1.xpose.msra.mxu0 0.0
        %1228 = vmatprep.subr.mxu0 0.0
        %1229 = vmatpush1.xpose.msra.mxu0 0.0
        %1230 = vmatprep.subr.mxu0 0.0
        %1231 = vmatpush1.xpose.msra.mxu0 0.0
        %1232 = vmatprep.subr.mxu0 0.0
        %1233 = vmatpush1.xpose.msra.mxu0 0.0
        %1234 = vmatprep.subr.mxu0 0.0
        %1235 = vmatpush1.xpose.msra.mxu0 0.0
        %1236 = vmatprep.subr.mxu0 0.0
        %1237 = vmatpush1.xpose.msra.mxu0 0.0
        %1238 = vmatprep.subr.mxu0 0.0
        %1239 = vmatpush1.xpose.msra.mxu0 0.0
        %1240 = vmatprep.subr.mxu0 0.0
        %1241 = vmatpush1.xpose.msra.mxu0 0.0
        %1242 = vmatprep.subr.mxu0 0.0
        %1243 = vmatpush1.xpose.msra.mxu0 0.0
        %1244 = vmatprep.subr.mxu0 0.0
        %1245 = vmatpush1.xpose.msra.mxu0 0.0
        %1246 = vmatprep.subr.mxu0 0.0
        %1247 = vmatpush1.xpose.msra.mxu0 0.0
        %1248 = vmatprep.subr.mxu0 0.0
        %1249 = vmatpush1.xpose.msra.mxu0 0.0
        %1250 = vmatprep.subr.mxu0 0.0
        %1251 = vmatpush1.xpose.msra.mxu0 0.0
        %1252 = vmatprep.subr.mxu0 0.0
        %1253 = vmatpush1.xpose.msra.mxu0 0.0
        %1254 = vmatprep.subr.mxu0 0.0
        %1255 = vmatpush1.xpose.msra.mxu0 0.0
        %1256 = vmatprep.subr.mxu0 0.0
        %1257 = vmatpush1.xpose.msra.mxu0 0.0
        %1258 = vmatprep.subr.mxu0 0.0
        %1259 = vmatpush1.xpose.msra.mxu0 0.0
        %1260 = vmatprep.subr.mxu0 0.0
        %1261 = vmatpush1.xpose.msra.mxu0 0.0
        %1262 = vmatprep.subr.mxu0 0.0
        %1263 = vmatpush1.xpose.msra.mxu0 0.0
        %1264 = vmatprep.subr.mxu0 0.0
        %1265 = vmatpush1.xpose.msra.mxu0 0.0
        %1266 = vmatprep.subr.mxu0 0.0
        %1267 = vmatpush1.xpose.msra.mxu0 0.0
        %1268 = vmatprep.mubr.f32.mxu0 0.0
        %1269 = vmatmul.mubr.f32.gmra.mrb[0].mxu0 %v1200
        %v1270 = vpop.f32.mrb[0].mxu0
        %v1271 = vadd.f32 0.0, %v1270
        %v1272 = vpop.f32.mrb[0].mxu0
        %1273 = vdwg.mxu0
        %v1274 = vmul.f32 %v1271, 0.35355338
        %v1275 = vadd.f32 %v1274, %v793
        %v1276 = vsel %vm713, %v1275, -inf
        %1277 = vmax.xlane.f32.xlu0 %v1276
        %v1278 = vpop.xlane.xlu0 %1277
        %v1279 = vsub.f32 %v1275, %v1278
        %v1280 = vmul.f32 %v1279, 1.442695
        %v1281 = vpow.pop %v1280
        %v1282 = vsel %vm713, %v1281, 0.0
        %1283 = vadd.xlane.f32.xlu0 %v1282
        %v1284 = vpop.xlane.xlu0 %1283
        %v1285 = vrcp.pop %v1284
        %v1286 = vmul.f32 %v1281, %v1285
        %1287 = vrot.lane.b32.xlu0 %v703, 48
        %v1288 = vpop.permute.xlu0 %1287
        %v1291 = vsel %vm713, %v1286, 0
        %1293 = vmatprep.subr.mxu0 0.0
        %1294 = vmatpush1.msra.mxu0 %v1288
        %1295 = vmatprep.subr.mxu0 0.0
        %1296 = vmatpush1.msra.mxu0 0.0
        %1297 = vmatprep.subr.mxu0 0.0
        %1298 = vmatpush1.msra.mxu0 0.0
        %1299 = vmatprep.subr.mxu0 0.0
        %1300 = vmatpush1.msra.mxu0 0.0
        %1301 = vmatprep.subr.mxu0 0.0
        %1302 = vmatpush1.msra.mxu0 0.0
        %1303 = vmatprep.subr.mxu0 0.0
        %1304 = vmatpush1.msra.mxu0 0.0
        %1305 = vmatprep.subr.mxu0 0.0
        %1306 = vmatpush1.msra.mxu0 0.0
        %1307 = vmatprep.subr.mxu0 0.0
        %1308 = vmatpush1.msra.mxu0 0.0
        %1309 = vmatprep.subr.mxu0 0.0
        %1310 = vmatpush1.msra.mxu0 0.0
        %1311 = vmatprep.subr.mxu0 0.0
        %1312 = vmatpush1.msra.mxu0 0.0
        %1313 = vmatprep.subr.mxu0 0.0
        %1314 = vmatpush1.msra.mxu0 0.0
        %1315 = vmatprep.subr.mxu0 0.0
        %1316 = vmatpush1.msra.mxu0 0.0
        %1317 = vmatprep.subr.mxu0 0.0
        %1318 = vmatpush1.msra.mxu0 0.0
        %1319 = vmatprep.subr.mxu0 0.0
        %1320 = vmatpush1.msra.mxu0 0.0
        %1321 = vmatprep.subr.mxu0 0.0
        %1322 = vmatpush1.msra.mxu0 0.0
        %1323 = vmatprep.subr.mxu0 0.0
        %1324 = vmatpush1.msra.mxu0 0.0
        %1325 = vmatprep.subr.mxu0 0.0
        %1326 = vmatpush1.msra.mxu0 0.0
        %1327 = vmatprep.subr.mxu0 0.0
        %1328 = vmatpush1.msra.mxu0 0.0
        %1329 = vmatprep.subr.mxu0 0.0
        %1330 = vmatpush1.msra.mxu0 0.0
        %1331 = vmatprep.subr.mxu0 0.0
        %1332 = vmatpush1.msra.mxu0 0.0
        %1333 = vmatprep.subr.mxu0 0.0
        %1334 = vmatpush1.msra.mxu0 0.0
        %1335 = vmatprep.subr.mxu0 0.0
        %1336 = vmatpush1.msra.mxu0 0.0
        %1337 = vmatprep.subr.mxu0 0.0
        %1338 = vmatpush1.msra.mxu0 0.0
        %1339 = vmatprep.subr.mxu0 0.0
        %1340 = vmatpush1.msra.mxu0 0.0
        %1341 = vmatprep.subr.mxu0 0.0
        %1342 = vmatpush1.msra.mxu0 0.0
        %1343 = vmatprep.subr.mxu0 0.0
        %1344 = vmatpush1.msra.mxu0 0.0
        %1345 = vmatprep.subr.mxu0 0.0
        %1346 = vmatpush1.msra.mxu0 0.0
        %1347 = vmatprep.subr.mxu0 0.0
        %1348 = vmatpush1.msra.mxu0 0.0
        %1349 = vmatprep.subr.mxu0 0.0
        %1350 = vmatpush1.msra.mxu0 0.0
        %1351 = vmatprep.subr.mxu0 0.0
        %1352 = vmatpush1.msra.mxu0 0.0
        %1353 = vmatprep.subr.mxu0 0.0
        %1354 = vmatpush1.msra.mxu0 0.0
        %1355 = vmatprep.subr.mxu0 0.0
        %1356 = vmatpush1.msra.mxu0 0.0
        %1357 = vmatprep.mubr.f32.mxu0 0.0
        %1358 = vmatmul.mubr.f32.gmra.mrb[0].mxu0 %v1291
        %v1359 = vpop.f32.mrb[0].mxu0
        %v1360 = vadd.f32 0.0, %v1359
        %v1361 = vpop.f32.mrb[0].mxu0
        %1362 = vdwg.mxu0
        %v1364 = vsel %vm713, %v1360, 0
        %1366 = vmatprep.subr.mxu0 0.0
        %1367 = vmatpush1.msra.mxu0 %v708
        %1368 = vmatprep.subr.mxu0 0.0
        %1369 = vmatpush1.msra.mxu0 0.0
        %1370 = vmatprep.subr.mxu0 0.0
        %1371 = vmatpush1.msra.mxu0 0.0
        %1372 = vmatprep.subr.mxu0 0.0
        %1373 = vmatpush1.msra.mxu0 0.0
        %1374 = vmatprep.subr.mxu0 0.0
        %1375 = vmatpush1.msra.mxu0 0.0
        %1376 = vmatprep.subr.mxu0 0.0
        %1377 = vmatpush1.msra.mxu0 0.0
        %1378 = vmatprep.subr.mxu0 0.0
        %1379 = vmatpush1.msra.mxu0 0.0
        %1380 = vmatprep.subr.mxu0 0.0
        %1381 = vmatpush1.msra.mxu0 0.0
        %1382 = vmatprep.subr.mxu0 0.0
        %1383 = vmatpush1.msra.mxu0 0.0
        %1384 = vmatprep.subr.mxu0 0.0
        %1385 = vmatpush1.msra.mxu0 0.0
        %1386 = vmatprep.subr.mxu0 0.0
        %1387 = vmatpush1.msra.mxu0 0.0
        %1388 = vmatprep.subr.mxu0 0.0
        %1389 = vmatpush1.msra.mxu0 0.0
        %1390 = vmatprep.subr.mxu0 0.0
        %1391 = vmatpush1.msra.mxu0 0.0
        %1392 = vmatprep.subr.mxu0 0.0
        %1393 = vmatpush1.msra.mxu0 0.0
        %1394 = vmatprep.subr.mxu0 0.0
        %1395 = vmatpush1.msra.mxu0 0.0
        %1396 = vmatprep.subr.mxu0 0.0
        %1397 = vmatpush1.msra.mxu0 0.0
        %1398 = vmatprep.subr.mxu0 0.0
        %1399 = vmatpush1.msra.mxu0 0.0
        %1400 = vmatprep.subr.mxu0 0.0
        %1401 = vmatpush1.msra.mxu0 0.0
        %1402 = vmatprep.subr.mxu0 0.0
        %1403 = vmatpush1.msra.mxu0 0.0
        %1404 = vmatprep.subr.mxu0 0.0
        %1405 = vmatpush1.msra.mxu0 0.0
        %1406 = vmatprep.subr.mxu0 0.0
        %1407 = vmatpush1.msra.mxu0 0.0
        %1408 = vmatprep.subr.mxu0 0.0
        %1409 = vmatpush1.msra.mxu0 0.0
        %1410 = vmatprep.subr.mxu0 0.0
        %1411 = vmatpush1.msra.mxu0 0.0
        %1412 = vmatprep.subr.mxu0 0.0
        %1413 = vmatpush1.msra.mxu0 0.0
        %1414 = vmatprep.subr.mxu0 0.0
        %1415 = vmatpush1.msra.mxu0 0.0
        %1416 = vmatprep.subr.mxu0 0.0
        %1417 = vmatpush1.msra.mxu0 0.0
        %1418 = vmatprep.subr.mxu0 0.0
        %1419 = vmatpush1.msra.mxu0 0.0
        %1420 = vmatprep.subr.mxu0 0.0
        %1421 = vmatpush1.msra.mxu0 0.0
        %1422 = vmatprep.subr.mxu0 0.0
        %1423 = vmatpush1.msra.mxu0 0.0
        %1424 = vmatprep.subr.mxu0 0.0
        %1425 = vmatpush1.msra.mxu0 0.0
        %1426 = vmatprep.subr.mxu0 0.0
        %1427 = vmatpush1.msra.mxu0 0.0
        %1428 = vmatprep.subr.mxu0 0.0
        %1429 = vmatpush1.msra.mxu0 0.0
        %1430 = vmatprep.mubr.f32.mxu0 0.0
        %1431 = vmatmul.mubr.f32.gmra.mrb[0].mxu0 %v1364
        %v1432 = vpop.f32.mrb[0].mxu0
        %v1433 = vadd.f32 0.0, %v1432
        %v1434 = vpop.f32.mrb[0].mxu0
        %1435 = vdwg.mxu0
        %v1436 = vadd.f32 %v1193, %v1433
        %1437 = vrot.lane.b32.xlu0 %v703, 104
        %v1438 = vpop.permute.xlu0 %1437
        %1439 = vrot.lane.b32.xlu0 %v703, 72
        %v1440 = vpop.permute.xlu0 %1439
        %v1441 = vsel %vm713, %v1438, 0
        %v1443 = vsel %vm713, %v1440, 0
        %1445 = vmatprep.subr.mxu0 0.0
        %1446 = vmatpush1.xpose.msra.mxu0 %v1443
        %1447 = vmatprep.subr.mxu0 0.0
        %1448 = vmatpush1.xpose.msra.mxu0 0.0
        %1449 = vmatprep.subr.mxu0 0.0
        %1450 = vmatpush1.xpose.msra.mxu0 0.0
        %1451 = vmatprep.subr.mxu0 0.0
        %1452 = vmatpush1.xpose.msra.mxu0 0.0
        %1453 = vmatprep.subr.mxu0 0.0
        %1454 = vmatpush1.xpose.msra.mxu0 0.0
        %1455 = vmatprep.subr.mxu0 0.0
        %1456 = vmatpush1.xpose.msra.mxu0 0.0
        %1457 = vmatprep.subr.mxu0 0.0
        %1458 = vmatpush1.xpose.msra.mxu0 0.0
        %1459 = vmatprep.subr.mxu0 0.0
        %1460 = vmatpush1.xpose.msra.mxu0 0.0
        %1461 = vmatprep.subr.mxu0 0.0
        %1462 = vmatpush1.xpose.msra.mxu0 0.0
        %1463 = vmatprep.subr.mxu0 0.0
        %1464 = vmatpush1.xpose.msra.mxu0 0.0
        %1465 = vmatprep.subr.mxu0 0.0
        %1466 = vmatpush1.xpose.msra.mxu0 0.0
        %1467 = vmatprep.subr.mxu0 0.0
        %1468 = vmatpush1.xpose.msra.mxu0 0.0
        %1469 = vmatprep.subr.mxu0 0.0
        %1470 = vmatpush1.xpose.msra.mxu0 0.0
        %1471 = vmatprep.subr.mxu0 0.0
        %1472 = vmatpush1.xpose.msra.mxu0 0.0
        %1473 = vmatprep.subr.mxu0 0.0
        %1474 = vmatpush1.xpose.msra.mxu0 0.0
        %1475 = vmatprep.subr.mxu0 0.0
        %1476 = vmatpush1.xpose.msra.mxu0 0.0
        %1477 = vmatprep.subr.mxu0 0.0
        %1478 = vmatpush1.xpose.msra.mxu0 0.0
        %1479 = vmatprep.subr.mxu0 0.0
        %1480 = vmatpush1.xpose.msra.mxu0 0.0
        %1481 = vmatprep.subr.mxu0 0.0
        %1482 = vmatpush1.xpose.msra.mxu0 0.0
        %1483 = vmatprep.subr.mxu0 0.0
        %1484 = vmatpush1.xpose.msra.mxu0 0.0
        %1485 = vmatprep.subr.mxu0 0.0
        %1486 = vmatpush1.xpose.msra.mxu0 0.0
        %1487 = vmatprep.subr.mxu0 0.0
        %1488 = vmatpush1.xpose.msra.mxu0 0.0
        %1489 = vmatprep.subr.mxu0 0.0
        %1490 = vmatpush1.xpose.msra.mxu0 0.0
        %1491 = vmatprep.subr.mxu0 0.0
        %1492 = vmatpush1.xpose.msra.mxu0 0.0
        %1493 = vmatprep.subr.mxu0 0.0
        %1494 = vmatpush1.xpose.msra.mxu0 0.0
        %1495 = vmatprep.subr.mxu0 0.0
        %1496 = vmatpush1.xpose.msra.mxu0 0.0
        %1497 = vmatprep.subr.mxu0 0.0
        %1498 = vmatpush1.xpose.msra.mxu0 0.0
        %1499 = vmatprep.subr.mxu0 0.0
        %1500 = vmatpush1.xpose.msra.mxu0 0.0
        %1501 = vmatprep.subr.mxu0 0.0
        %1502 = vmatpush1.xpose.msra.mxu0 0.0
        %1503 = vmatprep.subr.mxu0 0.0
        %1504 = vmatpush1.xpose.msra.mxu0 0.0
        %1505 = vmatprep.subr.mxu0 0.0
        %1506 = vmatpush1.xpose.msra.mxu0 0.0
        %1507 = vmatprep.subr.mxu0 0.0
        %1508 = vmatpush1.xpose.msra.mxu0 0.0
        %1509 = vmatprep.mubr.f32.mxu0 0.0
        %1510 = vmatmul.mubr.f32.gmra.mrb[0].mxu0 %v1441
        %v1511 = vpop.f32.mrb[0].mxu0
        %v1512 = vadd.f32 0.0, %v1511
        %v1513 = vpop.f32.mrb[0].mxu0
        %1514 = vdwg.mxu0
        %v1515 = vmul.f32 %v1512, 0.35355338
        %v1516 = vadd.f32 %v1515, %v793
        %v1517 = vsel %vm713, %v1516, -inf
        %1518 = vmax.xlane.f32.xlu0 %v1517
        %v1519 = vpop.xlane.xlu0 %1518
        %v1520 = vsub.f32 %v1516, %v1519
        %v1521 = vmul.f32 %v1520, 1.442695
        %v1522 = vpow.pop %v1521
        %v1523 = vsel %vm713, %v1522, 0.0
        %1524 = vadd.xlane.f32.xlu0 %v1523
        %v1525 = vpop.xlane.xlu0 %1524
        %v1526 = vrcp.pop %v1525
        %v1527 = vmul.f32 %v1522, %v1526
        %1528 = vrot.lane.b32.xlu0 %v703, 40
        %v1529 = vpop.permute.xlu0 %1528
        %v1532 = vsel %vm713, %v1527, 0
        %1534 = vmatprep.subr.mxu0 0.0
        %1535 = vmatpush1.msra.mxu0 %v1529
        %1536 = vmatprep.subr.mxu0 0.0
        %1537 = vmatpush1.msra.mxu0 0.0
        %1538 = vmatprep.subr.mxu0 0.0
        %1539 = vmatpush1.msra.mxu0 0.0
        %1540 = vmatprep.subr.mxu0 0.0
        %1541 = vmatpush1.msra.mxu0 0.0
        %1542 = vmatprep.subr.mxu0 0.0
        %1543 = vmatpush1.msra.mxu0 0.0
        %1544 = vmatprep.subr.mxu0 0.0
        %1545 = vmatpush1.msra.mxu0 0.0
        %1546 = vmatprep.subr.mxu0 0.0
        %1547 = vmatpush1.msra.mxu0 0.0
        %1548 = vmatprep.subr.mxu0 0.0
        %1549 = vmatpush1.msra.mxu0 0.0
        %1550 = vmatprep.subr.mxu0 0.0
        %1551 = vmatpush1.msra.mxu0 0.0
        %1552 = vmatprep.subr.mxu0 0.0
        %1553 = vmatpush1.msra.mxu0 0.0
        %1554 = vmatprep.subr.mxu0 0.0
        %1555 = vmatpush1.msra.mxu0 0.0
        %1556 = vmatprep.subr.mxu0 0.0
        %1557 = vmatpush1.msra.mxu0 0.0
        %1558 = vmatprep.subr.mxu0 0.0
        %1559 = vmatpush1.msra.mxu0 0.0
        %1560 = vmatprep.subr.mxu0 0.0
        %1561 = vmatpush1.msra.mxu0 0.0
        %1562 = vmatprep.subr.mxu0 0.0
        %1563 = vmatpush1.msra.mxu0 0.0
        %1564 = vmatprep.subr.mxu0 0.0
        %1565 = vmatpush1.msra.mxu0 0.0
        %1566 = vmatprep.subr.mxu0 0.0
        %1567 = vmatpush1.msra.mxu0 0.0
        %1568 = vmatprep.subr.mxu0 0.0
        %1569 = vmatpush1.msra.mxu0 0.0
        %1570 = vmatprep.subr.mxu0 0.0
        %1571 = vmatpush1.msra.mxu0 0.0
        %1572 = vmatprep.subr.mxu0 0.0
        %1573 = vmatpush1.msra.mxu0 0.0
        %1574 = vmatprep.subr.mxu0 0.0
        %1575 = vmatpush1.msra.mxu0 0.0
        %1576 = vmatprep.subr.mxu0 0.0
        %1577 = vmatpush1.msra.mxu0 0.0
        %1578 = vmatprep.subr.mxu0 0.0
        %1579 = vmatpush1.msra.mxu0 0.0
        %1580 = vmatprep.subr.mxu0 0.0
        %1581 = vmatpush1.msra.mxu0 0.0
        %1582 = vmatprep.subr.mxu0 0.0
        %1583 = vmatpush1.msra.mxu0 0.0
        %1584 = vmatprep.subr.mxu0 0.0
        %1585 = vmatpush1.msra.mxu0 0.0
        %1586 = vmatprep.subr.mxu0 0.0
        %1587 = vmatpush1.msra.mxu0 0.0
        %1588 = vmatprep.subr.mxu0 0.0
        %1589 = vmatpush1.msra.mxu0 0.0
        %1590 = vmatprep.subr.mxu0 0.0
        %1591 = vmatpush1.msra.mxu0 0.0
        %1592 = vmatprep.subr.mxu0 0.0
        %1593 = vmatpush1.msra.mxu0 0.0
        %1594 = vmatprep.subr.mxu0 0.0
        %1595 = vmatpush1.msra.mxu0 0.0
        %1596 = vmatprep.subr.mxu0 0.0
        %1597 = vmatpush1.msra.mxu0 0.0
        %1598 = vmatprep.mubr.f32.mxu0 0.0
        %1599 = vmatmul.mubr.f32.gmra.mrb[0].mxu0 %v1532
        %v1600 = vpop.f32.mrb[0].mxu0
        %v1601 = vadd.f32 0.0, %v1600
        %v1602 = vpop.f32.mrb[0].mxu0
        %1603 = vdwg.mxu0
        %v1605 = vsel %vm713, %v1601, 0
        %1607 = vmatprep.subr.mxu0 0.0
        %1608 = vmatpush1.msra.mxu0 %v709
        %1609 = vmatprep.subr.mxu0 0.0
        %1610 = vmatpush1.msra.mxu0 0.0
        %1611 = vmatprep.subr.mxu0 0.0
        %1612 = vmatpush1.msra.mxu0 0.0
        %1613 = vmatprep.subr.mxu0 0.0
        %1614 = vmatpush1.msra.mxu0 0.0
        %1615 = vmatprep.subr.mxu0 0.0
        %1616 = vmatpush1.msra.mxu0 0.0
        %1617 = vmatprep.subr.mxu0 0.0
        %1618 = vmatpush1.msra.mxu0 0.0
        %1619 = vmatprep.subr.mxu0 0.0
        %1620 = vmatpush1.msra.mxu0 0.0
        %1621 = vmatprep.subr.mxu0 0.0
        %1622 = vmatpush1.msra.mxu0 0.0
        %1623 = vmatprep.subr.mxu0 0.0
        %1624 = vmatpush1.msra.mxu0 0.0
        %1625 = vmatprep.subr.mxu0 0.0
        %1626 = vmatpush1.msra.mxu0 0.0
        %1627 = vmatprep.subr.mxu0 0.0
        %1628 = vmatpush1.msra.mxu0 0.0
        %1629 = vmatprep.subr.mxu0 0.0
        %1630 = vmatpush1.msra.mxu0 0.0
        %1631 = vmatprep.subr.mxu0 0.0
        %1632 = vmatpush1.msra.mxu0 0.0
        %1633 = vmatprep.subr.mxu0 0.0
        %1634 = vmatpush1.msra.mxu0 0.0
        %1635 = vmatprep.subr.mxu0 0.0
        %1636 = vmatpush1.msra.mxu0 0.0
        %1637 = vmatprep.subr.mxu0 0.0
        %1638 = vmatpush1.msra.mxu0 0.0
        %1639 = vmatprep.subr.mxu0 0.0
        %1640 = vmatpush1.msra.mxu0 0.0
        %1641 = vmatprep.subr.mxu0 0.0
        %1642 = vmatpush1.msra.mxu0 0.0
        %1643 = vmatprep.subr.mxu0 0.0
        %1644 = vmatpush1.msra.mxu0 0.0
        %1645 = vmatprep.subr.mxu0 0.0
        %1646 = vmatpush1.msra.mxu0 0.0
        %1647 = vmatprep.subr.mxu0 0.0
        %1648 = vmatpush1.msra.mxu0 0.0
        %1649 = vmatprep.subr.mxu0 0.0
        %1650 = vmatpush1.msra.mxu0 0.0
        %1651 = vmatprep.subr.mxu0 0.0
        %1652 = vmatpush1.msra.mxu0 0.0
        %1653 = vmatprep.subr.mxu0 0.0
        %1654 = vmatpush1.msra.mxu0 0.0
        %1655 = vmatprep.subr.mxu0 0.0
        %1656 = vmatpush1.msra.mxu0 0.0
        %1657 = vmatprep.subr.mxu0 0.0
        %1658 = vmatpush1.msra.mxu0 0.0
        %1659 = vmatprep.subr.mxu0 0.0
        %1660 = vmatpush1.msra.mxu0 0.0
        %1661 = vmatprep.subr.mxu0 0.0
        %1662 = vmatpush1.msra.mxu0 0.0
        %1663 = vmatprep.subr.mxu0 0.0
        %1664 = vmatpush1.msra.mxu0 0.0
        %1665 = vmatprep.subr.mxu0 0.0
        %1666 = vmatpush1.msra.mxu0 0.0
        %1667 = vmatprep.subr.mxu0 0.0
        %1668 = vmatpush1.msra.mxu0 0.0
        %1669 = vmatprep.subr.mxu0 0.0
        %1670 = vmatpush1.msra.mxu0 0.0
        %1671 = vmatprep.mubr.f32.mxu0 0.0
        %1672 = vmatmul.mubr.f32.gmra.mrb[0].mxu0 %v1605
        %v1673 = vpop.f32.mrb[0].mxu0
        %v1674 = vadd.f32 0.0, %v1673
        %v1675 = vpop.f32.mrb[0].mxu0
        %1676 = vdwg.mxu0
        %v1677 = vadd.f32 %v1436, %v1674
        %v1678 = vld [vmem:[%s7] sm:$0x1]
        %v1680 = vlaneseq
        %v1681 = vshrl.u32 %v1680, 7
        %v1682 = vsub.s32 0, %v1681
        %v1683 = vrot.slane %v1678, %v1682
        %v1685 = vadd.f32 %v1677, %v1683
        %v1686 = vadd.f32 %v1685, %v618
        %v1687 = vld [vmem:[%s8] sm:$0x1]
        %v1688 = vld [vmem:[%s9] sm:$0x1]
        %v1689 = vsel %vm590, %v1686, 0.0
        %1690 = vadd.xlane.f32.xlu0 %v1689
        %v1691 = vpop.xlane.xlu0 %1690
        %v1692 = vmul.f32 %v1691, %v594
        %v1693 = vsub.f32 %v1686, %v1692
        %v1694 = vmul.f32 %v1693, %v1693
        %v1695 = vsel %vm590, %v1694, 0.0
        %1696 = vadd.xlane.f32.xlu0 %v1695
        %v1697 = vpop.xlane.xlu0 %1696
        %v1698 = vmul.f32 %v1697, %v594
        %v1699 = vadd.f32 %v1698, 1e-12
        %v1700 = vrsqrt.pop %v1699
        %v1701 = vmul.f32 %v1693, %v1700
        %v1703 = vlaneseq
        %v1704 = vshrl.u32 %v1703, 7
        %v1705 = vsub.s32 0, %v1704
        %v1706 = vrot.slane %v1687, %v1705
        %v1708 = vmul.f32 %v1701, %v1706
        %v1710 = vlaneseq
        %v1711 = vshrl.u32 %v1710, 7
        %v1712 = vsub.s32 0, %v1711
        %v1713 = vrot.slane %v1688, %v1712
        %v1715 = vadd.f32 %v1708, %v1713
        %v1716 = vld [vmem:[#allocation2] sm:$0xff]
        %v1717 = vld [vmem:[#allocation2 + $0x8] sm:$0xff]
        %v1718 = vld [vmem:[#allocation2 + $0x10] sm:$0xff]
        %v1719 = vld [vmem:[#allocation2 + $0x18] sm:$0xff]
        %v1720 = vld [vmem:[%s11] sm:$0x1]
        %v1722 = vlaneseq
        %v1723 = vshrl.u32 %v1722, 7
        %v1724 = vsub.s32 0, %v1723
        %v1725 = vrot.slane %v1720, %v1724
        %v1728 = vsel %vm590, %v1715, 0
        %1730 = vmatprep.subr.mxu0 0.0
        %1731 = vmatpush1.msra.mxu0 %v1716
        %1732 = vmatprep.subr.mxu0 0.0
        %1733 = vmatpush1.msra.mxu0 %v1717
        %1734 = vmatprep.subr.mxu0 0.0
        %1735 = vmatpush1.msra.mxu0 %v1718
        %1736 = vmatprep.subr.mxu0 0.0
        %1737 = vmatpush1.msra.mxu0 %v1719
        %1738 = vmatprep.subr.mxu0 0.0
        %1739 = vmatpush1.msra.mxu0 0.0
        %1740 = vmatprep.subr.mxu0 0.0
        %1741 = vmatpush1.msra.mxu0 0.0
        %1742 = vmatprep.subr.mxu0 0.0
        %1743 = vmatpush1.msra.mxu0 0.0
        %1744 = vmatprep.subr.mxu0 0.0
        %1745 = vmatpush1.msra.mxu0 0.0
        %1746 = vmatprep.subr.mxu0 0.0
        %1747 = vmatpush1.msra.mxu0 0.0
        %1748 = vmatprep.subr.mxu0 0.0
        %1749 = vmatpush1.msra.mxu0 0.0
        %1750 = vmatprep.subr.mxu0 0.0
        %1751 = vmatpush1.msra.mxu0 0.0
        %1752 = vmatprep.subr.mxu0 0.0
        %1753 = vmatpush1.msra.mxu0 0.0
        %1754 = vmatprep.subr.mxu0 0.0
        %1755 = vmatpush1.msra.mxu0 0.0
        %1756 = vmatprep.subr.mxu0 0.0
        %1757 = vmatpush1.msra.mxu0 0.0
        %1758 = vmatprep.subr.mxu0 0.0
        %1759 = vmatpush1.msra.mxu0 0.0
        %1760 = vmatprep.subr.mxu0 0.0
        %1761 = vmatpush1.msra.mxu0 0.0
        %1762 = vmatprep.subr.mxu0 0.0
        %1763 = vmatpush1.msra.mxu0 0.0
        %1764 = vmatprep.subr.mxu0 0.0
        %1765 = vmatpush1.msra.mxu0 0.0
        %1766 = vmatprep.subr.mxu0 0.0
        %1767 = vmatpush1.msra.mxu0 0.0
        %1768 = vmatprep.subr.mxu0 0.0
        %1769 = vmatpush1.msra.mxu0 0.0
        %1770 = vmatprep.subr.mxu0 0.0
        %1771 = vmatpush1.msra.mxu0 0.0
        %1772 = vmatprep.subr.mxu0 0.0
        %1773 = vmatpush1.msra.mxu0 0.0
        %1774 = vmatprep.subr.mxu0 0.0
        %1775 = vmatpush1.msra.mxu0 0.0
        %1776 = vmatprep.subr.mxu0 0.0
        %1777 = vmatpush1.msra.mxu0 0.0
        %1778 = vmatprep.subr.mxu0 0.0
        %1779 = vmatpush1.msra.mxu0 0.0
        %1780 = vmatprep.subr.mxu0 0.0
        %1781 = vmatpush1.msra.mxu0 0.0
        %1782 = vmatprep.subr.mxu0 0.0
        %1783 = vmatpush1.msra.mxu0 0.0
        %1784 = vmatprep.subr.mxu0 0.0
        %1785 = vmatpush1.msra.mxu0 0.0
        %1786 = vmatprep.subr.mxu0 0.0
        %1787 = vmatpush1.msra.mxu0 0.0
        %1788 = vmatprep.subr.mxu0 0.0
        %1789 = vmatpush1.msra.mxu0 0.0
        %1790 = vmatprep.subr.mxu0 0.0
        %1791 = vmatpush1.msra.mxu0 0.0
        %1792 = vmatprep.subr.mxu0 0.0
        %1793 = vmatpush1.msra.mxu0 0.0
        %1794 = vmatprep.mubr.f32.mxu0 0.0
        %1795 = vmatmul.mubr.f32.gmra.mrb[0].mxu0 %v1728
        %v1796 = vpop.f32.mrb[0].mxu0
        %v1797 = vadd.f32 %v1725, %v1796
        %v1798 = vpop.f32.mrb[0].mxu0
        %1799 = vdwg.mxu0
        %v1800 = vmul.f32 %v1797, 0.5
        %v1801 = vmul.f32 %v1797, 0.044715
        %v1802 = vmul.f32 %v1801, %v1797
        %v1803 = vmul.f32 %v1802, %v1797
        %v1804 = vadd.f32 %v1797, %v1803
        %v1805 = vmul.f32 %v1804, 0.7978846
        %v1806 = vtanh.pop %v1805
        %v1807 = vadd.f32 %v1806, 1.0
        %v1808 = vmul.f32 %v1800, %v1807
        %v1809 = vld [vmem:[%s12] sm:$0xff]
        %v1810 = vld [vmem:[%s12 + $0x8] sm:$0xff]
        %v1811 = vld [vmem:[%s12 + $0x10] sm:$0xff]
        %v1812 = vld [vmem:[%s12 + $0x18] sm:$0xff]
        %v1813 = vld [vmem:[%s12 + $0x20] sm:$0xff]
        %v1814 = vld [vmem:[%s12 + $0x28] sm:$0xff]
        %v1815 = vld [vmem:[%s12 + $0x30] sm:$0xff]
        %v1816 = vld [vmem:[%s12 + $0x38] sm:$0xff]
        %v1817 = vld [vmem:[%s13] sm:$0x1]
        %v1819 = vlaneseq
        %v1820 = vshrl.u32 %v1819, 7
        %v1821 = vsub.s32 0, %v1820
        %v1822 = vrot.slane %v1817, %v1821
        %vm1824 = vcmask 523264
        %v1826 = vsel %vm1824, %v1808, 0
        %1828 = vmatprep.subr.mxu0 0.0
        %1829 = vmatpush1.msra.mxu0 %v1809
        %1830 = vmatprep.subr.mxu0 0.0
        %1831 = vmatpush1.msra.mxu0 %v1810
        %1832 = vmatprep.subr.mxu0 0.0
        %1833 = vmatpush1.msra.mxu0 %v1811
        %1834 = vmatprep.subr.mxu0 0.0
        %1835 = vmatpush1.msra.mxu0 %v1812
        %1836 = vmatprep.subr.mxu0 0.0
        %1837 = vmatpush1.msra.mxu0 %v1813
        %1838 = vmatprep.subr.mxu0 0.0
        %1839 = vmatpush1.msra.mxu0 %v1814
        %1840 = vmatprep.subr.mxu0 0.0
        %1841 = vmatpush1.msra.mxu0 %v1815
        %1842 = vmatprep.subr.mxu0 0.0
        %1843 = vmatpush1.msra.mxu0 %v1816
        %1844 = vmatprep.subr.mxu0 0.0
        %1845 = vmatpush1.msra.mxu0 0.0
        %1846 = vmatprep.subr.mxu0 0.0
        %1847 = vmatpush1.msra.mxu0 0.0
        %1848 = vmatprep.subr.mxu0 0.0
        %1849 = vmatpush1.msra.mxu0 0.0
        %1850 = vmatprep.subr.mxu0 0.0
        %1851 = vmatpush1.msra.mxu0 0.0
        %1852 = vmatprep.subr.mxu0 0.0
        %1853 = vmatpush1.msra.mxu0 0.0
        %1854 = vmatprep.subr.mxu0 0.0
        %1855 = vmatpush1.msra.mxu0 0.0
        %1856 = vmatprep.subr.mxu0 0.0
        %1857 = vmatpush1.msra.mxu0 0.0
        %1858 = vmatprep.subr.mxu0 0.0
        %1859 = vmatpush1.msra.mxu0 0.0
        %1860 = vmatprep.subr.mxu0 0.0
        %1861 = vmatpush1.msra.mxu0 0.0
        %1862 = vmatprep.subr.mxu0 0.0
        %1863 = vmatpush1.msra.mxu0 0.0
        %1864 = vmatprep.subr.mxu0 0.0
        %1865 = vmatpush1.msra.mxu0 0.0
        %1866 = vmatprep.subr.mxu0 0.0
        %1867 = vmatpush1.msra.mxu0 0.0
        %1868 = vmatprep.subr.mxu0 0.0
        %1869 = vmatpush1.msra.mxu0 0.0
        %1870 = vmatprep.subr.mxu0 0.0
        %1871 = vmatpush1.msra.mxu0 0.0
        %1872 = vmatprep.subr.mxu0 0.0
        %1873 = vmatpush1.msra.mxu0 0.0
        %1874 = vmatprep.subr.mxu0 0.0
        %1875 = vmatpush1.msra.mxu0 0.0
        %1876 = vmatprep.subr.mxu0 0.0
        %1877 = vmatpush1.msra.mxu0 0.0
        %1878 = vmatprep.subr.mxu0 0.0
        %1879 = vmatpush1.msra.mxu0 0.0
        %1880 = vmatprep.subr.mxu0 0.0
        %1881 = vmatpush1.msra.mxu0 0.0
        %1882 = vmatprep.subr.mxu0 0.0
        %1883 = vmatpush1.msra.mxu0 0.0
        %1884 = vmatprep.subr.mxu0 0.0
        %1885 = vmatpush1.msra.mxu0 0.0
        %1886 = vmatprep.subr.mxu0 0.0
        %1887 = vmatpush1.msra.mxu0 0.0
        %1888 = vmatprep.subr.mxu0 0.0
        %1889 = vmatpush1.msra.mxu0 0.0
        %1890 = vmatprep.subr.mxu0 0.0
        %1891 = vmatpush1.msra.mxu0 0.0
        %1892 = vmatprep.mubr.f32.mxu0 0.0
        %1893 = vmatmul.mubr.f32.gmra.mrb[0].mxu0 %v1826
        %v1894 = vpop.f32.mrb[0].mxu0
        %v1895 = vadd.f32 %v1822, %v1894
        %v1896 = vpop.f32.mrb[0].mxu0
        %1897 = vdwg.mxu0
        %v1898 = vadd.f32 %v1895, %v1715
        %v1899 = vld [vmem:[%s14] sm:$0x1]
        %v1900 = vld [vmem:[%s15] sm:$0x1]
        %v1901 = vsel %vm590, %v1898, 0.0
        %1902 = vadd.xlane.f32.xlu0 %v1901
        %v1903 = vpop.xlane.xlu0 %1902
        %v1904 = vmul.f32 %v1903, %v594
        %v1905 = vsub.f32 %v1898, %v1904
        %v1906 = vmul.f32 %v1905, %v1905
        %v1907 = vsel %vm590, %v1906, 0.0
        %1908 = vadd.xlane.f32.xlu0 %v1907
        %v1909 = vpop.xlane.xlu0 %1908
        %v1910 = vmul.f32 %v1909, %v594
        %v1911 = vadd.f32 %v1910, 1e-12
        %v1912 = vrsqrt.pop %v1911
        %v1913 = vmul.f32 %v1905, %v1912
        %v1915 = vlaneseq
        %v1916 = vshrl.u32 %v1915, 7
        %v1917 = vsub.s32 0, %v1916
        %v1918 = vrot.slane %v1899, %v1917
        %v1920 = vmul.f32 %v1913, %v1918
        %v1922 = vlaneseq
        %v1923 = vshrl.u32 %v1922, 7
        %v1924 = vsub.s32 0, %v1923
        %v1925 = vrot.slane %v1900, %v1924
        %v1927 = vadd.f32 %v1920, %v1925
        %s1928 = scalar_lea.vmem %s4, 32
        %v1929 = vld [vmem:[%s1928] sm:$0xff]
        %v1930 = vld [vmem:[%s1928 + $0x8] sm:$0xff]
        %v1931 = vld [vmem:[%s1928 + $0x10] sm:$0xff]
        %v1932 = vld [vmem:[%s1928 + $0x18] sm:$0xff]
        %s1933 = scalar_lea.vmem %s5, 1
        %v1934 = vld [vmem:[%s1933] sm:$0x1]
        %v1936 = vlaneseq
        %v1937 = vshrl.u32 %v1936, 7
        %v1938 = vsub.s32 0, %v1937
        %v1939 = vrot.slane %v1934, %v1938
        %v1942 = vsel %vm590, %v1927, 0
        %1944 = vmatprep.subr.mxu0 0.0
        %1945 = vmatpush1.msra.mxu0 %v1929
        %1946 = vmatprep.subr.mxu0 0.0
        %1947 = vmatpush1.msra.mxu0 %v1930
        %1948 = vmatprep.subr.mxu0 0.0
        %1949 = vmatpush1.msra.mxu0 %v1931
        %1950 = vmatprep.subr.mxu0 0.0
        %1951 = vmatpush1.msra.mxu0 %v1932
        %1952 = vmatprep.subr.mxu0 0.0
        %1953 = vmatpush1.msra.mxu0 0.0
        %1954 = vmatprep.subr.mxu0 0.0
        %1955 = vmatpush1.msra.mxu0 0.0
        %1956 = vmatprep.subr.mxu0 0.0
        %1957 = vmatpush1.msra.mxu0 0.0
        %1958 = vmatprep.subr.mxu0 0.0
        %1959 = vmatpush1.msra.mxu0 0.0
        %1960 = vmatprep.subr.mxu0 0.0
        %1961 = vmatpush1.msra.mxu0 0.0
        %1962 = vmatprep.subr.mxu0 0.0
        %1963 = vmatpush1.msra.mxu0 0.0
        %1964 = vmatprep.subr.mxu0 0.0
        %1965 = vmatpush1.msra.mxu0 0.0
        %1966 = vmatprep.subr.mxu0 0.0
        %1967 = vmatpush1.msra.mxu0 0.0
        %1968 = vmatprep.subr.mxu0 0.0
        %1969 = vmatpush1.msra.mxu0 0.0
        %1970 = vmatprep.subr.mxu0 0.0
        %1971 = vmatpush1.msra.mxu0 0.0
        %1972 = vmatprep.subr.mxu0 0.0
        %1973 = vmatpush1.msra.mxu0 0.0
        %1974 = vmatprep.subr.mxu0 0.0
        %1975 = vmatpush1.msra.mxu0 0.0
        %1976 = vmatprep.subr.mxu0 0.0
        %1977 = vmatpush1.msra.mxu0 0.0
        %1978 = vmatprep.subr.mxu0 0.0
        %1979 = vmatpush1.msra.mxu0 0.0
        %1980 = vmatprep.subr.mxu0 0.0
        %1981 = vmatpush1.msra.mxu0 0.0
        %1982 = vmatprep.subr.mxu0 0.0
        %1983 = vmatpush1.msra.mxu0 0.0
        %1984 = vmatprep.subr.mxu0 0.0
        %1985 = vmatpush1.msra.mxu0 0.0
        %1986 = vmatprep.subr.mxu0 0.0
        %1987 = vmatpush1.msra.mxu0 0.0
        %1988 = vmatprep.subr.mxu0 0.0
        %1989 = vmatpush1.msra.mxu0 0.0
        %1990 = vmatprep.subr.mxu0 0.0
        %1991 = vmatpush1.msra.mxu0 0.0
        %1992 = vmatprep.subr.mxu0 0.0
        %1993 = vmatpush1.msra.mxu0 0.0
        %1994 = vmatprep.subr.mxu0 0.0
        %1995 = vmatpush1.msra.mxu0 0.0
        %1996 = vmatprep.subr.mxu0 0.0
        %1997 = vmatpush1.msra.mxu0 0.0
        %1998 = vmatprep.subr.mxu0 0.0
        %1999 = vmatpush1.msra.mxu0 0.0
        %2000 = vmatprep.subr.mxu0 0.0
        %2001 = vmatpush1.msra.mxu0 0.0
        %2002 = vmatprep.subr.mxu0 0.0
        %2003 = vmatpush1.msra.mxu0 0.0
        %2004 = vmatprep.subr.mxu0 0.0
        %2005 = vmatpush1.msra.mxu0 0.0
        %2006 = vmatprep.subr.mxu0 0.0
        %2007 = vmatpush1.msra.mxu0 0.0
        %2008 = vmatprep.mubr.f32.mxu0 0.0
        %2009 = vmatmul.mubr.f32.gmra.mrb[0].mxu0 %v1942
        %v2010 = vpop.f32.mrb[0].mxu0
        %v2011 = vadd.f32 %v1939, %v2010
        %v2012 = vpop.f32.mrb[0].mxu0
        %2013 = vdwg.mxu0
        %s2014 = scalar_lea.vmem %s6, 32
        %v2015 = vld [vmem:[%s2014] sm:$0xff]
        %v2016 = vld [vmem:[%s2014 + $0x8] sm:$0xff]
        %v2017 = vld [vmem:[%s2014 + $0x10] sm:$0xff]
        %v2018 = vld [vmem:[%s2014 + $0x18] sm:$0xff]
        %2020 = vrot.lane.b32.xlu0 %v2011, 96
        %v2021 = vpop.permute.xlu0 %2020
        %v2022 = vsel %vm713, %v2011, 0
        %v2024 = vsel %vm713, %v2021, 0
        %2026 = vmatprep.subr.mxu0 0.0
        %2027 = vmatpush1.xpose.msra.mxu0 %v2024
        %2028 = vmatprep.subr.mxu0 0.0
        %2029 = vmatpush1.xpose.msra.mxu0 0.0
        %2030 = vmatprep.subr.mxu0 0.0
        %2031 = vmatpush1.xpose.msra.mxu0 0.0
        %2032 = vmatprep.subr.mxu0 0.0
        %2033 = vmatpush1.xpose.msra.mxu0 0.0
        %2034 = vmatprep.subr.mxu0 0.0
        %2035 = vmatpush1.xpose.msra.mxu0 0.0
        %2036 = vmatprep.subr.mxu0 0.0
        %2037 = vmatpush1.xpose.msra.mxu0 0.0
        %2038 = vmatprep.subr.mxu0 0.0
        %2039 = vmatpush1.xpose.msra.mxu0 0.0
        %2040 = vmatprep.subr.mxu0 0.0
        %2041 = vmatpush1.xpose.msra.mxu0 0.0
        %2042 = vmatprep.subr.mxu0 0.0
        %2043 = vmatpush1.xpose.msra.mxu0 0.0
        %2044 = vmatprep.subr.mxu0 0.0
        %2045 = vmatpush1.xpose.msra.mxu0 0.0
        %2046 = vmatprep.subr.mxu0 0.0
        %2047 = vmatpush1.xpose.msra.mxu0 0.0
        %2048 = vmatprep.subr.mxu0 0.0
        %2049 = vmatpush1.xpose.msra.mxu0 0.0
        %2050 = vmatprep.subr.mxu0 0.0
        %2051 = vmatpush1.xpose.msra.mxu0 0.0
        %2052 = vmatprep.subr.mxu0 0.0
        %2053 = vmatpush1.xpose.msra.mxu0 0.0
        %2054 = vmatprep.subr.mxu0 0.0
        %2055 = vmatpush1.xpose.msra.mxu0 0.0
        %2056 = vmatprep.subr.mxu0 0.0
        %2057 = vmatpush1.xpose.msra.mxu0 0.0
        %2058 = vmatprep.subr.mxu0 0.0
        %2059 = vmatpush1.xpose.msra.mxu0 0.0
        %2060 = vmatprep.subr.mxu0 0.0
        %2061 = vmatpush1.xpose.msra.mxu0 0.0
        %2062 = vmatprep.subr.mxu0 0.0
        %2063 = vmatpush1.xpose.msra.mxu0 0.0
        %2064 = vmatprep.subr.mxu0 0.0
        %2065 = vmatpush1.xpose.msra.mxu0 0.0
        %2066 = vmatprep.subr.mxu0 0.0
        %2067 = vmatpush1.xpose.msra.mxu0 0.0
        %2068 = vmatprep.subr.mxu0 0.0
        %2069 = vmatpush1.xpose.msra.mxu0 0.0
        %2070 = vmatprep.subr.mxu0 0.0
        %2071 = vmatpush1.xpose.msra.mxu0 0.0
        %2072 = vmatprep.subr.mxu0 0.0
        %2073 = vmatpush1.xpose.msra.mxu0 0.0
        %2074 = vmatprep.subr.mxu0 0.0
        %2075 = vmatpush1.xpose.msra.mxu0 0.0
        %2076 = vmatprep.subr.mxu0 0.0
        %2077 = vmatpush1.xpose.msra.mxu0 0.0
        %2078 = vmatprep.subr.mxu0 0.0
        %2079 = vmatpush1.xpose.msra.mxu0 0.0
        %2080 = vmatprep.subr.mxu0 0.0
        %2081 = vmatpush1.xpose.msra.mxu0 0.0
        %2082 = vmatprep.subr.mxu0 0.0
        %2083 = vmatpush1.xpose.msra.mxu0 0.0
        %2084 = vmatprep.subr.mxu0 0.0
        %2085 = vmatpush1.xpose.msra.mxu0 0.0
        %2086 = vmatprep.subr.mxu0 0.0
        %2087 = vmatpush1.xpose.msra.mxu0 0.0
        %2088 = vmatprep.subr.mxu0 0.0
        %2089 = vmatpush1.xpose.msra.mxu0 0.0
        %2090 = vmatprep.mubr.f32.mxu0 0.0
        %2091 = vmatmul.mubr.f32.gmra.mrb[0].mxu0 %v2022
        %v2092 = vpop.f32.mrb[0].mxu0
        %v2093 = vadd.f32 0.0, %v2092
        %v2094 = vpop.f32.mrb[0].mxu0
        %2095 = vdwg.mxu0
        %v2096 = vmul.f32 %v2093, 0.35355338
        %v2097 = vadd.f32 %v2096, %v793
        %v2098 = vsel %vm713, %v2097, -inf
        %2099 = vmax.xlane.f32.xlu0 %v2098
        %v2100 = vpop.xlane.xlu0 %2099
        %v2101 = vsub.f32 %v2097, %v2100
        %v2102 = vmul.f32 %v2101, 1.442695
        %v2103 = vpow.pop %v2102
        %v2104 = vsel %vm713, %v2103, 0.0
        %2105 = vadd.xlane.f32.xlu0 %v2104
        %v2106 = vpop.xlane.xlu0 %2105
        %v2107 = vrcp.pop %v2106
        %v2108 = vmul.f32 %v2103, %v2107
        %2109 = vrot.lane.b32.xlu0 %v2011, 64
        %v2110 = vpop.permute.xlu0 %2109
        %v2113 = vsel %vm713, %v2108, 0
        %2115 = vmatprep.subr.mxu0 0.0
        %2116 = vmatpush1.msra.mxu0 %v2110
        %2117 = vmatprep.subr.mxu0 0.0
        %2118 = vmatpush1.msra.mxu0 0.0
        %2119 = vmatprep.subr.mxu0 0.0
        %2120 = vmatpush1.msra.mxu0 0.0
        %2121 = vmatprep.subr.mxu0 0.0
        %2122 = vmatpush1.msra.mxu0 0.0
        %2123 = vmatprep.subr.mxu0 0.0
        %2124 = vmatpush1.msra.mxu0 0.0
        %2125 = vmatprep.subr.mxu0 0.0
        %2126 = vmatpush1.msra.mxu0 0.0
        %2127 = vmatprep.subr.mxu0 0.0
        %2128 = vmatpush1.msra.mxu0 0.0
        %2129 = vmatprep.subr.mxu0 0.0
        %2130 = vmatpush1.msra.mxu0 0.0
        %2131 = vmatprep.subr.mxu0 0.0
        %2132 = vmatpush1.msra.mxu0 0.0
        %2133 = vmatprep.subr.mxu0 0.0
        %2134 = vmatpush1.msra.mxu0 0.0
        %2135 = vmatprep.subr.mxu0 0.0
        %2136 = vmatpush1.msra.mxu0 0.0
        %2137 = vmatprep.subr.mxu0 0.0
        %2138 = vmatpush1.msra.mxu0 0.0
        %2139 = vmatprep.subr.mxu0 0.0
        %2140 = vmatpush1.msra.mxu0 0.0
        %2141 = vmatprep.subr.mxu0 0.0
        %2142 = vmatpush1.msra.mxu0 0.0
        %2143 = vmatprep.subr.mxu0 0.0
        %2144 = vmatpush1.msra.mxu0 0.0
        %2145 = vmatprep.subr.mxu0 0.0
        %2146 = vmatpush1.msra.mxu0 0.0
        %2147 = vmatprep.subr.mxu0 0.0
        %2148 = vmatpush1.msra.mxu0 0.0
        %2149 = vmatprep.subr.mxu0 0.0
        %2150 = vmatpush1.msra.mxu0 0.0
        %2151 = vmatprep.subr.mxu0 0.0
        %2152 = vmatpush1.msra.mxu0 0.0
        %2153 = vmatprep.subr.mxu0 0.0
        %2154 = vmatpush1.msra.mxu0 0.0
        %2155 = vmatprep.subr.mxu0 0.0
        %2156 = vmatpush1.msra.mxu0 0.0
        %2157 = vmatprep.subr.mxu0 0.0
        %2158 = vmatpush1.msra.mxu0 0.0
        %2159 = vmatprep.subr.mxu0 0.0
        %2160 = vmatpush1.msra.mxu0 0.0
        %2161 = vmatprep.subr.mxu0 0.0
        %2162 = vmatpush1.msra.mxu0 0.0
        %2163 = vmatprep.subr.mxu0 0.0
        %2164 = vmatpush1.msra.mxu0 0.0
        %2165 = vmatprep.subr.mxu0 0.0
        %2166 = vmatpush1.msra.mxu0 0.0
        %2167 = vmatprep.subr.mxu0 0.0
        %2168 = vmatpush1.msra.mxu0 0.0
        %2169 = vmatprep.subr.mxu0 0.0
        %2170 = vmatpush1.msra.mxu0 0.0
        %2171 = vmatprep.subr.mxu0 0.0
        %2172 = vmatpush1.msra.mxu0 0.0
        %2173 = vmatprep.subr.mxu0 0.0
        %2174 = vmatpush1.msra.mxu0 0.0
        %2175 = vmatprep.subr.mxu0 0.0
        %2176 = vmatpush1.msra.mxu0 0.0
        %2177 = vmatprep.subr.mxu0 0.0
        %2178 = vmatpush1.msra.mxu0 0.0
        %2179 = vmatprep.mubr.f32.mxu0 0.0
        %2180 = vmatmul.mubr.f32.gmra.mrb[0].mxu0 %v2113
        %v2181 = vpop.f32.mrb[0].mxu0
        %v2182 = vadd.f32 0.0, %v2181
        %v2183 = vpop.f32.mrb[0].mxu0
        %2184 = vdwg.mxu0
        %2185 = vrot.lane.b32.xlu0 %v2011, 120
        %v2186 = vpop.permute.xlu0 %2185
        %2187 = vrot.lane.b32.xlu0 %v2011, 88
        %v2188 = vpop.permute.xlu0 %2187
        %v2189 = vsel %vm713, %v2186, 0
        %v2191 = vsel %vm713, %v2188, 0
        %2193 = vmatprep.subr.mxu0 0.0
        %2194 = vmatpush1.xpose.msra.mxu0 %v2191
        %2195 = vmatprep.subr.mxu0 0.0
        %2196 = vmatpush1.xpose.msra.mxu0 0.0
        %2197 = vmatprep.subr.mxu0 0.0
        %2198 = vmatpush1.xpose.msra.mxu0 0.0
        %2199 = vmatprep.subr.mxu0 0.0
        %2200 = vmatpush1.xpose.msra.mxu0 0.0
        %2201 = vmatprep.subr.mxu0 0.0
        %2202 = vmatpush1.xpose.msra.mxu0 0.0
        %2203 = vmatprep.subr.mxu0 0.0
        %2204 = vmatpush1.xpose.msra.mxu0 0.0
        %2205 = vmatprep.subr.mxu0 0.0
        %2206 = vmatpush1.xpose.msra.mxu0 0.0
        %2207 = vmatprep.subr.mxu0 0.0
        %2208 = vmatpush1.xpose.msra.mxu0 0.0
        %2209 = vmatprep.subr.mxu0 0.0
        %2210 = vmatpush1.xpose.msra.mxu0 0.0
        %2211 = vmatprep.subr.mxu0 0.0
        %2212 = vmatpush1.xpose.msra.mxu0 0.0
        %2213 = vmatprep.subr.mxu0 0.0
        %2214 = vmatpush1.xpose.msra.mxu0 0.0
        %2215 = vmatprep.subr.mxu0 0.0
        %2216 = vmatpush1.xpose.msra.mxu0 0.0
        %2217 = vmatprep.subr.mxu0 0.0
        %2218 = vmatpush1.xpose.msra.mxu0 0.0
        %2219 = vmatprep.subr.mxu0 0.0
        %2220 = vmatpush1.xpose.msra.mxu0 0.0
        %2221 = vmatprep.subr.mxu0 0.0
        %2222 = vmatpush1.xpose.msra.mxu0 0.0
        %2223 = vmatprep.subr.mxu0 0.0
        %2224 = vmatpush1.xpose.msra.mxu0 0.0
        %2225 = vmatprep.subr.mxu0 0.0
        %2226 = vmatpush1.xpose.msra.mxu0 0.0
        %2227 = vmatprep.subr.mxu0 0.0
        %2228 = vmatpush1.xpose.msra.mxu0 0.0
        %2229 = vmatprep.subr.mxu0 0.0
        %2230 = vmatpush1.xpose.msra.mxu0 0.0
        %2231 = vmatprep.subr.mxu0 0.0
        %2232 = vmatpush1.xpose.msra.mxu0 0.0
        %2233 = vmatprep.subr.mxu0 0.0
        %2234 = vmatpush1.xpose.msra.mxu0 0.0
        %2235 = vmatprep.subr.mxu0 0.0
        %2236 = vmatpush1.xpose.msra.mxu0 0.0
        %2237 = vmatprep.subr.mxu0 0.0
        %2238 = vmatpush1.xpose.msra.mxu0 0.0
        %2239 = vmatprep.subr.mxu0 0.0
        %2240 = vmatpush1.xpose.msra.mxu0 0.0
        %2241 = vmatprep.subr.mxu0 0.0
        %2242 = vmatpush1.xpose.msra.mxu0 0.0
        %2243 = vmatprep.subr.mxu0 0.0
        %2244 = vmatpush1.xpose.msra.mxu0 0.0
        %2245 = vmatprep.subr.mxu0 0.0
        %2246 = vmatpush1.xpose.msra.mxu0 0.0
        %2247 = vmatprep.subr.mxu0 0.0
        %2248 = vmatpush1.xpose.msra.mxu0 0.0
        %2249 = vmatprep.subr.mxu0 0.0
        %2250 = vmatpush1.xpose.msra.mxu0 0.0
        %2251 = vmatprep.subr.mxu0 0.0
        %2252 = vmatpush1.xpose.msra.mxu0 0.0
        %2253 = vmatprep.subr.mxu0 0.0
        %2254 = vmatpush1.xpose.msra.mxu0 0.0
        %2255 = vmatprep.subr.mxu0 0.0
        %2256 = vmatpush1.xpose.msra.mxu0 0.0
        %2257 = vmatprep.mubr.f32.mxu0 0.0
        %2258 = vmatmul.mubr.f32.gmra.mrb[0].mxu0 %v2189
        %v2259 = vpop.f32.mrb[0].mxu0
        %v2260 = vadd.f32 0.0, %v2259
        %v2261 = vpop.f32.mrb[0].mxu0
        %2262 = vdwg.mxu0
        %v2263 = vmul.f32 %v2260, 0.35355338
        %v2264 = vadd.f32 %v2263, %v793
        %v2265 = vsel %vm713, %v2264, -inf
        %2266 = vmax.xlane.f32.xlu0 %v2265
        %v2267 = vpop.xlane.xlu0 %2266
        %v2268 = vsub.f32 %v2264, %v2267
        %v2269 = vmul.f32 %v2268, 1.442695
        %v2270 = vpow.pop %v2269
        %v2271 = vsel %vm713, %v2270, 0.0
        %2272 = vadd.xlane.f32.xlu0 %v2271
        %v2273 = vpop.xlane.xlu0 %2272
        %v2274 = vrcp.pop %v2273
        %v2275 = vmul.f32 %v2270, %v2274
        %2276 = vrot.lane.b32.xlu0 %v2011, 56
        %v2277 = vpop.permute.xlu0 %2276
        %v2280 = vsel %vm713, %v2275, 0
        %2282 = vmatprep.subr.mxu0 0.0
        %2283 = vmatpush1.msra.mxu0 %v2277
        %2284 = vmatprep.subr.mxu0 0.0
        %2285 = vmatpush1.msra.mxu0 0.0
        %2286 = vmatprep.subr.mxu0 0.0
        %2287 = vmatpush1.msra.mxu0 0.0
        %2288 = vmatprep.subr.mxu0 0.0
        %2289 = vmatpush1.msra.mxu0 0.0
        %2290 = vmatprep.subr.mxu0 0.0
        %2291 = vmatpush1.msra.mxu0 0.0
        %2292 = vmatprep.subr.mxu0 0.0
        %2293 = vmatpush1.msra.mxu0 0.0
        %2294 = vmatprep.subr.mxu0 0.0
        %2295 = vmatpush1.msra.mxu0 0.0
        %2296 = vmatprep.subr.mxu0 0.0
        %2297 = vmatpush1.msra.mxu0 0.0
        %2298 = vmatprep.subr.mxu0 0.0
        %2299 = vmatpush1.msra.mxu0 0.0
        %2300 = vmatprep.subr.mxu0 0.0
        %2301 = vmatpush1.msra.mxu0 0.0
        %2302 = vmatprep.subr.mxu0 0.0
        %2303 = vmatpush1.msra.mxu0 0.0
        %2304 = vmatprep.subr.mxu0 0.0
        %2305 = vmatpush1.msra.mxu0 0.0
        %2306 = vmatprep.subr.mxu0 0.0
        %2307 = vmatpush1.msra.mxu0 0.0
        %2308 = vmatprep.subr.mxu0 0.0
        %2309 = vmatpush1.msra.mxu0 0.0
        %2310 = vmatprep.subr.mxu0 0.0
        %2311 = vmatpush1.msra.mxu0 0.0
        %2312 = vmatprep.subr.mxu0 0.0
        %2313 = vmatpush1.msra.mxu0 0.0
        %2314 = vmatprep.subr.mxu0 0.0
        %2315 = vmatpush1.msra.mxu0 0.0
        %2316 = vmatprep.subr.mxu0 0.0
        %2317 = vmatpush1.msra.mxu0 0.0
        %2318 = vmatprep.subr.mxu0 0.0
        %2319 = vmatpush1.msra.mxu0 0.0
        %2320 = vmatprep.subr.mxu0 0.0
        %2321 = vmatpush1.msra.mxu0 0.0
        %2322 = vmatprep.subr.mxu0 0.0
        %2323 = vmatpush1.msra.mxu0 0.0
        %2324 = vmatprep.subr.mxu0 0.0
        %2325 = vmatpush1.msra.mxu0 0.0
        %2326 = vmatprep.subr.mxu0 0.0
        %2327 = vmatpush1.msra.mxu0 0.0
        %2328 = vmatprep.subr.mxu0 0.0
        %2329 = vmatpush1.msra.mxu0 0.0
        %2330 = vmatprep.subr.mxu0 0.0
        %2331 = vmatpush1.msra.mxu0 0.0
        %2332 = vmatprep.subr.mxu0 0.0
        %2333 = vmatpush1.msra.mxu0 0.0
        %2334 = vmatprep.subr.mxu0 0.0
        %2335 = vmatpush1.msra.mxu0 0.0
        %2336 = vmatprep.subr.mxu0 0.0
        %2337 = vmatpush1.msra.mxu0 0.0
        %2338 = vmatprep.subr.mxu0 0.0
        %2339 = vmatpush1.msra.mxu0 0.0
        %2340 = vmatprep.subr.mxu0 0.0
        %2341 = vmatpush1.msra.mxu0 0.0
        %2342 = vmatprep.subr.mxu0 0.0
        %2343 = vmatpush1.msra.mxu0 0.0
        %2344 = vmatprep.subr.mxu0 0.0
        %2345 = vmatpush1.msra.mxu0 0.0
        %2346 = vmatprep.mubr.f32.mxu0 0.0
        %2347 = vmatmul.mubr.f32.gmra.mrb[0].mxu0 %v2280
        %v2348 = vpop.f32.mrb[0].mxu0
        %v2349 = vadd.f32 0.0, %v2348
        %v2350 = vpop.f32.mrb[0].mxu0
        %2351 = vdwg.mxu0
        %v2353 = vsel %vm713, %v2349, 0
        %2355 = vmatprep.subr.mxu0 0.0
        %2356 = vmatpush1.msra.mxu0 %v2016
        %2357 = vmatprep.subr.mxu0 0.0
        %2358 = vmatpush1.msra.mxu0 0.0
        %2359 = vmatprep.subr.mxu0 0.0
        %2360 = vmatpush1.msra.mxu0 0.0
        %2361 = vmatprep.subr.mxu0 0.0
        %2362 = vmatpush1.msra.mxu0 0.0
        %2363 = vmatprep.subr.mxu0 0.0
        %2364 = vmatpush1.msra.mxu0 0.0
        %2365 = vmatprep.subr.mxu0 0.0
        %2366 = vmatpush1.msra.mxu0 0.0
        %2367 = vmatprep.subr.mxu0 0.0
        %2368 = vmatpush1.msra.mxu0 0.0
        %2369 = vmatprep.subr.mxu0 0.0
        %2370 = vmatpush1.msra.mxu0 0.0
        %2371 = vmatprep.subr.mxu0 0.0
        %2372 = vmatpush1.msra.mxu0 0.0
        %2373 = vmatprep.subr.mxu0 0.0
        %2374 = vmatpush1.msra.mxu0 0.0
        %2375 = vmatprep.subr.mxu0 0.0
        %2376 = vmatpush1.msra.mxu0 0.0
        %2377 = vmatprep.subr.mxu0 0.0
        %2378 = vmatpush1.msra.mxu0 0.0
        %2379 = vmatprep.subr.mxu0 0.0
        %2380 = vmatpush1.msra.mxu0 0.0
        %2381 = vmatprep.subr.mxu0 0.0
        %2382 = vmatpush1.msra.mxu0 0.0
        %2383 = vmatprep.subr.mxu0 0.0
        %2384 = vmatpush1.msra.mxu0 0.0
        %2385 = vmatprep.subr.mxu0 0.0
        %2386 = vmatpush1.msra.mxu0 0.0
        %2387 = vmatprep.subr.mxu0 0.0
        %2388 = vmatpush1.msra.mxu0 0.0
        %2389 = vmatprep.subr.mxu0 0.0
        %2390 = vmatpush1.msra.mxu0 0.0
        %2391 = vmatprep.subr.mxu0 0.0
        %2392 = vmatpush1.msra.mxu0 0.0
        %2393 = vmatprep.subr.mxu0 0.0
        %2394 = vmatpush1.msra.mxu0 0.0
        %2395 = vmatprep.subr.mxu0 0.0
        %2396 = vmatpush1.msra.mxu0 0.0
        %2397 = vmatprep.subr.mxu0 0.0
        %2398 = vmatpush1.msra.mxu0 0.0
        %2399 = vmatprep.subr.mxu0 0.0
        %2400 = vmatpush1.msra.mxu0 0.0
        %2401 = vmatprep.subr.mxu0 0.0
        %2402 = vmatpush1.msra.mxu0 0.0
        %2403 = vmatprep.subr.mxu0 0.0
        %2404 = vmatpush1.msra.mxu0 0.0
        %2405 = vmatprep.subr.mxu0 0.0
        %2406 = vmatpush1.msra.mxu0 0.0
        %2407 = vmatprep.subr.mxu0 0.0
        %2408 = vmatpush1.msra.mxu0 0.0
        %2409 = vmatprep.subr.mxu0 0.0
        %2410 = vmatpush1.msra.mxu0 0.0
        %2411 = vmatprep.subr.mxu0 0.0
        %2412 = vmatpush1.msra.mxu0 0.0
        %2413 = vmatprep.subr.mxu0 0.0
        %2414 = vmatpush1.msra.mxu0 0.0
        %2415 = vmatprep.subr.mxu0 0.0
        %2416 = vmatpush1.msra.mxu0 0.0
        %2417 = vmatprep.subr.mxu0 0.0
        %2418 = vmatpush1.msra.mxu0 0.0
        %2419 = vmatprep.mubr.f32.mxu0 0.0
        %2420 = vmatmul.mubr.f32.gmra.mrb[0].mxu0 %v2353
        %v2421 = vpop.f32.mrb[0].mxu0
        %v2422 = vadd.f32 0.0, %v2421
        %v2423 = vpop.f32.mrb[0].mxu0
        %2424 = vdwg.mxu0
        %v2426 = vsel %vm713, %v2182, 0
        %2428 = vmatprep.subr.mxu0 0.0
        %2429 = vmatpush1.msra.mxu0 %v2015
        %2430 = vmatprep.subr.mxu0 0.0
        %2431 = vmatpush1.msra.mxu0 0.0
        %2432 = vmatprep.subr.mxu0 0.0
        %2433 = vmatpush1.msra.mxu0 0.0
        %2434 = vmatprep.subr.mxu0 0.0
        %2435 = vmatpush1.msra.mxu0 0.0
        %2436 = vmatprep.subr.mxu0 0.0
        %2437 = vmatpush1.msra.mxu0 0.0
        %2438 = vmatprep.subr.mxu0 0.0
        %2439 = vmatpush1.msra.mxu0 0.0
        %2440 = vmatprep.subr.mxu0 0.0
        %2441 = vmatpush1.msra.mxu0 0.0
        %2442 = vmatprep.subr.mxu0 0.0
        %2443 = vmatpush1.msra.mxu0 0.0
        %2444 = vmatprep.subr.mxu0 0.0
        %2445 = vmatpush1.msra.mxu0 0.0
        %2446 = vmatprep.subr.mxu0 0.0
        %2447 = vmatpush1.msra.mxu0 0.0
        %2448 = vmatprep.subr.mxu0 0.0
        %2449 = vmatpush1.msra.mxu0 0.0
        %2450 = vmatprep.subr.mxu0 0.0
        %2451 = vmatpush1.msra.mxu0 0.0
        %2452 = vmatprep.subr.mxu0 0.0
        %2453 = vmatpush1.msra.mxu0 0.0
        %2454 = vmatprep.subr.mxu0 0.0
        %2455 = vmatpush1.msra.mxu0 0.0
        %2456 = vmatprep.subr.mxu0 0.0
        %2457 = vmatpush1.msra.mxu0 0.0
        %2458 = vmatprep.subr.mxu0 0.0
        %2459 = vmatpush1.msra.mxu0 0.0
        %2460 = vmatprep.subr.mxu0 0.0
        %2461 = vmatpush1.msra.mxu0 0.0
        %2462 = vmatprep.subr.mxu0 0.0
        %2463 = vmatpush1.msra.mxu0 0.0
        %2464 = vmatprep.subr.mxu0 0.0
        %2465 = vmatpush1.msra.mxu0 0.0
        %2466 = vmatprep.subr.mxu0 0.0
        %2467 = vmatpush1.msra.mxu0 0.0
        %2468 = vmatprep.subr.mxu0 0.0
        %2469 = vmatpush1.msra.mxu0 0.0
        %2470 = vmatprep.subr.mxu0 0.0
        %2471 = vmatpush1.msra.mxu0 0.0
        %2472 = vmatprep.subr.mxu0 0.0
        %2473 = vmatpush1.msra.mxu0 0.0
        %2474 = vmatprep.subr.mxu0 0.0
        %2475 = vmatpush1.msra.mxu0 0.0
        %2476 = vmatprep.subr.mxu0 0.0
        %2477 = vmatpush1.msra.mxu0 0.0
        %2478 = vmatprep.subr.mxu0 0.0
        %2479 = vmatpush1.msra.mxu0 0.0
        %2480 = vmatprep.subr.mxu0 0.0
        %2481 = vmatpush1.msra.mxu0 0.0
        %2482 = vmatprep.subr.mxu0 0.0
        %2483 = vmatpush1.msra.mxu0 0.0
        %2484 = vmatprep.subr.mxu0 0.0
        %2485 = vmatpush1.msra.mxu0 0.0
        %2486 = vmatprep.subr.mxu0 0.0
        %2487 = vmatpush1.msra.mxu0 0.0
        %2488 = vmatprep.subr.mxu0 0.0
        %2489 = vmatpush1.msra.mxu0 0.0
        %2490 = vmatprep.subr.mxu0 0.0
        %2491 = vmatpush1.msra.mxu0 0.0
        %2492 = vmatprep.mubr.f32.mxu0 0.0
        %2493 = vmatmul.mubr.f32.gmra.mrb[0].mxu0 %v2426
        %v2494 = vpop.f32.mrb[0].mxu0
        %v2495 = vadd.f32 %v2422, %v2494
        %v2496 = vpop.f32.mrb[0].mxu0
        %2497 = vdwg.mxu0
        %2498 = vrot.lane.b32.xlu0 %v2011, 112
        %v2499 = vpop.permute.xlu0 %2498
        %2500 = vrot.lane.b32.xlu0 %v2011, 80
        %v2501 = vpop.permute.xlu0 %2500
        %v2502 = vsel %vm713, %v2499, 0
        %v2504 = vsel %vm713, %v2501, 0
        %2506 = vmatprep.subr.mxu0 0.0
        %2507 = vmatpush1.xpose.msra.mxu0 %v2504
        %2508 = vmatprep.subr.mxu0 0.0
        %2509 = vmatpush1.xpose.msra.mxu0 0.0
        %2510 = vmatprep.subr.mxu0 0.0
        %2511 = vmatpush1.xpose.msra.mxu0 0.0
        %2512 = vmatprep.subr.mxu0 0.0
        %2513 = vmatpush1.xpose.msra.mxu0 0.0
        %2514 = vmatprep.subr.mxu0 0.0
        %2515 = vmatpush1.xpose.msra.mxu0 0.0
        %2516 = vmatprep.subr.mxu0 0.0
        %2517 = vmatpush1.xpose.msra.mxu0 0.0
        %2518 = vmatprep.subr.mxu0 0.0
        %2519 = vmatpush1.xpose.msra.mxu0 0.0
        %2520 = vmatprep.subr.mxu0 0.0
        %2521 = vmatpush1.xpose.msra.mxu0 0.0
        %2522 = vmatprep.subr.mxu0 0.0
        %2523 = vmatpush1.xpose.msra.mxu0 0.0
        %2524 = vmatprep.subr.mxu0 0.0
        %2525 = vmatpush1.xpose.msra.mxu0 0.0
        %2526 = vmatprep.subr.mxu0 0.0
        %2527 = vmatpush1.xpose.msra.mxu0 0.0
        %2528 = vmatprep.subr.mxu0 0.0
        %2529 = vmatpush1.xpose.msra.mxu0 0.0
        %2530 = vmatprep.subr.mxu0 0.0
        %2531 = vmatpush1.xpose.msra.mxu0 0.0
        %2532 = vmatprep.subr.mxu0 0.0
        %2533 = vmatpush1.xpose.msra.mxu0 0.0
        %2534 = vmatprep.subr.mxu0 0.0
        %2535 = vmatpush1.xpose.msra.mxu0 0.0
        %2536 = vmatprep.subr.mxu0 0.0
        %2537 = vmatpush1.xpose.msra.mxu0 0.0
        %2538 = vmatprep.subr.mxu0 0.0
        %2539 = vmatpush1.xpose.msra.mxu0 0.0
        %2540 = vmatprep.subr.mxu0 0.0
        %2541 = vmatpush1.xpose.msra.mxu0 0.0
        %2542 = vmatprep.subr.mxu0 0.0
        %2543 = vmatpush1.xpose.msra.mxu0 0.0
        %2544 = vmatprep.subr.mxu0 0.0
        %2545 = vmatpush1.xpose.msra.mxu0 0.0
        %2546 = vmatprep.subr.mxu0 0.0
        %2547 = vmatpush1.xpose.msra.mxu0 0.0
        %2548 = vmatprep.subr.mxu0 0.0
        %2549 = vmatpush1.xpose.msra.mxu0 0.0
        %2550 = vmatprep.subr.mxu0 0.0
        %2551 = vmatpush1.xpose.msra.mxu0 0.0
        %2552 = vmatprep.subr.mxu0 0.0
        %2553 = vmatpush1.xpose.msra.mxu0 0.0
        %2554 = vmatprep.subr.mxu0 0.0
        %2555 = vmatpush1.xpose.msra.mxu0 0.0
        %2556 = vmatprep.subr.mxu0 0.0
        %2557 = vmatpush1.xpose.msra.mxu0 0.0
        %2558 = vmatprep.subr.mxu0 0.0
        %2559 = vmatpush1.xpose.msra.mxu0 0.0
        %2560 = vmatprep.subr.mxu0 0.0
        %2561 = vmatpush1.xpose.msra.mxu0 0.0
        %2562 = vmatprep.subr.mxu0 0.0
        %2563 = vmatpush1.xpose.msra.mxu0 0.0
        %2564 = vmatprep.subr.mxu0 0.0
        %2565 = vmatpush1.xpose.msra.mxu0 0.0
        %2566 = vmatprep.subr.mxu0 0.0
        %2567 = vmatpush1.xpose.msra.mxu0 0.0
        %2568 = vmatprep.subr.mxu0 0.0
        %2569 = vmatpush1.xpose.msra.mxu0 0.0
        %2570 = vmatprep.mubr.f32.mxu0 0.0
        %2571 = vmatmul.mubr.f32.gmra.mrb[0].mxu0 %v2502
        %v2572 = vpop.f32.mrb[0].mxu0
        %v2573 = vadd.f32 0.0, %v2572
        %v2574 = vpop.f32.mrb[0].mxu0
        %2575 = vdwg.mxu0
        %v2576 = vmul.f32 %v2573, 0.35355338
        %v2577 = vadd.f32 %v2576, %v793
        %v2578 = vsel %vm713, %v2577, -inf
        %2579 = vmax.xlane.f32.xlu0 %v2578
        %v2580 = vpop.xlane.xlu0 %2579
        %v2581 = vsub.f32 %v2577, %v2580
        %v2582 = vmul.f32 %v2581, 1.442695
        %v2583 = vpow.pop %v2582
        %v2584 = vsel %vm713, %v2583, 0.0
        %2585 = vadd.xlane.f32.xlu0 %v2584
        %v2586 = vpop.xlane.xlu0 %2585
        %v2587 = vrcp.pop %v2586
        %v2588 = vmul.f32 %v2583, %v2587
        %2589 = vrot.lane.b32.xlu0 %v2011, 48
        %v2590 = vpop.permute.xlu0 %2589
        %v2593 = vsel %vm713, %v2588, 0
        %2595 = vmatprep.subr.mxu0 0.0
        %2596 = vmatpush1.msra.mxu0 %v2590
        %2597 = vmatprep.subr.mxu0 0.0
        %2598 = vmatpush1.msra.mxu0 0.0
        %2599 = vmatprep.subr.mxu0 0.0
        %2600 = vmatpush1.msra.mxu0 0.0
        %2601 = vmatprep.subr.mxu0 0.0
        %2602 = vmatpush1.msra.mxu0 0.0
        %2603 = vmatprep.subr.mxu0 0.0
        %2604 = vmatpush1.msra.mxu0 0.0
        %2605 = vmatprep.subr.mxu0 0.0
        %2606 = vmatpush1.msra.mxu0 0.0
        %2607 = vmatprep.subr.mxu0 0.0
        %2608 = vmatpush1.msra.mxu0 0.0
        %2609 = vmatprep.subr.mxu0 0.0
        %2610 = vmatpush1.msra.mxu0 0.0
        %2611 = vmatprep.subr.mxu0 0.0
        %2612 = vmatpush1.msra.mxu0 0.0
        %2613 = vmatprep.subr.mxu0 0.0
        %2614 = vmatpush1.msra.mxu0 0.0
        %2615 = vmatprep.subr.mxu0 0.0
        %2616 = vmatpush1.msra.mxu0 0.0
        %2617 = vmatprep.subr.mxu0 0.0
        %2618 = vmatpush1.msra.mxu0 0.0
        %2619 = vmatprep.subr.mxu0 0.0
        %2620 = vmatpush1.msra.mxu0 0.0
        %2621 = vmatprep.subr.mxu0 0.0
        %2622 = vmatpush1.msra.mxu0 0.0
        %2623 = vmatprep.subr.mxu0 0.0
        %2624 = vmatpush1.msra.mxu0 0.0
        %2625 = vmatprep.subr.mxu0 0.0
        %2626 = vmatpush1.msra.mxu0 0.0
        %2627 = vmatprep.subr.mxu0 0.0
        %2628 = vmatpush1.msra.mxu0 0.0
        %2629 = vmatprep.subr.mxu0 0.0
        %2630 = vmatpush1.msra.mxu0 0.0
        %2631 = vmatprep.subr.mxu0 0.0
        %2632 = vmatpush1.msra.mxu0 0.0
        %2633 = vmatprep.subr.mxu0 0.0
        %2634 = vmatpush1.msra.mxu0 0.0
        %2635 = vmatprep.subr.mxu0 0.0
        %2636 = vmatpush1.msra.mxu0 0.0
        %2637 = vmatprep.subr.mxu0 0.0
        %2638 = vmatpush1.msra.mxu0 0.0
        %2639 = vmatprep.subr.mxu0 0.0
        %2640 = vmatpush1.msra.mxu0 0.0
        %2641 = vmatprep.subr.mxu0 0.0
        %2642 = vmatpush1.msra.mxu0 0.0
        %2643 = vmatprep.subr.mxu0 0.0
        %2644 = vmatpush1.msra.mxu0 0.0
        %2645 = vmatprep.subr.mxu0 0.0
        %2646 = vmatpush1.msra.mxu0 0.0
        %2647 = vmatprep.subr.mxu0 0.0
        %2648 = vmatpush1.msra.mxu0 0.0
        %2649 = vmatprep.subr.mxu0 0.0
        %2650 = vmatpush1.msra.mxu0 0.0
        %2651 = vmatprep.subr.mxu0 0.0
        %2652 = vmatpush1.msra.mxu0 0.0
        %2653 = vmatprep.subr.mxu0 0.0
        %2654 = vmatpush1.msra.mxu0 0.0
        %2655 = vmatprep.subr.mxu0 0.0
        %2656 = vmatpush1.msra.mxu0 0.0
        %2657 = vmatprep.subr.mxu0 0.0
        %2658 = vmatpush1.msra.mxu0 0.0
        %2659 = vmatprep.mubr.f32.mxu0 0.0
        %2660 = vmatmul.mubr.f32.gmra.mrb[0].mxu0 %v2593
        %v2661 = vpop.f32.mrb[0].mxu0
        %v2662 = vadd.f32 0.0, %v2661
        %v2663 = vpop.f32.mrb[0].mxu0
        %2664 = vdwg.mxu0
        %v2666 = vsel %vm713, %v2662, 0
        %2668 = vmatprep.subr.mxu0 0.0
        %2669 = vmatpush1.msra.mxu0 %v2017
        %2670 = vmatprep.subr.mxu0 0.0
        %2671 = vmatpush1.msra.mxu0 0.0
        %2672 = vmatprep.subr.mxu0 0.0
        %2673 = vmatpush1.msra.mxu0 0.0
        %2674 = vmatprep.subr.mxu0 0.0
        %2675 = vmatpush1.msra.mxu0 0.0
        %2676 = vmatprep.subr.mxu0 0.0
        %2677 = vmatpush1.msra.mxu0 0.0
        %2678 = vmatprep.subr.mxu0 0.0
        %2679 = vmatpush1.msra.mxu0 0.0
        %2680 = vmatprep.subr.mxu0 0.0
        %2681 = vmatpush1.msra.mxu0 0.0
        %2682 = vmatprep.subr.mxu0 0.0
        %2683 = vmatpush1.msra.mxu0 0.0
        %2684 = vmatprep.subr.mxu0 0.0
        %2685 = vmatpush1.msra.mxu0 0.0
        %2686 = vmatprep.subr.mxu0 0.0
        %2687 = vmatpush1.msra.mxu0 0.0
        %2688 = vmatprep.subr.mxu0 0.0
        %2689 = vmatpush1.msra.mxu0 0.0
        %2690 = vmatprep.subr.mxu0 0.0
        %2691 = vmatpush1.msra.mxu0 0.0
        %2692 = vmatprep.subr.mxu0 0.0
        %2693 = vmatpush1.msra.mxu0 0.0
        %2694 = vmatprep.subr.mxu0 0.0
        %2695 = vmatpush1.msra.mxu0 0.0
        %2696 = vmatprep.subr.mxu0 0.0
        %2697 = vmatpush1.msra.mxu0 0.0
        %2698 = vmatprep.subr.mxu0 0.0
        %2699 = vmatpush1.msra.mxu0 0.0
        %2700 = vmatprep.subr.mxu0 0.0
        %2701 = vmatpush1.msra.mxu0 0.0
        %2702 = vmatprep.subr.mxu0 0.0
        %2703 = vmatpush1.msra.mxu0 0.0
        %2704 = vmatprep.subr.mxu0 0.0
        %2705 = vmatpush1.msra.mxu0 0.0
        %2706 = vmatprep.subr.mxu0 0.0
        %2707 = vmatpush1.msra.mxu0 0.0
        %2708 = vmatprep.subr.mxu0 0.0
        %2709 = vmatpush1.msra.mxu0 0.0
        %2710 = vmatprep.subr.mxu0 0.0
        %2711 = vmatpush1.msra.mxu0 0.0
        %2712 = vmatprep.subr.mxu0 0.0
        %2713 = vmatpush1.msra.mxu0 0.0
        %2714 = vmatprep.subr.mxu0 0.0
        %2715 = vmatpush1.msra.mxu0 0.0
        %2716 = vmatprep.subr.mxu0 0.0
        %2717 = vmatpush1.msra.mxu0 0.0
        %2718 = vmatprep.subr.mxu0 0.0
        %2719 = vmatpush1.msra.mxu0 0.0
        %2720 = vmatprep.subr.mxu0 0.0
        %2721 = vmatpush1.msra.mxu0 0.0
        %2722 = vmatprep.subr.mxu0 0.0
        %2723 = vmatpush1.msra.mxu0 0.0
        %2724 = vmatprep.subr.mxu0 0.0
        %2725 = vmatpush1.msra.mxu0 0.0
        %2726 = vmatprep.subr.mxu0 0.0
        %2727 = vmatpush1.msra.mxu0 0.0
        %2728 = vmatprep.subr.mxu0 0.0
        %2729 = vmatpush1.msra.mxu0 0.0
        %2730 = vmatprep.subr.mxu0 0.0
        %2731 = vmatpush1.msra.mxu0 0.0
        %2732 = vmatprep.mubr.f32.mxu0 0.0
        %2733 = vmatmul.mubr.f32.gmra.mrb[0].mxu0 %v2666
        %v2734 = vpop.f32.mrb[0].mxu0
        %v2735 = vadd.f32 0.0, %v2734
        %v2736 = vpop.f32.mrb[0].mxu0
        %2737 = vdwg.mxu0
        %v2738 = vadd.f32 %v2495, %v2735
        %2739 = vrot.lane.b32.xlu0 %v2011, 104
        %v2740 = vpop.permute.xlu0 %2739
        %2741 = vrot.lane.b32.xlu0 %v2011, 72
        %v2742 = vpop.permute.xlu0 %2741
        %v2743 = vsel %vm713, %v2740, 0
        %v2745 = vsel %vm713, %v2742, 0
        %2747 = vmatprep.subr.mxu0 0.0
        %2748 = vmatpush1.xpose.msra.mxu0 %v2745
        %2749 = vmatprep.subr.mxu0 0.0
        %2750 = vmatpush1.xpose.msra.mxu0 0.0
        %2751 = vmatprep.subr.mxu0 0.0
        %2752 = vmatpush1.xpose.msra.mxu0 0.0
        %2753 = vmatprep.subr.mxu0 0.0
        %2754 = vmatpush1.xpose.msra.mxu0 0.0
        %2755 = vmatprep.subr.mxu0 0.0
        %2756 = vmatpush1.xpose.msra.mxu0 0.0
        %2757 = vmatprep.subr.mxu0 0.0
        %2758 = vmatpush1.xpose.msra.mxu0 0.0
        %2759 = vmatprep.subr.mxu0 0.0
        %2760 = vmatpush1.xpose.msra.mxu0 0.0
        %2761 = vmatprep.subr.mxu0 0.0
        %2762 = vmatpush1.xpose.msra.mxu0 0.0
        %2763 = vmatprep.subr.mxu0 0.0
        %2764 = vmatpush1.xpose.msra.mxu0 0.0
        %2765 = vmatprep.subr.mxu0 0.0
        %2766 = vmatpush1.xpose.msra.mxu0 0.0
        %2767 = vmatprep.subr.mxu0 0.0
        %2768 = vmatpush1.xpose.msra.mxu0 0.0
        %2769 = vmatprep.subr.mxu0 0.0
        %2770 = vmatpush1.xpose.msra.mxu0 0.0
        %2771 = vmatprep.subr.mxu0 0.0
        %2772 = vmatpush1.xpose.msra.mxu0 0.0
        %2773 = vmatprep.subr.mxu0 0.0
        %2774 = vmatpush1.xpose.msra.mxu0 0.0
        %2775 = vmatprep.subr.mxu0 0.0
        %2776 = vmatpush1.xpose.msra.mxu0 0.0
        %2777 = vmatprep.subr.mxu0 0.0
        %2778 = vmatpush1.xpose.msra.mxu0 0.0
        %2779 = vmatprep.subr.mxu0 0.0
        %2780 = vmatpush1.xpose.msra.mxu0 0.0
        %2781 = vmatprep.subr.mxu0 0.0
        %2782 = vmatpush1.xpose.msra.mxu0 0.0
        %2783 = vmatprep.subr.mxu0 0.0
        %2784 = vmatpush1.xpose.msra.mxu0 0.0
        %2785 = vmatprep.subr.mxu0 0.0
        %2786 = vmatpush1.xpose.msra.mxu0 0.0
        %2787 = vmatprep.subr.mxu0 0.0
        %2788 = vmatpush1.xpose.msra.mxu0 0.0
        %2789 = vmatprep.subr.mxu0 0.0
        %2790 = vmatpush1.xpose.msra.mxu0 0.0
        %2791 = vmatprep.subr.mxu0 0.0
        %2792 = vmatpush1.xpose.msra.mxu0 0.0
        %2793 = vmatprep.subr.mxu0 0.0
        %2794 = vmatpush1.xpose.msra.mxu0 0.0
        %2795 = vmatprep.subr.mxu0 0.0
        %2796 = vmatpush1.xpose.msra.mxu0 0.0
        %2797 = vmatprep.subr.mxu0 0.0
        %2798 = vmatpush1.xpose.msra.mxu0 0.0
        %2799 = vmatprep.subr.mxu0 0.0
        %2800 = vmatpush1.xpose.msra.mxu0 0.0
        %2801 = vmatprep.subr.mxu0 0.0
        %2802 = vmatpush1.xpose.msra.mxu0 0.0
        %2803 = vmatprep.subr.mxu0 0.0
        %2804 = vmatpush1.xpose.msra.mxu0 0.0
        %2805 = vmatprep.subr.mxu0 0.0
        %2806 = vmatpush1.xpose.msra.mxu0 0.0
        %2807 = vmatprep.subr.mxu0 0.0
        %2808 = vmatpush1.xpose.msra.mxu0 0.0
        %2809 = vmatprep.subr.mxu0 0.0
        %2810 = vmatpush1.xpose.msra.mxu0 0.0
        %2811 = vmatprep.mubr.f32.mxu0 0.0
        %2812 = vmatmul.mubr.f32.gmra.mrb[0].mxu0 %v2743
        %v2813 = vpop.f32.mrb[0].mxu0
        %v2814 = vadd.f32 0.0, %v2813
        %v2815 = vpop.f32.mrb[0].mxu0
        %2816 = vdwg.mxu0
        %v2817 = vmul.f32 %v2814, 0.35355338
        %v2818 = vadd.f32 %v2817, %v793
        %v2819 = vsel %vm713, %v2818, -inf
        %2820 = vmax.xlane.f32.xlu0 %v2819
        %v2821 = vpop.xlane.xlu0 %2820
        %v2822 = vsub.f32 %v2818, %v2821
        %v2823 = vmul.f32 %v2822, 1.442695
        %v2824 = vpow.pop %v2823
        %v2825 = vsel %vm713, %v2824, 0.0
        %2826 = vadd.xlane.f32.xlu0 %v2825
        %v2827 = vpop.xlane.xlu0 %2826
        %v2828 = vrcp.pop %v2827
        %v2829 = vmul.f32 %v2824, %v2828
        %2830 = vrot.lane.b32.xlu0 %v2011, 40
        %v2831 = vpop.permute.xlu0 %2830
        %v2834 = vsel %vm713, %v2829, 0
        %2836 = vmatprep.subr.mxu0 0.0
        %2837 = vmatpush1.msra.mxu0 %v2831
        %2838 = vmatprep.subr.mxu0 0.0
        %2839 = vmatpush1.msra.mxu0 0.0
        %2840 = vmatprep.subr.mxu0 0.0
        %2841 = vmatpush1.msra.mxu0 0.0
        %2842 = vmatprep.subr.mxu0 0.0
        %2843 = vmatpush1.msra.mxu0 0.0
        %2844 = vmatprep.subr.mxu0 0.0
        %2845 = vmatpush1.msra.mxu0 0.0
        %2846 = vmatprep.subr.mxu0 0.0
        %2847 = vmatpush1.msra.mxu0 0.0
        %2848 = vmatprep.subr.mxu0 0.0
        %2849 = vmatpush1.msra.mxu0 0.0
        %2850 = vmatprep.subr.mxu0 0.0
        %2851 = vmatpush1.msra.mxu0 0.0
        %2852 = vmatprep.subr.mxu0 0.0
        %2853 = vmatpush1.msra.mxu0 0.0
        %2854 = vmatprep.subr.mxu0 0.0
        %2855 = vmatpush1.msra.mxu0 0.0
        %2856 = vmatprep.subr.mxu0 0.0
        %2857 = vmatpush1.msra.mxu0 0.0
        %2858 = vmatprep.subr.mxu0 0.0
        %2859 = vmatpush1.msra.mxu0 0.0
        %2860 = vmatprep.subr.mxu0 0.0
        %2861 = vmatpush1.msra.mxu0 0.0
        %2862 = vmatprep.subr.mxu0 0.0
        %2863 = vmatpush1.msra.mxu0 0.0
        %2864 = vmatprep.subr.mxu0 0.0
        %2865 = vmatpush1.msra.mxu0 0.0
        %2866 = vmatprep.subr.mxu0 0.0
        %2867 = vmatpush1.msra.mxu0 0.0
        %2868 = vmatprep.subr.mxu0 0.0
        %2869 = vmatpush1.msra.mxu0 0.0
        %2870 = vmatprep.subr.mxu0 0.0
        %2871 = vmatpush1.msra.mxu0 0.0
        %2872 = vmatprep.subr.mxu0 0.0
        %2873 = vmatpush1.msra.mxu0 0.0
        %2874 = vmatprep.subr.mxu0 0.0
        %2875 = vmatpush1.msra.mxu0 0.0
        %2876 = vmatprep.subr.mxu0 0.0
        %2877 = vmatpush1.msra.mxu0 0.0
        %2878 = vmatprep.subr.mxu0 0.0
        %2879 = vmatpush1.msra.mxu0 0.0
        %2880 = vmatprep.subr.mxu0 0.0
        %2881 = vmatpush1.msra.mxu0 0.0
        %2882 = vmatprep.subr.mxu0 0.0
        %2883 = vmatpush1.msra.mxu0 0.0
        %2884 = vmatprep.subr.mxu0 0.0
        %2885 = vmatpush1.msra.mxu0 0.0
        %2886 = vmatprep.subr.mxu0 0.0
        %2887 = vmatpush1.msra.mxu0 0.0
        %2888 = vmatprep.subr.mxu0 0.0
        %2889 = vmatpush1.msra.mxu0 0.0
        %2890 = vmatprep.subr.mxu0 0.0
        %2891 = vmatpush1.msra.mxu0 0.0
        %2892 = vmatprep.subr.mxu0 0.0
        %2893 = vmatpush1.msra.mxu0 0.0
        %2894 = vmatprep.subr.mxu0 0.0
        %2895 = vmatpush1.msra.mxu0 0.0
        %2896 = vmatprep.subr.mxu0 0.0
        %2897 = vmatpush1.msra.mxu0 0.0
        %2898 = vmatprep.subr.mxu0 0.0
        %2899 = vmatpush1.msra.mxu0 0.0
        %2900 = vmatprep.mubr.f32.mxu0 0.0
        %2901 = vmatmul.mubr.f32.gmra.mrb[0].mxu0 %v2834
        %v2902 = vpop.f32.mrb[0].mxu0
        %v2903 = vadd.f32 0.0, %v2902
        %v2904 = vpop.f32.mrb[0].mxu0
        %2905 = vdwg.mxu0
        %v2907 = vsel %vm713, %v2903, 0
        %2909 = vmatprep.subr.mxu0 0.0
        %2910 = vmatpush1.msra.mxu0 %v2018
        %2911 = vmatprep.subr.mxu0 0.0
        %2912 = vmatpush1.msra.mxu0 0.0
        %2913 = vmatprep.subr.mxu0 0.0
        %2914 = vmatpush1.msra.mxu0 0.0
        %2915 = vmatprep.subr.mxu0 0.0
        %2916 = vmatpush1.msra.mxu0 0.0
        %2917 = vmatprep.subr.mxu0 0.0
        %2918 = vmatpush1.msra.mxu0 0.0
        %2919 = vmatprep.subr.mxu0 0.0
        %2920 = vmatpush1.msra.mxu0 0.0
        %2921 = vmatprep.subr.mxu0 0.0
        %2922 = vmatpush1.msra.mxu0 0.0
        %2923 = vmatprep.subr.mxu0 0.0
        %2924 = vmatpush1.msra.mxu0 0.0
        %2925 = vmatprep.subr.mxu0 0.0
        %2926 = vmatpush1.msra.mxu0 0.0
        %2927 = vmatprep.subr.mxu0 0.0
        %2928 = vmatpush1.msra.mxu0 0.0
        %2929 = vmatprep.subr.mxu0 0.0
        %2930 = vmatpush1.msra.mxu0 0.0
        %2931 = vmatprep.subr.mxu0 0.0
        %2932 = vmatpush1.msra.mxu0 0.0
        %2933 = vmatprep.subr.mxu0 0.0
        %2934 = vmatpush1.msra.mxu0 0.0
        %2935 = vmatprep.subr.mxu0 0.0
        %2936 = vmatpush1.msra.mxu0 0.0
        %2937 = vmatprep.subr.mxu0 0.0
        %2938 = vmatpush1.msra.mxu0 0.0
        %2939 = vmatprep.subr.mxu0 0.0
        %2940 = vmatpush1.msra.mxu0 0.0
        %2941 = vmatprep.subr.mxu0 0.0
        %2942 = vmatpush1.msra.mxu0 0.0
        %2943 = vmatprep.subr.mxu0 0.0
        %2944 = vmatpush1.msra.mxu0 0.0
        %2945 = vmatprep.subr.mxu0 0.0
        %2946 = vmatpush1.msra.mxu0 0.0
        %2947 = vmatprep.subr.mxu0 0.0
        %2948 = vmatpush1.msra.mxu0 0.0
        %2949 = vmatprep.subr.mxu0 0.0
        %2950 = vmatpush1.msra.mxu0 0.0
        %2951 = vmatprep.subr.mxu0 0.0
        %2952 = vmatpush1.msra.mxu0 0.0
        %2953 = vmatprep.subr.mxu0 0.0
        %2954 = vmatpush1.msra.mxu0 0.0
        %2955 = vmatprep.subr.mxu0 0.0
        %2956 = vmatpush1.msra.mxu0 0.0
        %2957 = vmatprep.subr.mxu0 0.0
        %2958 = vmatpush1.msra.mxu0 0.0
        %2959 = vmatprep.subr.mxu0 0.0
        %2960 = vmatpush1.msra.mxu0 0.0
        %2961 = vmatprep.subr.mxu0 0.0
        %2962 = vmatpush1.msra.mxu0 0.0
        %2963 = vmatprep.subr.mxu0 0.0
        %2964 = vmatpush1.msra.mxu0 0.0
        %2965 = vmatprep.subr.mxu0 0.0
        %2966 = vmatpush1.msra.mxu0 0.0
        %2967 = vmatprep.subr.mxu0 0.0
        %2968 = vmatpush1.msra.mxu0 0.0
        %2969 = vmatprep.subr.mxu0 0.0
        %2970 = vmatpush1.msra.mxu0 0.0
        %2971 = vmatprep.subr.mxu0 0.0
        %2972 = vmatpush1.msra.mxu0 0.0
        %2973 = vmatprep.mubr.f32.mxu0 0.0
        %2974 = vmatmul.mubr.f32.gmra.mrb[0].mxu0 %v2907
        %v2975 = vpop.f32.mrb[0].mxu0
        %v2976 = vadd.f32 0.0, %v2975
        %v2977 = vpop.f32.mrb[0].mxu0
        %2978 = vdwg.mxu0
        %v2979 = vadd.f32 %v2738, %v2976
        %s2980 = scalar_lea.vmem %s7, 1
        %v2981 = vld [vmem:[%s2980] sm:$0x1]
        %v2983 = vlaneseq
        %v2984 = vshrl.u32 %v2983, 7
        %v2985 = vsub.s32 0, %v2984
        %v2986 = vrot.slane %v2981, %v2985
        %v2988 = vadd.f32 %v2979, %v2986
        %v2989 = vadd.f32 %v2988, %v1927
        %s2990 = scalar_lea.vmem %s8, 1
        %v2991 = vld [vmem:[%s2990] sm:$0x1]
        %s2992 = scalar_lea.vmem %s9, 1
        %v2993 = vld [vmem:[%s2992] sm:$0x1]
        %v2994 = vsel %vm590, %v2989, 0.0
        %2995 = vadd.xlane.f32.xlu0 %v2994
        %v2996 = vpop.xlane.xlu0 %2995
        %v2997 = vmul.f32 %v2996, %v594
        %v2998 = vsub.f32 %v2989, %v2997
        %v2999 = vmul.f32 %v2998, %v2998
        %v3000 = vsel %vm590, %v2999, 0.0
        %3001 = vadd.xlane.f32.xlu0 %v3000
        %v3002 = vpop.xlane.xlu0 %3001
        %v3003 = vmul.f32 %v3002, %v594
        %v3004 = vadd.f32 %v3003, 1e-12
        %v3005 = vrsqrt.pop %v3004
        %v3006 = vmul.f32 %v2998, %v3005
        %v3008 = vlaneseq
        %v3009 = vshrl.u32 %v3008, 7
        %v3010 = vsub.s32 0, %v3009
        %v3011 = vrot.slane %v2991, %v3010
        %v3013 = vmul.f32 %v3006, %v3011
        %v3015 = vlaneseq
        %v3016 = vshrl.u32 %v3015, 7
        %v3017 = vsub.s32 0, %v3016
        %v3018 = vrot.slane %v2993, %v3017
        %v3020 = vadd.f32 %v3013, %v3018
        %s3021 = scalar_lea.vmem [#allocation2], 32
        %v3022 = vld [vmem:[%s3021] sm:$0xff]
        %v3023 = vld [vmem:[%s3021 + $0x8] sm:$0xff]
        %v3024 = vld [vmem:[%s3021 + $0x10] sm:$0xff]
        %v3025 = vld [vmem:[%s3021 + $0x18] sm:$0xff]
        %s3026 = scalar_lea.vmem %s11, 1
        %v3027 = vld [vmem:[%s3026] sm:$0x1]
        %v3029 = vlaneseq
        %v3030 = vshrl.u32 %v3029, 7
        %v3031 = vsub.s32 0, %v3030
        %v3032 = vrot.slane %v3027, %v3031
        %v3035 = vsel %vm590, %v3020, 0
        %3037 = vmatprep.subr.mxu0 0.0
        %3038 = vmatpush1.msra.mxu0 %v3022
        %3039 = vmatprep.subr.mxu0 0.0
        %3040 = vmatpush1.msra.mxu0 %v3023
        %3041 = vmatprep.subr.mxu0 0.0
        %3042 = vmatpush1.msra.mxu0 %v3024
        %3043 = vmatprep.subr.mxu0 0.0
        %3044 = vmatpush1.msra.mxu0 %v3025
        %3045 = vmatprep.subr.mxu0 0.0
        %3046 = vmatpush1.msra.mxu0 0.0
        %3047 = vmatprep.subr.mxu0 0.0
        %3048 = vmatpush1.msra.mxu0 0.0
        %3049 = vmatprep.subr.mxu0 0.0
        %3050 = vmatpush1.msra.mxu0 0.0
        %3051 = vmatprep.subr.mxu0 0.0
        %3052 = vmatpush1.msra.mxu0 0.0
        %3053 = vmatprep.subr.mxu0 0.0
        %3054 = vmatpush1.msra.mxu0 0.0
        %3055 = vmatprep.subr.mxu0 0.0
        %3056 = vmatpush1.msra.mxu0 0.0
        %3057 = vmatprep.subr.mxu0 0.0
        %3058 = vmatpush1.msra.mxu0 0.0
        %3059 = vmatprep.subr.mxu0 0.0
        %3060 = vmatpush1.msra.mxu0 0.0
        %3061 = vmatprep.subr.mxu0 0.0
        %3062 = vmatpush1.msra.mxu0 0.0
        %3063 = vmatprep.subr.mxu0 0.0
        %3064 = vmatpush1.msra.mxu0 0.0
        %3065 = vmatprep.subr.mxu0 0.0
        %3066 = vmatpush1.msra.mxu0 0.0
        %3067 = vmatprep.subr.mxu0 0.0
        %3068 = vmatpush1.msra.mxu0 0.0
        %3069 = vmatprep.subr.mxu0 0.0
        %3070 = vmatpush1.msra.mxu0 0.0
        %3071 = vmatprep.subr.mxu0 0.0
        %3072 = vmatpush1.msra.mxu0 0.0
        %3073 = vmatprep.subr.mxu0 0.0
        %3074 = vmatpush1.msra.mxu0 0.0
        %3075 = vmatprep.subr.mxu0 0.0
        %3076 = vmatpush1.msra.mxu0 0.0
        %3077 = vmatprep.subr.mxu0 0.0
        %3078 = vmatpush1.msra.mxu0 0.0
        %3079 = vmatprep.subr.mxu0 0.0
        %3080 = vmatpush1.msra.mxu0 0.0
        %3081 = vmatprep.subr.mxu0 0.0
        %3082 = vmatpush1.msra.mxu0 0.0
        %3083 = vmatprep.subr.mxu0 0.0
        %3084 = vmatpush1.msra.mxu0 0.0
        %3085 = vmatprep.subr.mxu0 0.0
        %3086 = vmatpush1.msra.mxu0 0.0
        %3087 = vmatprep.subr.mxu0 0.0
        %3088 = vmatpush1.msra.mxu0 0.0
        %3089 = vmatprep.subr.mxu0 0.0
        %3090 = vmatpush1.msra.mxu0 0.0
        %3091 = vmatprep.subr.mxu0 0.0
        %3092 = vmatpush1.msra.mxu0 0.0
        %3093 = vmatprep.subr.mxu0 0.0
        %3094 = vmatpush1.msra.mxu0 0.0
        %3095 = vmatprep.subr.mxu0 0.0
        %3096 = vmatpush1.msra.mxu0 0.0
        %3097 = vmatprep.subr.mxu0 0.0
        %3098 = vmatpush1.msra.mxu0 0.0
        %3099 = vmatprep.subr.mxu0 0.0
        %3100 = vmatpush1.msra.mxu0 0.0
        %3101 = vmatprep.mubr.f32.mxu0 0.0
        %3102 = vmatmul.mubr.f32.gmra.mrb[0].mxu0 %v3035
        %v3103 = vpop.f32.mrb[0].mxu0
        %v3104 = vadd.f32 %v3032, %v3103
        %v3105 = vpop.f32.mrb[0].mxu0
        %3106 = vdwg.mxu0
        %v3107 = vmul.f32 %v3104, 0.5
        %v3108 = vmul.f32 %v3104, 0.044715
        %v3109 = vmul.f32 %v3108, %v3104
        %v3110 = vmul.f32 %v3109, %v3104
        %v3111 = vadd.f32 %v3104, %v3110
        %v3112 = vmul.f32 %v3111, 0.7978846
        %v3113 = vtanh.pop %v3112
        %v3114 = vadd.f32 %v3113, 1.0
        %v3115 = vmul.f32 %v3107, %v3114
        %s3116 = scalar_lea.vmem %s12, 64
        %v3117 = vld [vmem:[%s3116] sm:$0xff]
        %v3118 = vld [vmem:[%s3116 + $0x8] sm:$0xff]
        %v3119 = vld [vmem:[%s3116 + $0x10] sm:$0xff]
        %v3120 = vld [vmem:[%s3116 + $0x18] sm:$0xff]
        %v3121 = vld [vmem:[%s3116 + $0x20] sm:$0xff]
        %v3122 = vld [vmem:[%s3116 + $0x28] sm:$0xff]
        %v3123 = vld [vmem:[%s3116 + $0x30] sm:$0xff]
        %v3124 = vld [vmem:[%s3116 + $0x38] sm:$0xff]
        %s3125 = scalar_lea.vmem %s13, 1
        %v3126 = vld [vmem:[%s3125] sm:$0x1]
        %v3128 = vlaneseq
        %v3129 = vshrl.u32 %v3128, 7
        %v3130 = vsub.s32 0, %v3129
        %v3131 = vrot.slane %v3126, %v3130
        %v3134 = vsel %vm1824, %v3115, 0
        %3136 = vmatprep.subr.mxu0 0.0
        %3137 = vmatpush1.msra.mxu0 %v3117
        %3138 = vmatprep.subr.mxu0 0.0
        %3139 = vmatpush1.msra.mxu0 %v3118
        %3140 = vmatprep.subr.mxu0 0.0
        %3141 = vmatpush1.msra.mxu0 %v3119
        %3142 = vmatprep.subr.mxu0 0.0
        %3143 = vmatpush1.msra.mxu0 %v3120
        %3144 = vmatprep.subr.mxu0 0.0
        %3145 = vmatpush1.msra.mxu0 %v3121
        %3146 = vmatprep.subr.mxu0 0.0
        %3147 = vmatpush1.msra.mxu0 %v3122
        %3148 = vmatprep.subr.mxu0 0.0
        %3149 = vmatpush1.msra.mxu0 %v3123
        %3150 = vmatprep.subr.mxu0 0.0
        %3151 = vmatpush1.msra.mxu0 %v3124
        %3152 = vmatprep.subr.mxu0 0.0
        %3153 = vmatpush1.msra.mxu0 0.0
        %3154 = vmatprep.subr.mxu0 0.0
        %3155 = vmatpush1.msra.mxu0 0.0
        %3156 = vmatprep.subr.mxu0 0.0
        %3157 = vmatpush1.msra.mxu0 0.0
        %3158 = vmatprep.subr.mxu0 0.0
        %3159 = vmatpush1.msra.mxu0 0.0
        %3160 = vmatprep.subr.mxu0 0.0
        %3161 = vmatpush1.msra.mxu0 0.0
        %3162 = vmatprep.subr.mxu0 0.0
        %3163 = vmatpush1.msra.mxu0 0.0
        %3164 = vmatprep.subr.mxu0 0.0
        %3165 = vmatpush1.msra.mxu0 0.0
        %3166 = vmatprep.subr.mxu0 0.0
        %3167 = vmatpush1.msra.mxu0 0.0
        %3168 = vmatprep.subr.mxu0 0.0
        %3169 = vmatpush1.msra.mxu0 0.0
        %3170 = vmatprep.subr.mxu0 0.0
        %3171 = vmatpush1.msra.mxu0 0.0
        %3172 = vmatprep.subr.mxu0 0.0
        %3173 = vmatpush1.msra.mxu0 0.0
        %3174 = vmatprep.subr.mxu0 0.0
        %3175 = vmatpush1.msra.mxu0 0.0
        %3176 = vmatprep.subr.mxu0 0.0
        %3177 = vmatpush1.msra.mxu0 0.0
        %3178 = vmatprep.subr.mxu0 0.0
        %3179 = vmatpush1.msra.mxu0 0.0
        %3180 = vmatprep.subr.mxu0 0.0
        %3181 = vmatpush1.msra.mxu0 0.0
        %3182 = vmatprep.subr.mxu0 0.0
        %3183 = vmatpush1.msra.mxu0 0.0
        %3184 = vmatprep.subr.mxu0 0.0
        %3185 = vmatpush1.msra.mxu0 0.0
        %3186 = vmatprep.subr.mxu0 0.0
        %3187 = vmatpush1.msra.mxu0 0.0
        %3188 = vmatprep.subr.mxu0 0.0
        %3189 = vmatpush1.msra.mxu0 0.0
        %3190 = vmatprep.subr.mxu0 0.0
        %3191 = vmatpush1.msra.mxu0 0.0
        %3192 = vmatprep.subr.mxu0 0.0
        %3193 = vmatpush1.msra.mxu0 0.0
        %3194 = vmatprep.subr.mxu0 0.0
        %3195 = vmatpush1.msra.mxu0 0.0
        %3196 = vmatprep.subr.mxu0 0.0
        %3197 = vmatpush1.msra.mxu0 0.0
        %3198 = vmatprep.subr.mxu0 0.0
        %3199 = vmatpush1.msra.mxu0 0.0
        %3200 = vmatprep.mubr.f32.mxu0 0.0
        %3201 = vmatmul.mubr.f32.gmra.mrb[0].mxu0 %v3134
        %v3202 = vpop.f32.mrb[0].mxu0
        %v3203 = vadd.f32 %v3131, %v3202
        %v3204 = vpop.f32.mrb[0].mxu0
        %3205 = vdwg.mxu0
        %v3206 = vadd.f32 %v3203, %v3020
        %s3207 = scalar_lea.vmem %s14, 1
        %v3208 = vld [vmem:[%s3207] sm:$0x1]
        %s3209 = scalar_lea.vmem %s15, 1
        %v3210 = vld [vmem:[%s3209] sm:$0x1]
        %v3211 = vsel %vm590, %v3206, 0.0
        %3212 = vadd.xlane.f32.xlu0 %v3211
        %v3213 = vpop.xlane.xlu0 %3212
        %v3214 = vmul.f32 %v3213, %v594
        %v3215 = vsub.f32 %v3206, %v3214
        %v3216 = vmul.f32 %v3215, %v3215
        %v3217 = vsel %vm590, %v3216, 0.0
        %3218 = vadd.xlane.f32.xlu0 %v3217
        %v3219 = vpop.xlane.xlu0 %3218
        %v3220 = vmul.f32 %v3219, %v594
        %v3221 = vadd.f32 %v3220, 1e-12
        %v3222 = vrsqrt.pop %v3221
        %v3223 = vmul.f32 %v3215, %v3222
        %v3225 = vlaneseq
        %v3226 = vshrl.u32 %v3225, 7
        %v3227 = vsub.s32 0, %v3226
        %v3228 = vrot.slane %v3208, %v3227
        %v3230 = vmul.f32 %v3223, %v3228
        %v3232 = vlaneseq
        %v3233 = vshrl.u32 %v3232, 7
        %v3234 = vsub.s32 0, %v3233
        %v3235 = vrot.slane %v3210, %v3234
        %v3237 = vadd.f32 %v3230, %v3235
        %v3238 = vld [vmem:[#allocation5] sm:$0xff]
        %v3239 = vld [vmem:[#allocation5 + $0x8] sm:$0xff]
        %v3240 = vld [vmem:[#allocation5 + $0x10] sm:$0xff]
        %v3241 = vld [vmem:[#allocation5 + $0x18] sm:$0xff]
        %v3243 = vsel %vm590, %v3237, 0
        %3245 = vmatprep.subr.mxu0 0.0
        %3246 = vmatpush1.msra.mxu0 %v3238
        %3247 = vmatprep.subr.mxu0 0.0
        %3248 = vmatpush1.msra.mxu0 %v3239
        %3249 = vmatprep.subr.mxu0 0.0
        %3250 = vmatpush1.msra.mxu0 %v3240
        %3251 = vmatprep.subr.mxu0 0.0
        %3252 = vmatpush1.msra.mxu0 %v3241
        %3253 = vmatprep.subr.mxu0 0.0
        %3254 = vmatpush1.msra.mxu0 0.0
        %3255 = vmatprep.subr.mxu0 0.0
        %3256 = vmatpush1.msra.mxu0 0.0
        %3257 = vmatprep.subr.mxu0 0.0
        %3258 = vmatpush1.msra.mxu0 0.0
        %3259 = vmatprep.subr.mxu0 0.0
        %3260 = vmatpush1.msra.mxu0 0.0
        %3261 = vmatprep.subr.mxu0 0.0
        %3262 = vmatpush1.msra.mxu0 0.0
        %3263 = vmatprep.subr.mxu0 0.0
        %3264 = vmatpush1.msra.mxu0 0.0
        %3265 = vmatprep.subr.mxu0 0.0
        %3266 = vmatpush1.msra.mxu0 0.0
        %3267 = vmatprep.subr.mxu0 0.0
        %3268 = vmatpush1.msra.mxu0 0.0
        %3269 = vmatprep.subr.mxu0 0.0
        %3270 = vmatpush1.msra.mxu0 0.0
        %3271 = vmatprep.subr.mxu0 0.0
        %3272 = vmatpush1.msra.mxu0 0.0
        %3273 = vmatprep.subr.mxu0 0.0
        %3274 = vmatpush1.msra.mxu0 0.0
        %3275 = vmatprep.subr.mxu0 0.0
        %3276 = vmatpush1.msra.mxu0 0.0
        %3277 = vmatprep.subr.mxu0 0.0
        %3278 = vmatpush1.msra.mxu0 0.0
        %3279 = vmatprep.subr.mxu0 0.0
        %3280 = vmatpush1.msra.mxu0 0.0
        %3281 = vmatprep.subr.mxu0 0.0
        %3282 = vmatpush1.msra.mxu0 0.0
        %3283 = vmatprep.subr.mxu0 0.0
        %3284 = vmatpush1.msra.mxu0 0.0
        %3285 = vmatprep.subr.mxu0 0.0
        %3286 = vmatpush1.msra.mxu0 0.0
        %3287 = vmatprep.subr.mxu0 0.0
        %3288 = vmatpush1.msra.mxu0 0.0
        %3289 = vmatprep.subr.mxu0 0.0
        %3290 = vmatpush1.msra.mxu0 0.0
        %3291 = vmatprep.subr.mxu0 0.0
        %3292 = vmatpush1.msra.mxu0 0.0
        %3293 = vmatprep.subr.mxu0 0.0
        %3294 = vmatpush1.msra.mxu0 0.0
        %3295 = vmatprep.subr.mxu0 0.0
        %3296 = vmatpush1.msra.mxu0 0.0
        %3297 = vmatprep.subr.mxu0 0.0
        %3298 = vmatpush1.msra.mxu0 0.0
        %3299 = vmatprep.subr.mxu0 0.0
        %3300 = vmatpush1.msra.mxu0 0.0
        %3301 = vmatprep.subr.mxu0 0.0
        %3302 = vmatpush1.msra.mxu0 0.0
        %3303 = vmatprep.subr.mxu0 0.0
        %3304 = vmatpush1.msra.mxu0 0.0
        %3305 = vmatprep.subr.mxu0 0.0
        %3306 = vmatpush1.msra.mxu0 0.0
        %3307 = vmatprep.subr.mxu0 0.0
        %3308 = vmatpush1.msra.mxu0 0.0
        %3309 = vmatprep.mubr.f32.mxu0 0.0
        %3310 = vmatmul.mubr.f32.gmra.mrb[0].mxu0 %v3243
        %v3311 = vpop.f32.mrb[0].mxu0
        %v3312 = vadd.f32 0.0, %v3311
        %v3313 = vpop.f32.mrb[0].mxu0
        %3314 = vdwg.mxu0
        %vm3315 = vcmask 122880
        %3316 = vst.msk [vmem:[%s579] sm:$0x1] %vm3315, %v3312
        %s3317 = sand.u32 %s408, 1
        %s3318 = scalar_lea.sflag [#allocation4], %s3317
        %s3319 = sand.u32 %s408, 1
        %s3320 = scalar_lea.vmem [#allocation7], %s3319
        // Predicated region
        $region97: #{_lambda_.1} parent=87 // pred_check
          %p3321 = pneg %p418
        $region98: #{_lambda_.1} parent=87 // pred_check_branch
          %3323 = sbr.rel (%p3321) target = $region100
        $region99: #{_lambda_.1} parent=87 // pred_region
          %s3325 = ssub.s32 16, 16
          %3326 = vsyncadd %s3318, %s3325
          %s3327 = smul.addr %s33, 16
          %s3328 = scalar_lea.hbm %s17, %s3327
          %s3330 = sshll.u32 %s3320, 4
          %s3331 = int_to_ptr.vmem [resolvable:$true] %s3330
          %3333 = dma.vmem_to_hbm [thread:$0]  %s3331, 16, %s3328, %s3318
        $region100: #{_lambda_.1} parent=87 // pred_fallthru
          _
      $region88: #{_lambda_.1} parent=5 // pred_fallthru
        _
      %p3334 = scmp.le.s32.totalorder 2, %s28
      // Predicated region
      $region101: #{_lambda_.1} parent=5 // pred_check
        %p3335 = pneg %p3334
      $region102: #{_lambda_.1} parent=5 // pred_check_branch
        %3337 = sbr.rel (%p3335) target = $region104
      $region103: #{_lambda_.1} parent=5 // pred_region
        %s3338 = ssub.s32 %s28, 2
        // Predicated region
        $region105: #{_lambda_.1} parent=103 // pred_check
          %p3339 = pneg %p424
        $region106: #{_lambda_.1} parent=103 // pred_check_branch
          %3341 = sbr.rel (%p3339) target = $region108
        $region107: #{_lambda_.1} parent=103 // pred_region
          %s3342 = sand.u32 %s409, 1
          %s3343 = scalar_lea.sflag [#allocation4], %s3342
          %s3344 = sand.u32 %s409, 1
          %s3345 = scalar_lea.vmem [#allocation7], %s3344
          %3346 = dma.done %s3343, 16
        $region108: #{_lambda_.1} parent=103 // pred_fallthru
          _
      $region104: #{_lambda_.1} parent=5 // pred_fallthru
        _
    $region6: #{_lambda_.1} parent=1 // loop_footer
      %s32 = sadd.s32 1, %s28
    $region7: #{_lambda_.1} parent=1 // loop_footer_branch
      %27 = sbr.rel target = $region3
    $region8: #{_lambda_.1} parent=1 // loop_exit
      _
    %3347 = vsyncpa [#allocation3], 1
    %s3348 = scalar_lea.sflag [#allocation3], 1
    %3349 = vsyncpa %s3348, 1
    %3350 = vsyncpa [#allocation6], 1
    %3351 = vsyncpa [#allocation4], 1
    %s3352 = scalar_lea.sflag [#allocation4], 1
    %3353 = vsyncpa %s3352, 1

</llo_original>
